<compile_context>
chip_gen: v6e
topology: v6e:2x2x1
jax: 0.10.0
libtpu: 0.0.40
codegen_flags: <defaults>
</compile_context>

<pallas_src>
import jax
import jax.numpy as jnp
from jax.experimental import pallas as pl
from jax.experimental.pallas import tpu as pltpu

ARCH = (500, 400, 300)   # hidden layer widths from the PyTorch module
LN_EPS = 1e-5            # F.layer_norm / nn.LayerNorm default


def _round_up(x, m):
    return ((x + m - 1) // m) * m


def make_actor_kernel(n_hidden, norm, max_action, true_widths):
    """Fused MLP kernel.

    Ref ordering:
      (x,
       [per hidden layer: W, b]                      if norm != 'layer'
       [per hidden layer: W, b, gamma, beta, ones]   if norm == 'layer'
       W_out, b_out, out)
    W refs are bf16 [in_p, out_p]; b/gamma/beta are f32 [1, out_p];
    ones refs are bf16 [out_p, 128] (all-ones, for MXU row sums).
    """
    def kernel(*refs):
        x_ref = refs[0]
        out_ref = refs[-1]
        p = refs[1:-1]

        a = x_ref[...]                                  # bf16 (TB, Din)
        idx = 0
        for li in range(n_hidden):
            w = p[idx][...]                             # bf16
            b = p[idx + 1][...]                         # f32
            idx += 2
            z = jnp.dot(a, w, preferred_element_type=jnp.float32) + b
            z = jnp.maximum(z, 0.0)                     # ReLU
            if norm == 'layer':
                g = p[idx][...]                         # f32, 0 in padded lanes
                beta = p[idx + 1][...]
                ones = p[idx + 2][...]                  # bf16 (out_p, 128)
                idx += 3
                # Row sums on the MXU instead of the XLU.  Padded lanes of z
                # are exactly 0, so the all-ones operand gives the true sums;
                # divide by the TRUE width.  One-pass var = E[x^2] - mean^2.
                inv_n = jnp.float32(1.0 / true_widths[li])
                zb = z.astype(jnp.bfloat16)
                z2b = (z * z).astype(jnp.bfloat16)
                s1 = jnp.dot(zb, ones, preferred_element_type=jnp.float32)[:, :1]
                s2 = jnp.dot(z2b, ones, preferred_element_type=jnp.float32)[:, :1]
                mean = s1 * inv_n
                var = jnp.maximum(s2 * inv_n - mean * mean, 0.0)
                z = (z - mean) * jax.lax.rsqrt(var + LN_EPS)
                z = z * g + beta                        # padded lanes -> 0
            a = z.astype(jnp.bfloat16)                  # single cast per layer

        w = p[idx][...]
        b = p[idx + 1][...]
        zf = jnp.dot(a, w, preferred_element_type=jnp.float32) + b
        out_ref[...] = (max_action * jnp.tanh(zf)).astype(out_ref.dtype)

    return kernel


def init_actor_params(key, state_dim, action_dim, norm):
    """Deterministic init mirroring nn.Linear default (U(-1/sqrt(fan_in), .)).

    Weights are stored pre-transposed as (fan_in, fan_out), f32, UNPADDED.
    """
    dims = [state_dim] + list(ARCH) + [action_dim]
    params = []
    for i in range(len(dims) - 1):
        fan_in, fan_out = dims[i], dims[i + 1]
        key, kw, kb, kg, kbt = jax.random.split(key, 5)
        bound = 1.0 / jnp.sqrt(float(fan_in))
        w_t = jax.random.uniform(kw, (fan_in, fan_out), jnp.float32, -bound, bound)
        b = jax.random.uniform(kb, (1, fan_out), jnp.float32, -bound, bound)
        layer = [w_t, b]
        if i < len(ARCH) and norm == 'layer':
            # Slightly perturbed gamma/beta so the LN affine path is exercised.
            g = 1.0 + 0.1 * jax.random.uniform(kg, (1, fan_out), jnp.float32, -1., 1.)
            bt = 0.1 * jax.random.uniform(kbt, (1, fan_out), jnp.float32, -1., 1.)
            layer += [g, bt]
        params.append(tuple(layer))
    return params


def prepare_kernel_params(params, state_dim, action_dim, norm):
    """Pad hidden/output lane dims to multiples of 128, cast weights to bf16.

    The input (state) width is NOT padded: a full-extent lane block is legal
    and K<=128 is a single MXU pass, so padding only adds HBM traffic.
    """
    dims = [state_dim] + list(ARCH) + [action_dim]
    dims_p = [state_dim] + [_round_up(d, 128) for d in dims[1:]]
    flat = []
    for i, layer in enumerate(params):
        w, b = layer[0], layer[1]
        in_d, out_d = dims[i], dims[i + 1]
        in_p, out_p = dims_p[i], dims_p[i + 1]
        w_p = jnp.zeros((in_p, out_p), jnp.float32).at[:in_d, :out_d].set(w)
        b_p = jnp.zeros((1, out_p), jnp.float32).at[:, :out_d].set(b)
        flat.append(w_p.astype(jnp.bfloat16))
        flat.append(b_p)
        if norm == 'layer' and i < len(ARCH):
            g, beta = layer[2], layer[3]
            # Padded gamma/beta = 0  ->  padded lanes are zeroed after LN.
            g_p = jnp.zeros((1, out_p), jnp.float32).at[:, :out_d].set(g)
            beta_p = jnp.zeros((1, out_p), jnp.float32).at[:, :out_d].set(beta)
            flat.append(g_p)
            flat.append(beta_p)
            # All-ones operand so LN row sums run on the MXU (z @ ones puts
            # the row sum in every output lane; kernel reads lane 0).
            flat.append(jnp.ones((out_p, 128), jnp.bfloat16))
    return flat, dims_p


def actor_forward(state, flat_params, dims_p, *, norm, max_action, action_dim,
                  out_dtype=jnp.float32):
    B, state_dim = state.shape
    din_p, dout_p = dims_p[0], dims_p[-1]

    # Batch tiling: multiples of 16 (bf16 sublane packing); always >= 2 grid
    # steps so the "parallel" batch axis can use both v7x TensorCores; TB up
    # to 512 for large batches to amortize the ~0.35us per-grid-step overhead.
    if B >= 1024:
        TB = 512
    else:
        TB = _round_up(max(1, pl.cdiv(B, 2)), 16)
    n_tiles = max(2, pl.cdiv(B, TB))
    B_pad = n_tiles * TB

    # Pad batch rows only (no lane pad); cast activations to bf16 once.
    x = jnp.zeros((B_pad, din_p), jnp.bfloat16)
    x = x.at[:B, :].set(state.astype(jnp.bfloat16))

    in_specs = [pl.BlockSpec((TB, din_p), lambda i: (i, 0))]
    # Weights / biases / LN params / ones: whole array, constant block index
    # -> fetched once, VMEM-resident across all batch tiles.
    in_specs += [pl.BlockSpec(a.shape, lambda i: (0, 0)) for a in flat_params]
    out_spec = pl.BlockSpec((TB, dout_p), lambda i: (i, 0))

    kernel = make_actor_kernel(len(ARCH), norm, max_action, ARCH)

    layer_flops = 2 * B_pad * sum(dims_p[i] * dims_p[i + 1]
                                  for i in range(len(dims_p) - 1))
    ln_flops = (4 * B_pad * 128 * sum(dims_p[1:-1])) if norm == 'layer' else 0
    transcendentals = B_pad * (dout_p + (len(ARCH) if norm == 'layer' else 0))
    bytes_accessed = (x.size * x.dtype.itemsize
                      + sum(a.size * a.dtype.itemsize for a in flat_params)
                      + B_pad * dout_p * jnp.dtype(out_dtype).itemsize)

    out = pl.pallas_call(
        kernel,
        out_shape=jax.ShapeDtypeStruct((B_pad, dout_p), out_dtype),
        grid=(n_tiles,),
        in_specs=in_specs,
        out_specs=out_spec,
        compiler_params=pltpu.CompilerParams(
            dimension_semantics=("parallel",)),
        cost_estimate=pl.CostEstimate(
            flops=layer_flops + ln_flops,
            transcendentals=transcendentals,
            bytes_accessed=bytes_accessed),
    )(x, *flat_params)

    return out[:B, :action_dim]


def actor_reference(state, params, *, norm, max_action):
    """Pure-JAX reference: bf16 matmuls / f32 accumulation (matches the kernel
    data path), but LayerNorm statistics in full f32 (matches PyTorch)."""
    a = state.astype(jnp.bfloat16)
    n_layers = len(params)
    for i, layer in enumerate(params):
        w, b = layer[0].astype(jnp.bfloat16), layer[1]
        z = jnp.dot(a, w, preferred_element_type=jnp.float32) + b
        if i != n_layers - 1:
            z = jnp.maximum(z, 0.0)
            if norm == 'layer':
                g, beta = layer[2], layer[3]
                mean = jnp.mean(z, axis=-1, keepdims=True)
                var = jnp.mean(jnp.square(z - mean), axis=-1, keepdims=True)
                z = (z - mean) * jax.lax.rsqrt(var + LN_EPS) * g + beta
            a = z.astype(jnp.bfloat16)
        else:
            a = z
    return max_action * jnp.tanh(a)


if __name__ == "__main__":
    key = jax.random.PRNGKey(0)
    batch = 2
    state_dim = 16
    action_dim = 4
    max_action = 2.0
    norm = 'layer'   # exercises the LayerNorm branch of the module
    # TODO(synk): norm == 'weight_normalization' only reparameterizes weights
    # (w = g * v / ||v||); at inference it is a plain Linear, so the same kernel
    # applies once weights are pre-normalized in the wrapper.

    key, kparams, kstate = jax.random.split(key, 3)
    params = init_actor_params(kparams, state_dim, action_dim, norm)
    state = jax.random.normal(kstate, (batch, state_dim), jnp.float32)

    flat_params, dims_p = prepare_kernel_params(params, state_dim, action_dim, norm)
    out = actor_forward(state, flat_params, dims_p, norm=norm,
                        max_action=max_action, action_dim=action_dim)
    out = jax.block_until_ready(out)

    ref = actor_reference(state, params, norm=norm, max_action=max_action)
    assert out.shape == (batch, action_dim)
    # Tolerance covers the bf16 MXU-based LayerNorm statistics vs the f32
    # reference statistics (plus the shared bf16 matmul path).
    assert jnp.allclose(out, ref, atol=5e-3, rtol=5e-3), (out, ref)

    print("KERNEL_OK")
</pallas_src>

<mosaic_0001>
module attributes {stable_mosaic.version = 11 : i64} {
  func.func @kernel(%arg0: i32, %arg1: memref<16x16xbf16, #tpu.memory_space<vmem>>, %arg2: memref<16x512xbf16, #tpu.memory_space<vmem>>, %arg3: memref<1x512xf32, #tpu.memory_space<vmem>>, %arg4: memref<1x512xf32, #tpu.memory_space<vmem>>, %arg5: memref<1x512xf32, #tpu.memory_space<vmem>>, %arg6: memref<512x128xbf16, #tpu.memory_space<vmem>>, %arg7: memref<512x512xbf16, #tpu.memory_space<vmem>>, %arg8: memref<1x512xf32, #tpu.memory_space<vmem>>, %arg9: memref<1x512xf32, #tpu.memory_space<vmem>>, %arg10: memref<1x512xf32, #tpu.memory_space<vmem>>, %arg11: memref<512x128xbf16, #tpu.memory_space<vmem>>, %arg12: memref<512x384xbf16, #tpu.memory_space<vmem>>, %arg13: memref<1x384xf32, #tpu.memory_space<vmem>>, %arg14: memref<1x384xf32, #tpu.memory_space<vmem>>, %arg15: memref<1x384xf32, #tpu.memory_space<vmem>>, %arg16: memref<384x128xbf16, #tpu.memory_space<vmem>>, %arg17: memref<384x128xbf16, #tpu.memory_space<vmem>>, %arg18: memref<1x128xf32, #tpu.memory_space<vmem>>, %arg19: memref<16x128xf32, #tpu.memory_space<vmem>>) attributes {dimension_semantics = [#tpu.dimension_semantics<parallel>], iteration_bounds = array<i64: 2>, scalar_prefetch = 0 : i64, scratch_operands = 0 : i64, tpu.core_type = #tpu.core_type<tc>, window_params = [{transform_indices = @transform_0, window_bounds = array<i64: 16, 16>}, {pipeline_mode = #tpu.pipeline_mode<synchronous>, transform_indices = @transform_1, window_bounds = array<i64: 16, 512>}, {pipeline_mode = #tpu.pipeline_mode<synchronous>, transform_indices = @transform_2, window_bounds = array<i64: 1, 512>}, {pipeline_mode = #tpu.pipeline_mode<synchronous>, transform_indices = @transform_3, window_bounds = array<i64: 1, 512>}, {pipeline_mode = #tpu.pipeline_mode<synchronous>, transform_indices = @transform_4, window_bounds = array<i64: 1, 512>}, {pipeline_mode = #tpu.pipeline_mode<synchronous>, transform_indices = @transform_5, window_bounds = array<i64: 512, 128>}, {pipeline_mode = #tpu.pipeline_mode<synchronous>, transform_indices = @transform_6, window_bounds = array<i64: 512, 512>}, {pipeline_mode = #tpu.pipeline_mode<synchronous>, transform_indices = @transform_7, window_bounds = array<i64: 1, 512>}, {pipeline_mode = #tpu.pipeline_mode<synchronous>, transform_indices = @transform_8, window_bounds = array<i64: 1, 512>}, {pipeline_mode = #tpu.pipeline_mode<synchronous>, transform_indices = @transform_9, window_bounds = array<i64: 1, 512>}, {pipeline_mode = #tpu.pipeline_mode<synchronous>, transform_indices = @transform_10, window_bounds = array<i64: 512, 128>}, {pipeline_mode = #tpu.pipeline_mode<synchronous>, transform_indices = @transform_11, window_bounds = array<i64: 512, 384>}, {pipeline_mode = #tpu.pipeline_mode<synchronous>, transform_indices = @transform_12, window_bounds = array<i64: 1, 384>}, {pipeline_mode = #tpu.pipeline_mode<synchronous>, transform_indices = @transform_13, window_bounds = array<i64: 1, 384>}, {pipeline_mode = #tpu.pipeline_mode<synchronous>, transform_indices = @transform_14, window_bounds = array<i64: 1, 384>}, {pipeline_mode = #tpu.pipeline_mode<synchronous>, transform_indices = @transform_15, window_bounds = array<i64: 384, 128>}, {pipeline_mode = #tpu.pipeline_mode<synchronous>, transform_indices = @transform_16, window_bounds = array<i64: 384, 128>}, {pipeline_mode = #tpu.pipeline_mode<synchronous>, transform_indices = @transform_17, window_bounds = array<i64: 1, 128>}, {transform_indices = @transform_18, window_bounds = array<i64: 16, 128>}]} {
    %c0 = arith.constant 0 : index
    %c0_0 = arith.constant 0 : index
    %0 = vector.load %arg1[%c0, %c0_0] : memref<16x16xbf16, #tpu.memory_space<vmem>>, vector<16x16xbf16>
    %c0_1 = arith.constant 0 : index
    %c0_2 = arith.constant 0 : index
    %1 = vector.load %arg2[%c0_1, %c0_2] : memref<16x512xbf16, #tpu.memory_space<vmem>>, vector<16x512xbf16>
    %c0_3 = arith.constant 0 : index
    %c0_4 = arith.constant 0 : index
    %2 = vector.load %arg3[%c0_3, %c0_4] : memref<1x512xf32, #tpu.memory_space<vmem>>, vector<1x512xf32>
    %cst = arith.constant dense<0.000000e+00> : vector<16x512xf32>
    %3 = tpu.matmul %0, %1, %cst {dimension_numbers = #tpu.dot_dimension_numbers<[1], [0], [0], [1], [0, 0, 1, 1], [], []>} : vector<16x16xbf16>, vector<16x512xbf16>, vector<16x512xf32> -> vector<16x512xf32>
    %4 = vector.broadcast %2 : vector<1x512xf32> to vector<16x512xf32>
    %5 = arith.addf %3, %4 : vector<16x512xf32>
    %cst_5 = arith.constant 0.000000e+00 : f32
    %6 = vector.broadcast %cst_5 : f32 to vector<16x512xf32>
    %7 = arith.maximumf %5, %6 : vector<16x512xf32>
    %c0_6 = arith.constant 0 : index
    %c0_7 = arith.constant 0 : index
    %8 = vector.load %arg4[%c0_6, %c0_7] : memref<1x512xf32, #tpu.memory_space<vmem>>, vector<1x512xf32>
    %c0_8 = arith.constant 0 : index
    %c0_9 = arith.constant 0 : index
    %9 = vector.load %arg5[%c0_8, %c0_9] : memref<1x512xf32, #tpu.memory_space<vmem>>, vector<1x512xf32>
    %c0_10 = arith.constant 0 : index
    %c0_11 = arith.constant 0 : index
    %10 = vector.load %arg6[%c0_10, %c0_11] : memref<512x128xbf16, #tpu.memory_space<vmem>>, vector<512x128xbf16>
    %11 = arith.truncf %7 : vector<16x512xf32> to vector<16x512xbf16>
    %12 = arith.mulf %7, %7 : vector<16x512xf32>
    %13 = arith.truncf %12 : vector<16x512xf32> to vector<16x512xbf16>
    %cst_12 = arith.constant dense<0.000000e+00> : vector<16x128xf32>
    %14 = tpu.matmul %11, %10, %cst_12 {dimension_numbers = #tpu.dot_dimension_numbers<[1], [0], [0], [1], [0, 0, 1, 1], [], []>} : vector<16x512xbf16>, vector<512x128xbf16>, vector<16x128xf32> -> vector<16x128xf32>
    %15 = vector.extract_strided_slice %14 {offsets = [0, 0], sizes = [16, 1], strides = [1, 1]} : vector<16x128xf32> to vector<16x1xf32>
    %cst_13 = arith.constant dense<0.000000e+00> : vector<16x128xf32>
    %16 = tpu.matmul %13, %10, %cst_13 {dimension_numbers = #tpu.dot_dimension_numbers<[1], [0], [0], [1], [0, 0, 1, 1], [], []>} : vector<16x512xbf16>, vector<512x128xbf16>, vector<16x128xf32> -> vector<16x128xf32>
    %17 = vector.extract_strided_slice %16 {offsets = [0, 0], sizes = [16, 1], strides = [1, 1]} : vector<16x128xf32> to vector<16x1xf32>
    %cst_14 = arith.constant 2.000000e-03 : f32
    %18 = vector.broadcast %cst_14 : f32 to vector<16x1xf32>
    %19 = arith.mulf %15, %18 : vector<16x1xf32>
    %cst_15 = arith.constant 2.000000e-03 : f32
    %20 = vector.broadcast %cst_15 : f32 to vector<16x1xf32>
    %21 = arith.mulf %17, %20 : vector<16x1xf32>
    %22 = arith.mulf %19, %19 : vector<16x1xf32>
    %23 = arith.subf %21, %22 : vector<16x1xf32>
    %cst_16 = arith.constant 0.000000e+00 : f32
    %24 = vector.broadcast %cst_16 : f32 to vector<16x1xf32>
    %25 = arith.maximumf %23, %24 : vector<16x1xf32>
    %26 = vector.broadcast %19 : vector<16x1xf32> to vector<16x512xf32>
    %27 = arith.subf %7, %26 : vector<16x512xf32>
    %cst_17 = arith.constant 9.99999974E-6 : f32
    %28 = vector.broadcast %cst_17 : f32 to vector<16x1xf32>
    %29 = arith.addf %25, %28 : vector<16x1xf32>
    %30 = math.rsqrt %29 : vector<16x1xf32>
    %31 = vector.broadcast %30 : vector<16x1xf32> to vector<16x512xf32>
    %32 = arith.mulf %27, %31 : vector<16x512xf32>
    %33 = vector.broadcast %8 : vector<1x512xf32> to vector<16x512xf32>
    %34 = arith.mulf %32, %33 : vector<16x512xf32>
    %35 = vector.broadcast %9 : vector<1x512xf32> to vector<16x512xf32>
    %36 = arith.addf %34, %35 : vector<16x512xf32>
    %37 = arith.truncf %36 : vector<16x512xf32> to vector<16x512xbf16>
    %c0_18 = arith.constant 0 : index
    %c0_19 = arith.constant 0 : index
    %38 = vector.load %arg7[%c0_18, %c0_19] : memref<512x512xbf16, #tpu.memory_space<vmem>>, vector<512x512xbf16>
    %c0_20 = arith.constant 0 : index
    %c0_21 = arith.constant 0 : index
    %39 = vector.load %arg8[%c0_20, %c0_21] : memref<1x512xf32, #tpu.memory_space<vmem>>, vector<1x512xf32>
    %cst_22 = arith.constant dense<0.000000e+00> : vector<16x512xf32>
    %40 = tpu.matmul %37, %38, %cst_22 {dimension_numbers = #tpu.dot_dimension_numbers<[1], [0], [0], [1], [0, 0, 1, 1], [], []>} : vector<16x512xbf16>, vector<512x512xbf16>, vector<16x512xf32> -> vector<16x512xf32>
    %41 = vector.broadcast %39 : vector<1x512xf32> to vector<16x512xf32>
    %42 = arith.addf %40, %41 : vector<16x512xf32>
    %cst_23 = arith.constant 0.000000e+00 : f32
    %43 = vector.broadcast %cst_23 : f32 to vector<16x512xf32>
    %44 = arith.maximumf %42, %43 : vector<16x512xf32>
    %c0_24 = arith.constant 0 : index
    %c0_25 = arith.constant 0 : index
    %45 = vector.load %arg9[%c0_24, %c0_25] : memref<1x512xf32, #tpu.memory_space<vmem>>, vector<1x512xf32>
    %c0_26 = arith.constant 0 : index
    %c0_27 = arith.constant 0 : index
    %46 = vector.load %arg10[%c0_26, %c0_27] : memref<1x512xf32, #tpu.memory_space<vmem>>, vector<1x512xf32>
    %c0_28 = arith.constant 0 : index
    %c0_29 = arith.constant 0 : index
    %47 = vector.load %arg11[%c0_28, %c0_29] : memref<512x128xbf16, #tpu.memory_space<vmem>>, vector<512x128xbf16>
    %48 = arith.truncf %44 : vector<16x512xf32> to vector<16x512xbf16>
    %49 = arith.mulf %44, %44 : vector<16x512xf32>
    %50 = arith.truncf %49 : vector<16x512xf32> to vector<16x512xbf16>
    %cst_30 = arith.constant dense<0.000000e+00> : vector<16x128xf32>
    %51 = tpu.matmul %48, %47, %cst_30 {dimension_numbers = #tpu.dot_dimension_numbers<[1], [0], [0], [1], [0, 0, 1, 1], [], []>} : vector<16x512xbf16>, vector<512x128xbf16>, vector<16x128xf32> -> vector<16x128xf32>
    %52 = vector.extract_strided_slice %51 {offsets = [0, 0], sizes = [16, 1], strides = [1, 1]} : vector<16x128xf32> to vector<16x1xf32>
    %cst_31 = arith.constant dense<0.000000e+00> : vector<16x128xf32>
    %53 = tpu.matmul %50, %47, %cst_31 {dimension_numbers = #tpu.dot_dimension_numbers<[1], [0], [0], [1], [0, 0, 1, 1], [], []>} : vector<16x512xbf16>, vector<512x128xbf16>, vector<16x128xf32> -> vector<16x128xf32>
    %54 = vector.extract_strided_slice %53 {offsets = [0, 0], sizes = [16, 1], strides = [1, 1]} : vector<16x128xf32> to vector<16x1xf32>
    %cst_32 = arith.constant 2.500000e-03 : f32
    %55 = vector.broadcast %cst_32 : f32 to vector<16x1xf32>
    %56 = arith.mulf %52, %55 : vector<16x1xf32>
    %cst_33 = arith.constant 2.500000e-03 : f32
    %57 = vector.broadcast %cst_33 : f32 to vector<16x1xf32>
    %58 = arith.mulf %54, %57 : vector<16x1xf32>
    %59 = arith.mulf %56, %56 : vector<16x1xf32>
    %60 = arith.subf %58, %59 : vector<16x1xf32>
    %cst_34 = arith.constant 0.000000e+00 : f32
    %61 = vector.broadcast %cst_34 : f32 to vector<16x1xf32>
    %62 = arith.maximumf %60, %61 : vector<16x1xf32>
    %63 = vector.broadcast %56 : vector<16x1xf32> to vector<16x512xf32>
    %64 = arith.subf %44, %63 : vector<16x512xf32>
    %cst_35 = arith.constant 9.99999974E-6 : f32
    %65 = vector.broadcast %cst_35 : f32 to vector<16x1xf32>
    %66 = arith.addf %62, %65 : vector<16x1xf32>
    %67 = math.rsqrt %66 : vector<16x1xf32>
    %68 = vector.broadcast %67 : vector<16x1xf32> to vector<16x512xf32>
    %69 = arith.mulf %64, %68 : vector<16x512xf32>
    %70 = vector.broadcast %45 : vector<1x512xf32> to vector<16x512xf32>
    %71 = arith.mulf %69, %70 : vector<16x512xf32>
    %72 = vector.broadcast %46 : vector<1x512xf32> to vector<16x512xf32>
    %73 = arith.addf %71, %72 : vector<16x512xf32>
    %74 = arith.truncf %73 : vector<16x512xf32> to vector<16x512xbf16>
    %c0_36 = arith.constant 0 : index
    %c0_37 = arith.constant 0 : index
    %75 = vector.load %arg12[%c0_36, %c0_37] : memref<512x384xbf16, #tpu.memory_space<vmem>>, vector<512x384xbf16>
    %c0_38 = arith.constant 0 : index
    %c0_39 = arith.constant 0 : index
    %76 = vector.load %arg13[%c0_38, %c0_39] : memref<1x384xf32, #tpu.memory_space<vmem>>, vector<1x384xf32>
    %cst_40 = arith.constant dense<0.000000e+00> : vector<16x384xf32>
    %77 = tpu.matmul %74, %75, %cst_40 {dimension_numbers = #tpu.dot_dimension_numbers<[1], [0], [0], [1], [0, 0, 1, 1], [], []>} : vector<16x512xbf16>, vector<512x384xbf16>, vector<16x384xf32> -> vector<16x384xf32>
    %78 = vector.broadcast %76 : vector<1x384xf32> to vector<16x384xf32>
    %79 = arith.addf %77, %78 : vector<16x384xf32>
    %cst_41 = arith.constant 0.000000e+00 : f32
    %80 = vector.broadcast %cst_41 : f32 to vector<16x384xf32>
    %81 = arith.maximumf %79, %80 : vector<16x384xf32>
    %c0_42 = arith.constant 0 : index
    %c0_43 = arith.constant 0 : index
    %82 = vector.load %arg14[%c0_42, %c0_43] : memref<1x384xf32, #tpu.memory_space<vmem>>, vector<1x384xf32>
    %c0_44 = arith.constant 0 : index
    %c0_45 = arith.constant 0 : index
    %83 = vector.load %arg15[%c0_44, %c0_45] : memref<1x384xf32, #tpu.memory_space<vmem>>, vector<1x384xf32>
    %c0_46 = arith.constant 0 : index
    %c0_47 = arith.constant 0 : index
    %84 = vector.load %arg16[%c0_46, %c0_47] : memref<384x128xbf16, #tpu.memory_space<vmem>>, vector<384x128xbf16>
    %85 = arith.truncf %81 : vector<16x384xf32> to vector<16x384xbf16>
    %86 = arith.mulf %81, %81 : vector<16x384xf32>
    %87 = arith.truncf %86 : vector<16x384xf32> to vector<16x384xbf16>
    %cst_48 = arith.constant dense<0.000000e+00> : vector<16x128xf32>
    %88 = tpu.matmul %85, %84, %cst_48 {dimension_numbers = #tpu.dot_dimension_numbers<[1], [0], [0], [1], [0, 0, 1, 1], [], []>} : vector<16x384xbf16>, vector<384x128xbf16>, vector<16x128xf32> -> vector<16x128xf32>
    %89 = vector.extract_strided_slice %88 {offsets = [0, 0], sizes = [16, 1], strides = [1, 1]} : vector<16x128xf32> to vector<16x1xf32>
    %cst_49 = arith.constant dense<0.000000e+00> : vector<16x128xf32>
    %90 = tpu.matmul %87, %84, %cst_49 {dimension_numbers = #tpu.dot_dimension_numbers<[1], [0], [0], [1], [0, 0, 1, 1], [], []>} : vector<16x384xbf16>, vector<384x128xbf16>, vector<16x128xf32> -> vector<16x128xf32>
    %91 = vector.extract_strided_slice %90 {offsets = [0, 0], sizes = [16, 1], strides = [1, 1]} : vector<16x128xf32> to vector<16x1xf32>
    %cst_50 = arith.constant 0.00333333341 : f32
    %92 = vector.broadcast %cst_50 : f32 to vector<16x1xf32>
    %93 = arith.mulf %89, %92 : vector<16x1xf32>
    %cst_51 = arith.constant 0.00333333341 : f32
    %94 = vector.broadcast %cst_51 : f32 to vector<16x1xf32>
    %95 = arith.mulf %91, %94 : vector<16x1xf32>
    %96 = arith.mulf %93, %93 : vector<16x1xf32>
    %97 = arith.subf %95, %96 : vector<16x1xf32>
    %cst_52 = arith.constant 0.000000e+00 : f32
    %98 = vector.broadcast %cst_52 : f32 to vector<16x1xf32>
    %99 = arith.maximumf %97, %98 : vector<16x1xf32>
    %100 = vector.broadcast %93 : vector<16x1xf32> to vector<16x384xf32>
    %101 = arith.subf %81, %100 : vector<16x384xf32>
    %cst_53 = arith.constant 9.99999974E-6 : f32
    %102 = vector.broadcast %cst_53 : f32 to vector<16x1xf32>
    %103 = arith.addf %99, %102 : vector<16x1xf32>
    %104 = math.rsqrt %103 : vector<16x1xf32>
    %105 = vector.broadcast %104 : vector<16x1xf32> to vector<16x384xf32>
    %106 = arith.mulf %101, %105 : vector<16x384xf32>
    %107 = vector.broadcast %82 : vector<1x384xf32> to vector<16x384xf32>
    %108 = arith.mulf %106, %107 : vector<16x384xf32>
    %109 = vector.broadcast %83 : vector<1x384xf32> to vector<16x384xf32>
    %110 = arith.addf %108, %109 : vector<16x384xf32>
    %111 = arith.truncf %110 : vector<16x384xf32> to vector<16x384xbf16>
    %c0_54 = arith.constant 0 : index
    %c0_55 = arith.constant 0 : index
    %112 = vector.load %arg17[%c0_54, %c0_55] : memref<384x128xbf16, #tpu.memory_space<vmem>>, vector<384x128xbf16>
    %c0_56 = arith.constant 0 : index
    %c0_57 = arith.constant 0 : index
    %113 = vector.load %arg18[%c0_56, %c0_57] : memref<1x128xf32, #tpu.memory_space<vmem>>, vector<1x128xf32>
    %cst_58 = arith.constant dense<0.000000e+00> : vector<16x128xf32>
    %114 = tpu.matmul %111, %112, %cst_58 {dimension_numbers = #tpu.dot_dimension_numbers<[1], [0], [0], [1], [0, 0, 1, 1], [], []>} : vector<16x384xbf16>, vector<384x128xbf16>, vector<16x128xf32> -> vector<16x128xf32>
    %115 = vector.broadcast %113 : vector<1x128xf32> to vector<16x128xf32>
    %116 = arith.addf %114, %115 : vector<16x128xf32>
    %117 = math.tanh %116 : vector<16x128xf32>
    %cst_59 = arith.constant 2.000000e+00 : f32
    %118 = vector.broadcast %cst_59 : f32 to vector<16x128xf32>
    %119 = arith.mulf %118, %117 : vector<16x128xf32>
    %c0_60 = arith.constant 0 : index
    %c0_61 = arith.constant 0 : index
    %120 = vector.load %arg19[%c0_60, %c0_61] : memref<16x128xf32, #tpu.memory_space<vmem>>, vector<16x128xf32>
    tpu.vector_store %arg19[%c0_60, %c0_61], %119 {strides = array<i32>} : memref<16x128xf32, #tpu.memory_space<vmem>>, vector<16x128xf32>,
    return
  }
  func.func @transform_0(%arg0: i32) -> (i32, i32) {
    %c0_i32 = arith.constant 0 : i32
    %c0_i32_0 = arith.constant 0 : i32
    return %arg0, %c0_i32 : i32, i32
  }
  func.func @transform_1(%arg0: i32) -> (i32, i32) {
    %c0_i32 = arith.constant 0 : i32
    %c0_i32_0 = arith.constant 0 : i32
    %c0_i32_1 = arith.constant 0 : i32
    return %c0_i32, %c0_i32_0 : i32, i32
  }
  func.func @transform_2(%arg0: i32) -> (i32, i32) {
    %c0_i32 = arith.constant 0 : i32
    %c0_i32_0 = arith.constant 0 : i32
    %c0_i32_1 = arith.constant 0 : i32
    return %c0_i32, %c0_i32_0 : i32, i32
  }
  func.func @transform_3(%arg0: i32) -> (i32, i32) {
    %c0_i32 = arith.constant 0 : i32
    %c0_i32_0 = arith.constant 0 : i32
    %c0_i32_1 = arith.constant 0 : i32
    return %c0_i32, %c0_i32_0 : i32, i32
  }
  func.func @transform_4(%arg0: i32) -> (i32, i32) {
    %c0_i32 = arith.constant 0 : i32
    %c0_i32_0 = arith.constant 0 : i32
    %c0_i32_1 = arith.constant 0 : i32
    return %c0_i32, %c0_i32_0 : i32, i32
  }
  func.func @transform_5(%arg0: i32) -> (i32, i32) {
    %c0_i32 = arith.constant 0 : i32
    %c0_i32_0 = arith.constant 0 : i32
    %c0_i32_1 = arith.constant 0 : i32
    return %c0_i32, %c0_i32_0 : i32, i32
  }
  func.func @transform_6(%arg0: i32) -> (i32, i32) {
    %c0_i32 = arith.constant 0 : i32
    %c0_i32_0 = arith.constant 0 : i32
    %c0_i32_1 = arith.constant 0 : i32
    return %c0_i32, %c0_i32_0 : i32, i32
  }
  func.func @transform_7(%arg0: i32) -> (i32, i32) {
    %c0_i32 = arith.constant 0 : i32
    %c0_i32_0 = arith.constant 0 : i32
    %c0_i32_1 = arith.constant 0 : i32
    return %c0_i32, %c0_i32_0 : i32, i32
  }
  func.func @transform_8(%arg0: i32) -> (i32, i32) {
    %c0_i32 = arith.constant 0 : i32
    %c0_i32_0 = arith.constant 0 : i32
    %c0_i32_1 = arith.constant 0 : i32
    return %c0_i32, %c0_i32_0 : i32, i32
  }
  func.func @transform_9(%arg0: i32) -> (i32, i32) {
    %c0_i32 = arith.constant 0 : i32
    %c0_i32_0 = arith.constant 0 : i32
    %c0_i32_1 = arith.constant 0 : i32
    return %c0_i32, %c0_i32_0 : i32, i32
  }
  func.func @transform_10(%arg0: i32) -> (i32, i32) {
    %c0_i32 = arith.constant 0 : i32
    %c0_i32_0 = arith.constant 0 : i32
    %c0_i32_1 = arith.constant 0 : i32
    return %c0_i32, %c0_i32_0 : i32, i32
  }
  func.func @transform_11(%arg0: i32) -> (i32, i32) {
    %c0_i32 = arith.constant 0 : i32
    %c0_i32_0 = arith.constant 0 : i32
    %c0_i32_1 = arith.constant 0 : i32
    return %c0_i32, %c0_i32_0 : i32, i32
  }
  func.func @transform_12(%arg0: i32) -> (i32, i32) {
    %c0_i32 = arith.constant 0 : i32
    %c0_i32_0 = arith.constant 0 : i32
    %c0_i32_1 = arith.constant 0 : i32
    return %c0_i32, %c0_i32_0 : i32, i32
  }
  func.func @transform_13(%arg0: i32) -> (i32, i32) {
    %c0_i32 = arith.constant 0 : i32
    %c0_i32_0 = arith.constant 0 : i32
    %c0_i32_1 = arith.constant 0 : i32
    return %c0_i32, %c0_i32_0 : i32, i32
  }
  func.func @transform_14(%arg0: i32) -> (i32, i32) {
    %c0_i32 = arith.constant 0 : i32
    %c0_i32_0 = arith.constant 0 : i32
    %c0_i32_1 = arith.constant 0 : i32
    return %c0_i32, %c0_i32_0 : i32, i32
  }
  func.func @transform_15(%arg0: i32) -> (i32, i32) {
    %c0_i32 = arith.constant 0 : i32
    %c0_i32_0 = arith.constant 0 : i32
    %c0_i32_1 = arith.constant 0 : i32
    return %c0_i32, %c0_i32_0 : i32, i32
  }
  func.func @transform_16(%arg0: i32) -> (i32, i32) {
    %c0_i32 = arith.constant 0 : i32
    %c0_i32_0 = arith.constant 0 : i32
    %c0_i32_1 = arith.constant 0 : i32
    return %c0_i32, %c0_i32_0 : i32, i32
  }
  func.func @transform_17(%arg0: i32) -> (i32, i32) {
    %c0_i32 = arith.constant 0 : i32
    %c0_i32_0 = arith.constant 0 : i32
    %c0_i32_1 = arith.constant 0 : i32
    return %c0_i32, %c0_i32_0 : i32, i32
  }
  func.func @transform_18(%arg0: i32) -> (i32, i32) {
    %c0_i32 = arith.constant 0 : i32
    %c0_i32_0 = arith.constant 0 : i32
    return %arg0, %c0_i32 : i32, i32
  }
}

</mosaic_0001>

<llo_original>
// kernel: tpu_custom_call.1
$region0: #{tpu_custom_call.1}
  #allocation0 [shape = 'u32[]', space=smem, size = 0x4, offset = 0x4, fixed_abs, tag = 'smem constant byte address 0x4 - core index']
  #allocation1 [shape = 'u32[144,128]{1,0:T(1,128)}', space=vmem, size = 0x12000, scoped, tag = 'internal scratch']
  %s0 = inlined_call_operand.vmem [shape: bf16[32,16], index: 0, kind: input, shape index: {}]
  %s1 = inlined_call_operand.hbm [shape: bf16[16,512], index: 1, kind: input, shape index: {}]
  %s2 = inlined_call_operand.vmem [shape: f32[1,512], index: 2, kind: input, shape index: {}]
  %s3 = inlined_call_operand.vmem [shape: f32[1,512], index: 3, kind: input, shape index: {}]
  %s4 = inlined_call_operand.vmem [shape: f32[1,512], index: 4, kind: input, shape index: {}]
  %s5 = inlined_call_operand.hbm [shape: bf16[512,128], index: 5, kind: input, shape index: {}]
  %s6 = inlined_call_operand.hbm [shape: bf16[512,512], index: 6, kind: input, shape index: {}]
  %s7 = inlined_call_operand.vmem [shape: f32[1,512], index: 7, kind: input, shape index: {}]
  %s8 = inlined_call_operand.vmem [shape: f32[1,512], index: 8, kind: input, shape index: {}]
  %s9 = inlined_call_operand.vmem [shape: f32[1,512], index: 9, kind: input, shape index: {}]
  %s10 = inlined_call_operand.hbm [shape: bf16[512,128], index: 10, kind: input, shape index: {}]
  %s11 = inlined_call_operand.hbm [shape: bf16[512,384], index: 11, kind: input, shape index: {}]
  %s12 = inlined_call_operand.vmem [shape: f32[1,384], index: 12, kind: input, shape index: {}]
  %s13 = inlined_call_operand.vmem [shape: f32[1,384], index: 13, kind: input, shape index: {}]
  %s14 = inlined_call_operand.vmem [shape: f32[1,384], index: 14, kind: input, shape index: {}]
  %s15 = inlined_call_operand.hbm [shape: bf16[384,128], index: 15, kind: input, shape index: {}]
  %s16 = inlined_call_operand.hbm [shape: bf16[384,128], index: 16, kind: input, shape index: {}]
  %s17 = inlined_call_operand.vmem [shape: f32[1,128], index: 17, kind: input, shape index: {}]
  %s18 = inlined_call_operand.hbm [shape: f32[32,128], index: 18, kind: output, shape index: {}]
  %s19 = sld [smem:[#allocation0]]
  $region133: #{tpu_custom_call.1} parent=0
    _
  %s21 = ssub.s32 1, %s19
  %s22 = scalar_select 0, %s21, %s19
  $region1: #{tpu_custom_call.1} parent=0
    #allocation2 [shape = 'u8[16384]{0}', space=vmem, size = 0x4000, scoped, tag = 'input window, operand 1, single buffered']
    #allocation3 [shape = 's32[2]{0}', space=sflag, size = 0x8, scoped, tag = 'scoped memory for tpu_custom_call.1']
    #allocation4 [shape = 's32[2]{0}', space=sflag, size = 0x8, scoped, tag = 'scoped memory for tpu_custom_call.1']
    #allocation5 [shape = 'u8[131072]{0}', space=vmem, size = 0x20000, scoped, tag = 'input window, operand 5, single buffered']
    #allocation6 [shape = 's32[1]{0}', space=sflag, size = 0x4, scoped, tag = 'scoped memory for tpu_custom_call.1']
    #allocation7 [shape = 'u8[524288]{0}', space=vmem, size = 0x80000, scoped, tag = 'input window, operand 6, single buffered']
    #allocation8 [shape = 'u8[131072]{0}', space=vmem, size = 0x20000, scoped, tag = 'input window, operand 10, single buffered']
    #allocation9 [shape = 's32[1]{0}', space=sflag, size = 0x4, scoped, tag = 'scoped memory for tpu_custom_call.1']
    #allocation10 [shape = 'u8[393216]{0}', space=vmem, size = 0x60000, scoped, tag = 'input window, operand 11, single buffered']
    #allocation11 [shape = 'u8[98304]{0}', space=vmem, size = 0x18000, scoped, tag = 'input window, operand 15, single buffered']
    #allocation12 [shape = 's32[1]{0}', space=sflag, size = 0x4, scoped, tag = 'scoped memory for tpu_custom_call.1']
    #allocation13 [shape = 'u8[98304]{0}', space=vmem, size = 0x18000, scoped, tag = 'input window, operand 16, single buffered']
    #allocation14 [shape = 'u8[16384]{0}', space=vmem, size = 0x4000, scoped, tag = 'output window, operand 0']
    %23 = vsyncpa [#allocation3], 0
    %24 = vsyncpa [#allocation6], 0
    %25 = vsyncpa [#allocation9], 0
    %26 = vsyncpa [#allocation12], 0
    %27 = vsyncpa [#allocation4], 0
    %s28 = scalar_lea.sflag [#allocation4], 1
    %29 = vsyncpa %s28, 0
    loop: start=0, step=1, limit=4
    $region2: #{tpu_custom_call.1} parent=1 // loop_pre_header
      _
    $region3: #{tpu_custom_call.1} parent=1 // loop_header
      %s31 = sphi 0, %s35
      %p32 = scmp.ge.s32.totalorder %s31, 4
      %s41 = sphi 0, %s43
      %s44 = sphi 0, %s41
      %s45 = sphi 0, %s44
      %s61 = sphi 0, %s45
      %s65 = sphi 0, %s65
      %s67 = sphi 0, %s65
      %s68 = sphi 0, %s67
      %s82 = sphi 0, %s68
      %s86 = sphi 0, %s86
      %s88 = sphi 0, %s86
      %s89 = sphi 0, %s88
      %s103 = sphi 0, %s89
      %s107 = sphi 0, %s107
      %s109 = sphi 0, %s107
      %s110 = sphi 0, %s109
      %s124 = sphi 0, %s110
      %s128 = sphi 0, %s128
      %s130 = sphi 0, %s128
      %s131 = sphi 0, %s130
      %s145 = sphi 0, %s131
      %s149 = sphi 0, %s149
      %s151 = sphi 0, %s149
      %s152 = sphi 0, %s151
      %s166 = sphi 0, %s152
      %s170 = sphi 0, %s170
      %s172 = sphi 0, %s170
      %s173 = sphi 0, %s172
      %s187 = sphi 0, %s173
      %s191 = sphi 0, %s191
      %s193 = sphi 0, %s191
      %s194 = sphi 0, %s193
      %s208 = sphi 0, %s194
      %s212 = sphi 0, %s212
      %s214 = sphi 0, %s212
      %s215 = sphi 0, %s214
      %s229 = sphi 0, %s215
      %s233 = sphi 0, %s233
      %s235 = sphi 0, %s233
      %s236 = sphi 0, %s235
      %s250 = sphi 0, %s236
      %s254 = sphi 0, %s254
      %s256 = sphi 0, %s254
      %s257 = sphi 0, %s256
      %s271 = sphi 0, %s257
      %s275 = sphi 0, %s275
      %s277 = sphi 0, %s275
      %s278 = sphi 0, %s277
      %s292 = sphi 0, %s278
      %s296 = sphi 0, %s296
      %s298 = sphi 0, %s296
      %s299 = sphi 0, %s298
      %s313 = sphi 0, %s299
      %s317 = sphi 0, %s317
      %s319 = sphi 0, %s317
      %s320 = sphi 0, %s319
      %s334 = sphi 0, %s320
      %s338 = sphi 0, %s338
      %s340 = sphi 0, %s338
      %s341 = sphi 0, %s340
      %s355 = sphi 0, %s341
      %s359 = sphi 0, %s359
      %s361 = sphi 0, %s359
      %s362 = sphi 0, %s361
      %s376 = sphi 0, %s362
      %s380 = sphi 0, %s380
      %s382 = sphi 0, %s380
      %s383 = sphi 0, %s382
      %s397 = sphi 0, %s383
      %s401 = sphi 0, %s401
      %s403 = sphi 0, %s401
      %s404 = sphi 0, %s403
      %s418 = sphi 0, %s404
      %s424 = sphi 0, %s426
      %s427 = sphi 0, %s424
      %s428 = sphi 0, %s427
      %s444 = sphi 0, %s428
    $region4: #{tpu_custom_call.1} parent=1 // loop_header_branch
      %34 = sbr.rel (%p32) target = $region8
    $region5: #{tpu_custom_call.1} parent=1 // loop_body
      %s36 = ssub.s32 %s31, 1
      %s37 = ssub.s32 %s31, 2
      %s38 = sadd.s32 %s31, 1
      %s39 = ssub.s32 %s31, %s38
      %p40 = scmp.eq.s32.totalorder %s39, 0
      %s42 = sadd.s32 %s41, 1
      %s43 = scalar_select %p40, %s41, %s42
      %p46 = pneg %p40
      %p47 = scmp.eq.s32.totalorder %s31, 1
      %p48 = por %p46, %p47
      %p49 = scmp.ne.s32.totalorder %s41, %s44
      %p50 = scmp.eq.s32.totalorder %s31, 0
      %p51 = por %p49, %p50
      %p52 = scmp.ne.s32.totalorder %s41, %s44
      %p53 = scmp.eq.s32.totalorder %s36, 1
      %p54 = por %p52, %p53
      %p55 = scmp.ne.s32.totalorder %s44, %s45
      %p56 = scmp.eq.s32.totalorder %s36, 0
      %p57 = por %p55, %p56
      %p58 = scmp.ne.s32.totalorder %s44, %s45
      %p59 = scmp.eq.s32.totalorder %s37, 1
      %p60 = por %p58, %p59
      %p62 = scmp.ne.s32.totalorder %s45, %s61
      %p63 = scmp.eq.s32.totalorder %s37, 0
      %p64 = por %p62, %p63
      %s66 = sadd.s32 %s65, 1
      %p69 = scmp.eq.s32.totalorder %s31, 1
      %p70 = scmp.ne.s32.totalorder %s65, %s67
      %p71 = scmp.eq.s32.totalorder %s31, 0
      %p72 = por %p70, %p71
      %p73 = scmp.ne.s32.totalorder %s65, %s67
      %p74 = scmp.eq.s32.totalorder %s36, 1
      %p75 = por %p73, %p74
      %p76 = scmp.ne.s32.totalorder %s67, %s68
      %p77 = scmp.eq.s32.totalorder %s36, 0
      %p78 = por %p76, %p77
      %p79 = scmp.ne.s32.totalorder %s67, %s68
      %p80 = scmp.eq.s32.totalorder %s37, 1
      %p81 = por %p79, %p80
      %p83 = scmp.ne.s32.totalorder %s68, %s82
      %p84 = scmp.eq.s32.totalorder %s37, 0
      %p85 = por %p83, %p84
      %s87 = sadd.s32 %s86, 1
      %p90 = scmp.eq.s32.totalorder %s31, 1
      %p91 = scmp.ne.s32.totalorder %s86, %s88
      %p92 = scmp.eq.s32.totalorder %s31, 0
      %p93 = por %p91, %p92
      %p94 = scmp.ne.s32.totalorder %s86, %s88
      %p95 = scmp.eq.s32.totalorder %s36, 1
      %p96 = por %p94, %p95
      %p97 = scmp.ne.s32.totalorder %s88, %s89
      %p98 = scmp.eq.s32.totalorder %s36, 0
      %p99 = por %p97, %p98
      %p100 = scmp.ne.s32.totalorder %s88, %s89
      %p101 = scmp.eq.s32.totalorder %s37, 1
      %p102 = por %p100, %p101
      %p104 = scmp.ne.s32.totalorder %s89, %s103
      %p105 = scmp.eq.s32.totalorder %s37, 0
      %p106 = por %p104, %p105
      %s108 = sadd.s32 %s107, 1
      %p111 = scmp.eq.s32.totalorder %s31, 1
      %p112 = scmp.ne.s32.totalorder %s107, %s109
      %p113 = scmp.eq.s32.totalorder %s31, 0
      %p114 = por %p112, %p113
      %p115 = scmp.ne.s32.totalorder %s107, %s109
      %p116 = scmp.eq.s32.totalorder %s36, 1
      %p117 = por %p115, %p116
      %p118 = scmp.ne.s32.totalorder %s109, %s110
      %p119 = scmp.eq.s32.totalorder %s36, 0
      %p120 = por %p118, %p119
      %p121 = scmp.ne.s32.totalorder %s109, %s110
      %p122 = scmp.eq.s32.totalorder %s37, 1
      %p123 = por %p121, %p122
      %p125 = scmp.ne.s32.totalorder %s110, %s124
      %p126 = scmp.eq.s32.totalorder %s37, 0
      %p127 = por %p125, %p126
      %s129 = sadd.s32 %s128, 1
      %p132 = scmp.eq.s32.totalorder %s31, 1
      %p133 = scmp.ne.s32.totalorder %s128, %s130
      %p134 = scmp.eq.s32.totalorder %s31, 0
      %p135 = por %p133, %p134
      %p136 = scmp.ne.s32.totalorder %s128, %s130
      %p137 = scmp.eq.s32.totalorder %s36, 1
      %p138 = por %p136, %p137
      %p139 = scmp.ne.s32.totalorder %s130, %s131
      %p140 = scmp.eq.s32.totalorder %s36, 0
      %p141 = por %p139, %p140
      %p142 = scmp.ne.s32.totalorder %s130, %s131
      %p143 = scmp.eq.s32.totalorder %s37, 1
      %p144 = por %p142, %p143
      %p146 = scmp.ne.s32.totalorder %s131, %s145
      %p147 = scmp.eq.s32.totalorder %s37, 0
      %p148 = por %p146, %p147
      %s150 = sadd.s32 %s149, 1
      %p153 = scmp.eq.s32.totalorder %s31, 1
      %p154 = scmp.ne.s32.totalorder %s149, %s151
      %p155 = scmp.eq.s32.totalorder %s31, 0
      %p156 = por %p154, %p155
      %p157 = scmp.ne.s32.totalorder %s149, %s151
      %p158 = scmp.eq.s32.totalorder %s36, 1
      %p159 = por %p157, %p158
      %p160 = scmp.ne.s32.totalorder %s151, %s152
      %p161 = scmp.eq.s32.totalorder %s36, 0
      %p162 = por %p160, %p161
      %p163 = scmp.ne.s32.totalorder %s151, %s152
      %p164 = scmp.eq.s32.totalorder %s37, 1
      %p165 = por %p163, %p164
      %p167 = scmp.ne.s32.totalorder %s152, %s166
      %p168 = scmp.eq.s32.totalorder %s37, 0
      %p169 = por %p167, %p168
      %s171 = sadd.s32 %s170, 1
      %p174 = scmp.eq.s32.totalorder %s31, 1
      %p175 = scmp.ne.s32.totalorder %s170, %s172
      %p176 = scmp.eq.s32.totalorder %s31, 0
      %p177 = por %p175, %p176
      %p178 = scmp.ne.s32.totalorder %s170, %s172
      %p179 = scmp.eq.s32.totalorder %s36, 1
      %p180 = por %p178, %p179
      %p181 = scmp.ne.s32.totalorder %s172, %s173
      %p182 = scmp.eq.s32.totalorder %s36, 0
      %p183 = por %p181, %p182
      %p184 = scmp.ne.s32.totalorder %s172, %s173
      %p185 = scmp.eq.s32.totalorder %s37, 1
      %p186 = por %p184, %p185
      %p188 = scmp.ne.s32.totalorder %s173, %s187
      %p189 = scmp.eq.s32.totalorder %s37, 0
      %p190 = por %p188, %p189
      %s192 = sadd.s32 %s191, 1
      %p195 = scmp.eq.s32.totalorder %s31, 1
      %p196 = scmp.ne.s32.totalorder %s191, %s193
      %p197 = scmp.eq.s32.totalorder %s31, 0
      %p198 = por %p196, %p197
      %p199 = scmp.ne.s32.totalorder %s191, %s193
      %p200 = scmp.eq.s32.totalorder %s36, 1
      %p201 = por %p199, %p200
      %p202 = scmp.ne.s32.totalorder %s193, %s194
      %p203 = scmp.eq.s32.totalorder %s36, 0
      %p204 = por %p202, %p203
      %p205 = scmp.ne.s32.totalorder %s193, %s194
      %p206 = scmp.eq.s32.totalorder %s37, 1
      %p207 = por %p205, %p206
      %p209 = scmp.ne.s32.totalorder %s194, %s208
      %p210 = scmp.eq.s32.totalorder %s37, 0
      %p211 = por %p209, %p210
      %s213 = sadd.s32 %s212, 1
      %p216 = scmp.eq.s32.totalorder %s31, 1
      %p217 = scmp.ne.s32.totalorder %s212, %s214
      %p218 = scmp.eq.s32.totalorder %s31, 0
      %p219 = por %p217, %p218
      %p220 = scmp.ne.s32.totalorder %s212, %s214
      %p221 = scmp.eq.s32.totalorder %s36, 1
      %p222 = por %p220, %p221
      %p223 = scmp.ne.s32.totalorder %s214, %s215
      %p224 = scmp.eq.s32.totalorder %s36, 0
      %p225 = por %p223, %p224
      %p226 = scmp.ne.s32.totalorder %s214, %s215
      %p227 = scmp.eq.s32.totalorder %s37, 1
      %p228 = por %p226, %p227
      %p230 = scmp.ne.s32.totalorder %s215, %s229
      %p231 = scmp.eq.s32.totalorder %s37, 0
      %p232 = por %p230, %p231
      %s234 = sadd.s32 %s233, 1
      %p237 = scmp.eq.s32.totalorder %s31, 1
      %p238 = scmp.ne.s32.totalorder %s233, %s235
      %p239 = scmp.eq.s32.totalorder %s31, 0
      %p240 = por %p238, %p239
      %p241 = scmp.ne.s32.totalorder %s233, %s235
      %p242 = scmp.eq.s32.totalorder %s36, 1
      %p243 = por %p241, %p242
      %p244 = scmp.ne.s32.totalorder %s235, %s236
      %p245 = scmp.eq.s32.totalorder %s36, 0
      %p246 = por %p244, %p245
      %p247 = scmp.ne.s32.totalorder %s235, %s236
      %p248 = scmp.eq.s32.totalorder %s37, 1
      %p249 = por %p247, %p248
      %p251 = scmp.ne.s32.totalorder %s236, %s250
      %p252 = scmp.eq.s32.totalorder %s37, 0
      %p253 = por %p251, %p252
      %s255 = sadd.s32 %s254, 1
      %p258 = scmp.eq.s32.totalorder %s31, 1
      %p259 = scmp.ne.s32.totalorder %s254, %s256
      %p260 = scmp.eq.s32.totalorder %s31, 0
      %p261 = por %p259, %p260
      %p262 = scmp.ne.s32.totalorder %s254, %s256
      %p263 = scmp.eq.s32.totalorder %s36, 1
      %p264 = por %p262, %p263
      %p265 = scmp.ne.s32.totalorder %s256, %s257
      %p266 = scmp.eq.s32.totalorder %s36, 0
      %p267 = por %p265, %p266
      %p268 = scmp.ne.s32.totalorder %s256, %s257
      %p269 = scmp.eq.s32.totalorder %s37, 1
      %p270 = por %p268, %p269
      %p272 = scmp.ne.s32.totalorder %s257, %s271
      %p273 = scmp.eq.s32.totalorder %s37, 0
      %p274 = por %p272, %p273
      %s276 = sadd.s32 %s275, 1
      %p279 = scmp.eq.s32.totalorder %s31, 1
      %p280 = scmp.ne.s32.totalorder %s275, %s277
      %p281 = scmp.eq.s32.totalorder %s31, 0
      %p282 = por %p280, %p281
      %p283 = scmp.ne.s32.totalorder %s275, %s277
      %p284 = scmp.eq.s32.totalorder %s36, 1
      %p285 = por %p283, %p284
      %p286 = scmp.ne.s32.totalorder %s277, %s278
      %p287 = scmp.eq.s32.totalorder %s36, 0
      %p288 = por %p286, %p287
      %p289 = scmp.ne.s32.totalorder %s277, %s278
      %p290 = scmp.eq.s32.totalorder %s37, 1
      %p291 = por %p289, %p290
      %p293 = scmp.ne.s32.totalorder %s278, %s292
      %p294 = scmp.eq.s32.totalorder %s37, 0
      %p295 = por %p293, %p294
      %s297 = sadd.s32 %s296, 1
      %p300 = scmp.eq.s32.totalorder %s31, 1
      %p301 = scmp.ne.s32.totalorder %s296, %s298
      %p302 = scmp.eq.s32.totalorder %s31, 0
      %p303 = por %p301, %p302
      %p304 = scmp.ne.s32.totalorder %s296, %s298
      %p305 = scmp.eq.s32.totalorder %s36, 1
      %p306 = por %p304, %p305
      %p307 = scmp.ne.s32.totalorder %s298, %s299
      %p308 = scmp.eq.s32.totalorder %s36, 0
      %p309 = por %p307, %p308
      %p310 = scmp.ne.s32.totalorder %s298, %s299
      %p311 = scmp.eq.s32.totalorder %s37, 1
      %p312 = por %p310, %p311
      %p314 = scmp.ne.s32.totalorder %s299, %s313
      %p315 = scmp.eq.s32.totalorder %s37, 0
      %p316 = por %p314, %p315
      %s318 = sadd.s32 %s317, 1
      %p321 = scmp.eq.s32.totalorder %s31, 1
      %p322 = scmp.ne.s32.totalorder %s317, %s319
      %p323 = scmp.eq.s32.totalorder %s31, 0
      %p324 = por %p322, %p323
      %p325 = scmp.ne.s32.totalorder %s317, %s319
      %p326 = scmp.eq.s32.totalorder %s36, 1
      %p327 = por %p325, %p326
      %p328 = scmp.ne.s32.totalorder %s319, %s320
      %p329 = scmp.eq.s32.totalorder %s36, 0
      %p330 = por %p328, %p329
      %p331 = scmp.ne.s32.totalorder %s319, %s320
      %p332 = scmp.eq.s32.totalorder %s37, 1
      %p333 = por %p331, %p332
      %p335 = scmp.ne.s32.totalorder %s320, %s334
      %p336 = scmp.eq.s32.totalorder %s37, 0
      %p337 = por %p335, %p336
      %s339 = sadd.s32 %s338, 1
      %p342 = scmp.eq.s32.totalorder %s31, 1
      %p343 = scmp.ne.s32.totalorder %s338, %s340
      %p344 = scmp.eq.s32.totalorder %s31, 0
      %p345 = por %p343, %p344
      %p346 = scmp.ne.s32.totalorder %s338, %s340
      %p347 = scmp.eq.s32.totalorder %s36, 1
      %p348 = por %p346, %p347
      %p349 = scmp.ne.s32.totalorder %s340, %s341
      %p350 = scmp.eq.s32.totalorder %s36, 0
      %p351 = por %p349, %p350
      %p352 = scmp.ne.s32.totalorder %s340, %s341
      %p353 = scmp.eq.s32.totalorder %s37, 1
      %p354 = por %p352, %p353
      %p356 = scmp.ne.s32.totalorder %s341, %s355
      %p357 = scmp.eq.s32.totalorder %s37, 0
      %p358 = por %p356, %p357
      %s360 = sadd.s32 %s359, 1
      %p363 = scmp.eq.s32.totalorder %s31, 1
      %p364 = scmp.ne.s32.totalorder %s359, %s361
      %p365 = scmp.eq.s32.totalorder %s31, 0
      %p366 = por %p364, %p365
      %p367 = scmp.ne.s32.totalorder %s359, %s361
      %p368 = scmp.eq.s32.totalorder %s36, 1
      %p369 = por %p367, %p368
      %p370 = scmp.ne.s32.totalorder %s361, %s362
      %p371 = scmp.eq.s32.totalorder %s36, 0
      %p372 = por %p370, %p371
      %p373 = scmp.ne.s32.totalorder %s361, %s362
      %p374 = scmp.eq.s32.totalorder %s37, 1
      %p375 = por %p373, %p374
      %p377 = scmp.ne.s32.totalorder %s362, %s376
      %p378 = scmp.eq.s32.totalorder %s37, 0
      %p379 = por %p377, %p378
      %s381 = sadd.s32 %s380, 1
      %p384 = scmp.eq.s32.totalorder %s31, 1
      %p385 = scmp.ne.s32.totalorder %s380, %s382
      %p386 = scmp.eq.s32.totalorder %s31, 0
      %p387 = por %p385, %p386
      %p388 = scmp.ne.s32.totalorder %s380, %s382
      %p389 = scmp.eq.s32.totalorder %s36, 1
      %p390 = por %p388, %p389
      %p391 = scmp.ne.s32.totalorder %s382, %s383
      %p392 = scmp.eq.s32.totalorder %s36, 0
      %p393 = por %p391, %p392
      %p394 = scmp.ne.s32.totalorder %s382, %s383
      %p395 = scmp.eq.s32.totalorder %s37, 1
      %p396 = por %p394, %p395
      %p398 = scmp.ne.s32.totalorder %s383, %s397
      %p399 = scmp.eq.s32.totalorder %s37, 0
      %p400 = por %p398, %p399
      %s402 = sadd.s32 %s401, 1
      %p405 = scmp.eq.s32.totalorder %s31, 1
      %p406 = scmp.ne.s32.totalorder %s401, %s403
      %p407 = scmp.eq.s32.totalorder %s31, 0
      %p408 = por %p406, %p407
      %p409 = scmp.ne.s32.totalorder %s401, %s403
      %p410 = scmp.eq.s32.totalorder %s36, 1
      %p411 = por %p409, %p410
      %p412 = scmp.ne.s32.totalorder %s403, %s404
      %p413 = scmp.eq.s32.totalorder %s36, 0
      %p414 = por %p412, %p413
      %p415 = scmp.ne.s32.totalorder %s403, %s404
      %p416 = scmp.eq.s32.totalorder %s37, 1
      %p417 = por %p415, %p416
      %p419 = scmp.ne.s32.totalorder %s404, %s418
      %p420 = scmp.eq.s32.totalorder %s37, 0
      %p421 = por %p419, %p420
      %s422 = ssub.s32 %s31, %s38
      %p423 = scmp.eq.s32.totalorder %s422, 0
      %s425 = sadd.s32 %s424, 1
      %s426 = scalar_select %p423, %s424, %s425
      %p429 = pneg %p423
      %p430 = scmp.eq.s32.totalorder %s31, 1
      %p431 = por %p429, %p430
      %p432 = scmp.ne.s32.totalorder %s424, %s427
      %p433 = scmp.eq.s32.totalorder %s31, 0
      %p434 = por %p432, %p433
      %p435 = scmp.ne.s32.totalorder %s424, %s427
      %p436 = scmp.eq.s32.totalorder %s36, 1
      %p437 = por %p435, %p436
      %p438 = scmp.ne.s32.totalorder %s427, %s428
      %p439 = scmp.eq.s32.totalorder %s36, 0
      %p440 = por %p438, %p439
      %p441 = scmp.ne.s32.totalorder %s427, %s428
      %p442 = scmp.eq.s32.totalorder %s37, 1
      %p443 = por %p441, %p442
      %p445 = scmp.ne.s32.totalorder %s428, %s444
      %p446 = scmp.eq.s32.totalorder %s37, 0
      %p447 = por %p445, %p446
      %p448 = scmp.le.s32.totalorder 1, %s31
      %p449 = scmp.lt.s32.totalorder %s31, 3
      %p450 = pnand %p448, %p449
      %p451 = pneg %p450
      // Predicated region
      $region9: #{tpu_custom_call.1} parent=5 // pred_check
        _
      $region10: #{tpu_custom_call.1} parent=5 // pred_check_branch
        %453 = sbr.rel (%p450) target = $region12
      $region11: #{tpu_custom_call.1} parent=5 // pred_region
        %s454 = ssub.s32 %s31, 1
        // Predicated region
        $region13: #{tpu_custom_call.1} parent=11 // pred_check
          %p455 = pneg %p78
        $region14: #{tpu_custom_call.1} parent=11 // pred_check_branch
          %457 = sbr.rel (%p455) target = $region16
        $region15: #{tpu_custom_call.1} parent=11 // pred_region
          %s459 = ssub.s32 512, 512
          %460 = vsyncadd [#allocation3], %s459
          %s461 = sshll.u32 [#allocation2], 4
          %s462 = int_to_ptr.vmem [resolvable:$true] %s461
          %467 = dma.hbm_to_vmem [thread:$0]  %s1, 512, %s462, [#allocation3], 256, 256, 16
        $region16: #{tpu_custom_call.1} parent=11 // pred_fallthru
          _
        // Predicated region
        $region17: #{tpu_custom_call.1} parent=11 // pred_check
          %p468 = pneg %p99
        $region18: #{tpu_custom_call.1} parent=11 // pred_check_branch
          %470 = sbr.rel (%p468) target = $region20
        $region19: #{tpu_custom_call.1} parent=11 // pred_region
          _
        $region20: #{tpu_custom_call.1} parent=11 // pred_fallthru
          _
        // Predicated region
        $region21: #{tpu_custom_call.1} parent=11 // pred_check
          %p471 = pneg %p120
        $region22: #{tpu_custom_call.1} parent=11 // pred_check_branch
          %473 = sbr.rel (%p471) target = $region24
        $region23: #{tpu_custom_call.1} parent=11 // pred_region
          _
        $region24: #{tpu_custom_call.1} parent=11 // pred_fallthru
          _
        // Predicated region
        $region25: #{tpu_custom_call.1} parent=11 // pred_check
          %p474 = pneg %p141
        $region26: #{tpu_custom_call.1} parent=11 // pred_check_branch
          %476 = sbr.rel (%p474) target = $region28
        $region27: #{tpu_custom_call.1} parent=11 // pred_region
          _
        $region28: #{tpu_custom_call.1} parent=11 // pred_fallthru
          _
        // Predicated region
        $region29: #{tpu_custom_call.1} parent=11 // pred_check
          %p477 = pneg %p162
        $region30: #{tpu_custom_call.1} parent=11 // pred_check_branch
          %479 = sbr.rel (%p477) target = $region32
        $region31: #{tpu_custom_call.1} parent=11 // pred_region
          %s481 = ssub.s32 4096, 4096
          %482 = vsyncadd [#allocation6], %s481
          %s483 = sshll.u32 [#allocation5], 4
          %s484 = int_to_ptr.vmem [resolvable:$true] %s483
          %489 = dma.hbm_to_vmem [thread:$0]  %s5, 4096, %s484, [#allocation6], 64, 64, 4
        $region32: #{tpu_custom_call.1} parent=11 // pred_fallthru
          _
        // Predicated region
        $region33: #{tpu_custom_call.1} parent=11 // pred_check
          %p490 = pneg %p183
        $region34: #{tpu_custom_call.1} parent=11 // pred_check_branch
          %492 = sbr.rel (%p490) target = $region36
        $region35: #{tpu_custom_call.1} parent=11 // pred_region
          %s494 = ssub.s32 16384, 16384
          %495 = vsyncadd [#allocation6], %s494
          %s496 = sshll.u32 [#allocation7], 4
          %s497 = int_to_ptr.vmem [resolvable:$true] %s496
          %502 = dma.hbm_to_vmem [thread:$0]  %s6, 16384, %s497, [#allocation6], 256, 256, 16
        $region36: #{tpu_custom_call.1} parent=11 // pred_fallthru
          _
        // Predicated region
        $region37: #{tpu_custom_call.1} parent=11 // pred_check
          %p503 = pneg %p204
        $region38: #{tpu_custom_call.1} parent=11 // pred_check_branch
          %505 = sbr.rel (%p503) target = $region40
        $region39: #{tpu_custom_call.1} parent=11 // pred_region
          _
        $region40: #{tpu_custom_call.1} parent=11 // pred_fallthru
          _
        // Predicated region
        $region41: #{tpu_custom_call.1} parent=11 // pred_check
          %p506 = pneg %p225
        $region42: #{tpu_custom_call.1} parent=11 // pred_check_branch
          %508 = sbr.rel (%p506) target = $region44
        $region43: #{tpu_custom_call.1} parent=11 // pred_region
          _
        $region44: #{tpu_custom_call.1} parent=11 // pred_fallthru
          _
        // Predicated region
        $region45: #{tpu_custom_call.1} parent=11 // pred_check
          %p509 = pneg %p246
        $region46: #{tpu_custom_call.1} parent=11 // pred_check_branch
          %511 = sbr.rel (%p509) target = $region48
        $region47: #{tpu_custom_call.1} parent=11 // pred_region
          _
        $region48: #{tpu_custom_call.1} parent=11 // pred_fallthru
          _
        // Predicated region
        $region49: #{tpu_custom_call.1} parent=11 // pred_check
          %p512 = pneg %p267
        $region50: #{tpu_custom_call.1} parent=11 // pred_check_branch
          %514 = sbr.rel (%p512) target = $region52
        $region51: #{tpu_custom_call.1} parent=11 // pred_region
          %s516 = ssub.s32 4096, 4096
          %517 = vsyncadd [#allocation9], %s516
          %s518 = sshll.u32 [#allocation8], 4
          %s519 = int_to_ptr.vmem [resolvable:$true] %s518
          %524 = dma.hbm_to_vmem [thread:$0]  %s10, 4096, %s519, [#allocation9], 64, 64, 4
        $region52: #{tpu_custom_call.1} parent=11 // pred_fallthru
          _
        // Predicated region
        $region53: #{tpu_custom_call.1} parent=11 // pred_check
          %p525 = pneg %p288
        $region54: #{tpu_custom_call.1} parent=11 // pred_check_branch
          %527 = sbr.rel (%p525) target = $region56
        $region55: #{tpu_custom_call.1} parent=11 // pred_region
          %s529 = ssub.s32 12288, 12288
          %530 = vsyncadd [#allocation9], %s529
          %s531 = sshll.u32 [#allocation10], 4
          %s532 = int_to_ptr.vmem [resolvable:$true] %s531
          %537 = dma.hbm_to_vmem [thread:$0]  %s11, 12288, %s532, [#allocation9], 192, 192, 12
        $region56: #{tpu_custom_call.1} parent=11 // pred_fallthru
          _
        // Predicated region
        $region57: #{tpu_custom_call.1} parent=11 // pred_check
          %p538 = pneg %p309
        $region58: #{tpu_custom_call.1} parent=11 // pred_check_branch
          %540 = sbr.rel (%p538) target = $region60
        $region59: #{tpu_custom_call.1} parent=11 // pred_region
          _
        $region60: #{tpu_custom_call.1} parent=11 // pred_fallthru
          _
        // Predicated region
        $region61: #{tpu_custom_call.1} parent=11 // pred_check
          %p541 = pneg %p330
        $region62: #{tpu_custom_call.1} parent=11 // pred_check_branch
          %543 = sbr.rel (%p541) target = $region64
        $region63: #{tpu_custom_call.1} parent=11 // pred_region
          _
        $region64: #{tpu_custom_call.1} parent=11 // pred_fallthru
          _
        // Predicated region
        $region65: #{tpu_custom_call.1} parent=11 // pred_check
          %p544 = pneg %p351
        $region66: #{tpu_custom_call.1} parent=11 // pred_check_branch
          %546 = sbr.rel (%p544) target = $region68
        $region67: #{tpu_custom_call.1} parent=11 // pred_region
          _
        $region68: #{tpu_custom_call.1} parent=11 // pred_fallthru
          _
        // Predicated region
        $region69: #{tpu_custom_call.1} parent=11 // pred_check
          %p547 = pneg %p372
        $region70: #{tpu_custom_call.1} parent=11 // pred_check_branch
          %549 = sbr.rel (%p547) target = $region72
        $region71: #{tpu_custom_call.1} parent=11 // pred_region
          %s551 = ssub.s32 3072, 3072
          %552 = vsyncadd [#allocation12], %s551
          %s553 = sshll.u32 [#allocation11], 4
          %s554 = int_to_ptr.vmem [resolvable:$true] %s553
          %559 = dma.hbm_to_vmem [thread:$0]  %s15, 3072, %s554, [#allocation12], 64, 64, 4
        $region72: #{tpu_custom_call.1} parent=11 // pred_fallthru
          _
        // Predicated region
        $region73: #{tpu_custom_call.1} parent=11 // pred_check
          %p560 = pneg %p393
        $region74: #{tpu_custom_call.1} parent=11 // pred_check_branch
          %562 = sbr.rel (%p560) target = $region76
        $region75: #{tpu_custom_call.1} parent=11 // pred_region
          %s564 = ssub.s32 3072, 3072
          %565 = vsyncadd [#allocation12], %s564
          %s566 = sshll.u32 [#allocation13], 4
          %s567 = int_to_ptr.vmem [resolvable:$true] %s566
          %572 = dma.hbm_to_vmem [thread:$0]  %s16, 3072, %s567, [#allocation12], 64, 64, 4
        $region76: #{tpu_custom_call.1} parent=11 // pred_fallthru
          _
        // Predicated region
        $region77: #{tpu_custom_call.1} parent=11 // pred_check
          %p573 = pneg %p414
        $region78: #{tpu_custom_call.1} parent=11 // pred_check_branch
          %575 = sbr.rel (%p573) target = $region80
        $region79: #{tpu_custom_call.1} parent=11 // pred_region
          _
        $region80: #{tpu_custom_call.1} parent=11 // pred_fallthru
          _
      $region12: #{tpu_custom_call.1} parent=5 // pred_fallthru
        _
      %p576 = scmp.lt.s32.totalorder %s31, 2
      // Predicated region
      $region81: #{tpu_custom_call.1} parent=5 // pred_check
        %p577 = pneg %p576
      $region82: #{tpu_custom_call.1} parent=5 // pred_check_branch
        %579 = sbr.rel (%p577) target = $region84
      $region83: #{tpu_custom_call.1} parent=5 // pred_region
        // Predicated region
        $region85: #{tpu_custom_call.1} parent=83 // pred_check
          %p580 = pneg %p51
        $region86: #{tpu_custom_call.1} parent=83 // pred_check_branch
          %582 = sbr.rel (%p580) target = $region88
        $region87: #{tpu_custom_call.1} parent=83 // pred_region
          %s583 = smul.u32 2, %s31
          %p584 = scmp.lt.s32.totalorder %s583, 3
          %s585 = scalar_select %p584, %s583, 3
          %s586 = smul.addr %s585, 4
          %s587 = scalar_lea.vmem %s0, %s586
          %s588 = smul.u32 2, %s31
        $region88: #{tpu_custom_call.1} parent=83 // pred_fallthru
          _
      $region84: #{tpu_custom_call.1} parent=5 // pred_fallthru
        _
      %p589 = scmp.le.s32.totalorder 1, %s31
      %p590 = scmp.lt.s32.totalorder %s31, 3
      %p591 = pnand %p589, %p590
      %p592 = pneg %p591
      // Predicated region
      $region89: #{tpu_custom_call.1} parent=5 // pred_check
        _
      $region90: #{tpu_custom_call.1} parent=5 // pred_check_branch
        %594 = sbr.rel (%p591) target = $region92
      $region91: #{tpu_custom_call.1} parent=5 // pred_region
        %s595 = ssub.s32 %s31, 1
        // Predicated region
        $region93: #{tpu_custom_call.1} parent=91 // pred_check
          %p596 = pneg %p78
        $region94: #{tpu_custom_call.1} parent=91 // pred_check_branch
          %598 = sbr.rel (%p596) target = $region96
        $region95: #{tpu_custom_call.1} parent=91 // pred_region
          %599 = dma.done [#allocation3], 512
        $region96: #{tpu_custom_call.1} parent=91 // pred_fallthru
          _
        // Predicated region
        $region97: #{tpu_custom_call.1} parent=91 // pred_check
          %p600 = pneg %p162
        $region98: #{tpu_custom_call.1} parent=91 // pred_check_branch
          %602 = sbr.rel (%p600) target = $region100
        $region99: #{tpu_custom_call.1} parent=91 // pred_region
          %603 = dma.done [#allocation6], 4096
        $region100: #{tpu_custom_call.1} parent=91 // pred_fallthru
          _
        // Predicated region
        $region101: #{tpu_custom_call.1} parent=91 // pred_check
          %p604 = pneg %p183
        $region102: #{tpu_custom_call.1} parent=91 // pred_check_branch
          %606 = sbr.rel (%p604) target = $region104
        $region103: #{tpu_custom_call.1} parent=91 // pred_region
          %607 = dma.done [#allocation6], 16384
        $region104: #{tpu_custom_call.1} parent=91 // pred_fallthru
          _
        // Predicated region
        $region105: #{tpu_custom_call.1} parent=91 // pred_check
          %p608 = pneg %p267
        $region106: #{tpu_custom_call.1} parent=91 // pred_check_branch
          %610 = sbr.rel (%p608) target = $region108
        $region107: #{tpu_custom_call.1} parent=91 // pred_region
          %611 = dma.done [#allocation9], 4096
        $region108: #{tpu_custom_call.1} parent=91 // pred_fallthru
          _
        // Predicated region
        $region109: #{tpu_custom_call.1} parent=91 // pred_check
          %p612 = pneg %p288
        $region110: #{tpu_custom_call.1} parent=91 // pred_check_branch
          %614 = sbr.rel (%p612) target = $region112
        $region111: #{tpu_custom_call.1} parent=91 // pred_region
          %615 = dma.done [#allocation9], 12288
        $region112: #{tpu_custom_call.1} parent=91 // pred_fallthru
          _
        // Predicated region
        $region113: #{tpu_custom_call.1} parent=91 // pred_check
          %p616 = pneg %p372
        $region114: #{tpu_custom_call.1} parent=91 // pred_check_branch
          %618 = sbr.rel (%p616) target = $region116
        $region115: #{tpu_custom_call.1} parent=91 // pred_region
          %619 = dma.done [#allocation12], 3072
        $region116: #{tpu_custom_call.1} parent=91 // pred_fallthru
          _
        // Predicated region
        $region117: #{tpu_custom_call.1} parent=91 // pred_check
          %p620 = pneg %p393
        $region118: #{tpu_custom_call.1} parent=91 // pred_check_branch
          %622 = sbr.rel (%p620) target = $region120
        $region119: #{tpu_custom_call.1} parent=91 // pred_region
          %623 = dma.done [#allocation12], 3072
        $region120: #{tpu_custom_call.1} parent=91 // pred_fallthru
          _
        %s624 = smul.u32 2, %s36
        %p625 = scmp.lt.s32.totalorder %s624, 3
        %s626 = scalar_select %p625, %s624, 3
        %s627 = smul.addr %s626, 4
        %s628 = scalar_lea.vmem %s0, %s627
        %p629 = pneg %p57
        %p630 = pneg %p54
        %p631 = pneg %p78
        %p632 = pneg %p75
        %p633 = pneg %p99
        %p634 = pneg %p96
        %p635 = pneg %p120
        %p636 = pneg %p117
        %p637 = pneg %p141
        %p638 = pneg %p138
        %p639 = pneg %p162
        %p640 = pneg %p159
        %p641 = pneg %p183
        %p642 = pneg %p180
        %p643 = pneg %p204
        %p644 = pneg %p201
        %p645 = pneg %p225
        %p646 = pneg %p222
        %p647 = pneg %p246
        %p648 = pneg %p243
        %p649 = pneg %p267
        %p650 = pneg %p264
        %p651 = pneg %p288
        %p652 = pneg %p285
        %p653 = pneg %p309
        %p654 = pneg %p306
        %p655 = pneg %p330
        %p656 = pneg %p327
        %p657 = pneg %p351
        %p658 = pneg %p348
        %p659 = pneg %p372
        %p660 = pneg %p369
        %p661 = pneg %p393
        %p662 = pneg %p390
        %p663 = pneg %p414
        %p664 = pneg %p411
        %p665 = pneg %p440
        %p666 = pneg %p437
        %s667 = sand.u32 %s427, 1
        %s668 = scalar_lea.sflag [#allocation4], %s667
        %s669 = sand.u32 %s427, 1
        %s670 = smul.addr %s669, 16
        %s671 = scalar_lea.vmem [#allocation14], %s670
        %s672 = smul.u32 2, %s36
        %p673 = scmp.lt.s32.totalorder %s672, 3
        %s674 = scalar_select %p673, %s672, 3
        %s675 = smul.addr %s674, 4
        %s676 = scalar_lea.vmem %s0, %s675
        %s677 = smul.u32 2, %s36
        %s678 = smul.u32 2, %s36
        %v680 = vld [vmem:[%s676] sm:$0xf]
        %v681 = vld [vmem:[%s676 + $0x4] sm:$0xf]
        %v682 = vld [vmem:[#allocation2] sm:$0xff]
        %v683 = vld [vmem:[#allocation2 + $0x8] sm:$0xff]
        %v684 = vld [vmem:[#allocation2 + $0x10] sm:$0xff]
        %v685 = vld [vmem:[#allocation2 + $0x18] sm:$0xff]
        %v686 = vld [vmem:[%s2] sm:$0xf]
        %v688 = vlaneseq
        %v689 = vshrl.u32 %v688, 7
        %v690 = vsub.s32 0, %v689
        %v691 = vrot.slane %v686, %v690
        %v692 = vlaneseq
        %v693 = vshrl.u32 %v692, 7
        %v694 = vsub.s32 1, %v693
        %v695 = vrot.slane %v686, %v694
        %v696 = vlaneseq
        %v697 = vshrl.u32 %v696, 7
        %v698 = vsub.s32 2, %v697
        %v699 = vrot.slane %v686, %v698
        %v700 = vlaneseq
        %v701 = vshrl.u32 %v700, 7
        %v702 = vsub.s32 3, %v701
        %v703 = vrot.slane %v686, %v702
        %v710 = vunpack.c.l.b16 %v680
        %v711 = vunpack.c.l.b16 %v681
        %v712 = vpack.c.b16 %v711, %v710
        %v717 = vunpack.c.l.b16 %v682
        %v718 = vunpack.c.h.b16 %v682
        %v719 = vunpack.c.l.b16 %v683
        %v720 = vunpack.c.h.b16 %v683
        %v721 = vunpack.c.l.b16 %v684
        %v722 = vunpack.c.h.b16 %v684
        %v723 = vunpack.c.l.b16 %v685
        %v724 = vunpack.c.h.b16 %v685
        %v725 = vpack.c.b16 %v721, %v717
        %v726 = vpack.c.b16 %v722, %v718
        %v727 = vpack.c.b16 %v723, %v719
        %v728 = vpack.c.b16 %v724, %v720
        %vm733 = vcmask 130048
        %v735 = vsel %vm733, %v712, 0
        %737 = vmatprep.subr.bf16.mxu0 0
        %738 = vmatpush1.bf16.msra.mxu0 0
        %739 = vmatprep.subr.bf16.mxu0 0
        %740 = vmatpush1.bf16.msra.mxu0 0
        %741 = vmatprep.subr.bf16.mxu0 0
        %742 = vmatpush1.bf16.msra.mxu0 0
        %743 = vmatprep.subr.bf16.mxu0 0
        %744 = vmatpush1.bf16.msra.mxu0 0
        %745 = vmatprep.subr.bf16.mxu0 0
        %746 = vmatpush1.bf16.msra.mxu0 0
        %747 = vmatprep.subr.bf16.mxu0 0
        %748 = vmatpush1.bf16.msra.mxu0 0
        %749 = vmatprep.subr.bf16.mxu0 0
        %750 = vmatpush1.bf16.msra.mxu0 0
        %751 = vmatprep.subr.bf16.mxu0 %v726
        %752 = vmatpush1.bf16.msra.mxu0 %v725
        %753 = vmatprep.subr.bf16.mxu0 0
        %754 = vmatpush2.bf16.msra.mxu0 0
        %755 = vmatprep.subr.bf16.mxu0 0
        %756 = vmatpush2.bf16.msra.mxu0 0
        %757 = vmatprep.subr.bf16.mxu0 0
        %758 = vmatpush2.bf16.msra.mxu0 0
        %759 = vmatprep.subr.bf16.mxu0 0
        %760 = vmatpush2.bf16.msra.mxu0 0
        %761 = vmatprep.subr.bf16.mxu0 0
        %762 = vmatpush2.bf16.msra.mxu0 0
        %763 = vmatprep.subr.bf16.mxu0 0
        %764 = vmatpush2.bf16.msra.mxu0 0
        %765 = vmatprep.subr.bf16.mxu0 0
        %766 = vmatpush2.bf16.msra.mxu0 0
        %767 = vmatprep.subr.bf16.mxu0 0
        %768 = vmatpush2.bf16.msra.mxu0 0
        %769 = vmatprep.mubr.bf16.mxu0 0
        %770 = vmatmul.mubr.bf16.gmra.mxu0 %v735
        %v771 = vpop.f32.mrf.mxu0
        %v772 = vadd.f32 %v691, %v771
        %v773 = vpop.f32.mrf.mxu0
        %v774 = vadd.f32 %v695, %v773
        %v775 = vpop.f32.mrf.mxu0
        %v776 = vadd.f32 %v691, %v775
        %v777 = vpop.f32.mrf.mxu0
        %v778 = vadd.f32 %v695, %v777
        %779 = vdwg.mxu0
        %780 = vmatprep.subr.bf16.mxu0 0
        %781 = vmatpush1.bf16.msra.mxu0 0
        %782 = vmatprep.subr.bf16.mxu0 0
        %783 = vmatpush1.bf16.msra.mxu0 0
        %784 = vmatprep.subr.bf16.mxu0 0
        %785 = vmatpush1.bf16.msra.mxu0 0
        %786 = vmatprep.subr.bf16.mxu0 0
        %787 = vmatpush1.bf16.msra.mxu0 0
        %788 = vmatprep.subr.bf16.mxu0 0
        %789 = vmatpush1.bf16.msra.mxu0 0
        %790 = vmatprep.subr.bf16.mxu0 0
        %791 = vmatpush1.bf16.msra.mxu0 0
        %792 = vmatprep.subr.bf16.mxu0 0
        %793 = vmatpush1.bf16.msra.mxu0 0
        %794 = vmatprep.subr.bf16.mxu0 %v728
        %795 = vmatpush1.bf16.msra.mxu0 %v727
        %796 = vmatprep.subr.bf16.mxu0 0
        %797 = vmatpush2.bf16.msra.mxu0 0
        %798 = vmatprep.subr.bf16.mxu0 0
        %799 = vmatpush2.bf16.msra.mxu0 0
        %800 = vmatprep.subr.bf16.mxu0 0
        %801 = vmatpush2.bf16.msra.mxu0 0
        %802 = vmatprep.subr.bf16.mxu0 0
        %803 = vmatpush2.bf16.msra.mxu0 0
        %804 = vmatprep.subr.bf16.mxu0 0
        %805 = vmatpush2.bf16.msra.mxu0 0
        %806 = vmatprep.subr.bf16.mxu0 0
        %807 = vmatpush2.bf16.msra.mxu0 0
        %808 = vmatprep.subr.bf16.mxu0 0
        %809 = vmatpush2.bf16.msra.mxu0 0
        %810 = vmatprep.subr.bf16.mxu0 0
        %811 = vmatpush2.bf16.msra.mxu0 0
        %812 = vmatprep.mubr.bf16.mxu0 0
        %813 = vmatmul.mubr.bf16.gmra.mxu0 %v735
        %v814 = vpop.f32.mrf.mxu0
        %v815 = vadd.f32 %v699, %v814
        %v816 = vpop.f32.mrf.mxu0
        %v817 = vadd.f32 %v703, %v816
        %v818 = vpop.f32.mrf.mxu0
        %v819 = vadd.f32 %v699, %v818
        %v820 = vpop.f32.mrf.mxu0
        %v821 = vadd.f32 %v703, %v820
        %822 = vdwg.mxu0
        %v823 = vmax.f32 %v772, 0.0
        %v824 = vmax.f32 %v774, 0.0
        %v825 = vmax.f32 %v815, 0.0
        %v826 = vmax.f32 %v817, 0.0
        %v827 = vmax.f32 %v776, 0.0
        %v828 = vmax.f32 %v778, 0.0
        %v829 = vmax.f32 %v819, 0.0
        %v830 = vmax.f32 %v821, 0.0
        %v831 = vld [vmem:[%s3] sm:$0xf]
        %v832 = vld [vmem:[%s4] sm:$0xf]
        %v833 = vld [vmem:[#allocation5] sm:$0xf]
        %v834 = vld [vmem:[#allocation5 + $0x4] sm:$0xf]
        %v835 = vld [vmem:[#allocation5 + $0x8] sm:$0xf]
        %v836 = vld [vmem:[#allocation5 + $0xc] sm:$0xf]
        %v837 = vld [vmem:[#allocation5 + $0x10] sm:$0xf]
        %v838 = vld [vmem:[#allocation5 + $0x14] sm:$0xf]
        %v839 = vld [vmem:[#allocation5 + $0x18] sm:$0xf]
        %v840 = vld [vmem:[#allocation5 + $0x1c] sm:$0xf]
        %v841 = vld [vmem:[#allocation5 + $0x20] sm:$0xf]
        %v842 = vld [vmem:[#allocation5 + $0x24] sm:$0xf]
        %v843 = vld [vmem:[#allocation5 + $0x28] sm:$0xf]
        %v844 = vld [vmem:[#allocation5 + $0x2c] sm:$0xf]
        %v845 = vld [vmem:[#allocation5 + $0x30] sm:$0xf]
        %v846 = vld [vmem:[#allocation5 + $0x34] sm:$0xf]
        %v847 = vld [vmem:[#allocation5 + $0x38] sm:$0xf]
        %v848 = vld [vmem:[#allocation5 + $0x3c] sm:$0xf]
        %v849 = vld [vmem:[#allocation5 + $0x40] sm:$0xf]
        %v850 = vld [vmem:[#allocation5 + $0x44] sm:$0xf]
        %v851 = vld [vmem:[#allocation5 + $0x48] sm:$0xf]
        %v852 = vld [vmem:[#allocation5 + $0x4c] sm:$0xf]
        %v853 = vld [vmem:[#allocation5 + $0x50] sm:$0xf]
        %v854 = vld [vmem:[#allocation5 + $0x54] sm:$0xf]
        %v855 = vld [vmem:[#allocation5 + $0x58] sm:$0xf]
        %v856 = vld [vmem:[#allocation5 + $0x5c] sm:$0xf]
        %v857 = vld [vmem:[#allocation5 + $0x60] sm:$0xf]
        %v858 = vld [vmem:[#allocation5 + $0x64] sm:$0xf]
        %v859 = vld [vmem:[#allocation5 + $0x68] sm:$0xf]
        %v860 = vld [vmem:[#allocation5 + $0x6c] sm:$0xf]
        %v861 = vld [vmem:[#allocation5 + $0x70] sm:$0xf]
        %v862 = vld [vmem:[#allocation5 + $0x74] sm:$0xf]
        %v863 = vld [vmem:[#allocation5 + $0x78] sm:$0xf]
        %v864 = vld [vmem:[#allocation5 + $0x7c] sm:$0xf]
        %v865 = vld [vmem:[#allocation5 + $0x80] sm:$0xf]
        %v866 = vld [vmem:[#allocation5 + $0x84] sm:$0xf]
        %v867 = vld [vmem:[#allocation5 + $0x88] sm:$0xf]
        %v868 = vld [vmem:[#allocation5 + $0x8c] sm:$0xf]
        %v869 = vld [vmem:[#allocation5 + $0x90] sm:$0xf]
        %v870 = vld [vmem:[#allocation5 + $0x94] sm:$0xf]
        %v871 = vld [vmem:[#allocation5 + $0x98] sm:$0xf]
        %v872 = vld [vmem:[#allocation5 + $0x9c] sm:$0xf]
        %v873 = vld [vmem:[#allocation5 + $0xa0] sm:$0xf]
        %v874 = vld [vmem:[#allocation5 + $0xa4] sm:$0xf]
        %v875 = vld [vmem:[#allocation5 + $0xa8] sm:$0xf]
        %v876 = vld [vmem:[#allocation5 + $0xac] sm:$0xf]
        %v877 = vld [vmem:[#allocation5 + $0xb0] sm:$0xf]
        %v878 = vld [vmem:[#allocation5 + $0xb4] sm:$0xf]
        %v879 = vld [vmem:[#allocation5 + $0xb8] sm:$0xf]
        %v880 = vld [vmem:[#allocation5 + $0xbc] sm:$0xf]
        %v881 = vld [vmem:[#allocation5 + $0xc0] sm:$0xf]
        %v882 = vld [vmem:[#allocation5 + $0xc4] sm:$0xf]
        %v883 = vld [vmem:[#allocation5 + $0xc8] sm:$0xf]
        %v884 = vld [vmem:[#allocation5 + $0xcc] sm:$0xf]
        %v885 = vld [vmem:[#allocation5 + $0xd0] sm:$0xf]
        %v886 = vld [vmem:[#allocation5 + $0xd4] sm:$0xf]
        %v887 = vld [vmem:[#allocation5 + $0xd8] sm:$0xf]
        %v888 = vld [vmem:[#allocation5 + $0xdc] sm:$0xf]
        %v889 = vld [vmem:[#allocation5 + $0xe0] sm:$0xf]
        %v890 = vld [vmem:[#allocation5 + $0xe4] sm:$0xf]
        %v891 = vld [vmem:[#allocation5 + $0xe8] sm:$0xf]
        %v892 = vld [vmem:[#allocation5 + $0xec] sm:$0xf]
        %v893 = vld [vmem:[#allocation5 + $0xf0] sm:$0xf]
        %v894 = vld [vmem:[#allocation5 + $0xf4] sm:$0xf]
        %v895 = vld [vmem:[#allocation5 + $0xf8] sm:$0xf]
        %v896 = vld [vmem:[#allocation5 + $0xfc] sm:$0xf]
        %v897 = vpack.c.bf16 %v827, %v823
        %v898 = vpack.c.bf16 %v828, %v824
        %v899 = vpack.c.bf16 %v829, %v825
        %v900 = vpack.c.bf16 %v830, %v826
        %v901 = vmul.f32 %v823, %v823
        %v902 = vmul.f32 %v824, %v824
        %v903 = vmul.f32 %v825, %v825
        %v904 = vmul.f32 %v826, %v826
        %v905 = vmul.f32 %v827, %v827
        %v906 = vmul.f32 %v828, %v828
        %v907 = vmul.f32 %v829, %v829
        %v908 = vmul.f32 %v830, %v830
        %v909 = vpack.c.bf16 %v905, %v901
        %v910 = vpack.c.bf16 %v906, %v902
        %v911 = vpack.c.bf16 %v907, %v903
        %v912 = vpack.c.bf16 %v908, %v904
        %v977 = vunpack.c.l.b16 %v833
        %v978 = vunpack.c.l.b16 %v834
        %v979 = vunpack.c.l.b16 %v835
        %v980 = vunpack.c.l.b16 %v836
        %v981 = vunpack.c.l.b16 %v837
        %v982 = vunpack.c.l.b16 %v838
        %v983 = vunpack.c.l.b16 %v839
        %v984 = vunpack.c.l.b16 %v840
        %v985 = vunpack.c.l.b16 %v841
        %v986 = vunpack.c.l.b16 %v842
        %v987 = vunpack.c.l.b16 %v843
        %v988 = vunpack.c.l.b16 %v844
        %v989 = vunpack.c.l.b16 %v845
        %v990 = vunpack.c.l.b16 %v846
        %v991 = vunpack.c.l.b16 %v847
        %v992 = vunpack.c.l.b16 %v848
        %v993 = vunpack.c.l.b16 %v849
        %v994 = vunpack.c.l.b16 %v850
        %v995 = vunpack.c.l.b16 %v851
        %v996 = vunpack.c.l.b16 %v852
        %v997 = vunpack.c.l.b16 %v853
        %v998 = vunpack.c.l.b16 %v854
        %v999 = vunpack.c.l.b16 %v855
        %v1000 = vunpack.c.l.b16 %v856
        %v1001 = vunpack.c.l.b16 %v857
        %v1002 = vunpack.c.l.b16 %v858
        %v1003 = vunpack.c.l.b16 %v859
        %v1004 = vunpack.c.l.b16 %v860
        %v1005 = vunpack.c.l.b16 %v861
        %v1006 = vunpack.c.l.b16 %v862
        %v1007 = vunpack.c.l.b16 %v863
        %v1008 = vunpack.c.l.b16 %v864
        %v1009 = vunpack.c.l.b16 %v865
        %v1010 = vunpack.c.l.b16 %v866
        %v1011 = vunpack.c.l.b16 %v867
        %v1012 = vunpack.c.l.b16 %v868
        %v1013 = vunpack.c.l.b16 %v869
        %v1014 = vunpack.c.l.b16 %v870
        %v1015 = vunpack.c.l.b16 %v871
        %v1016 = vunpack.c.l.b16 %v872
        %v1017 = vunpack.c.l.b16 %v873
        %v1018 = vunpack.c.l.b16 %v874
        %v1019 = vunpack.c.l.b16 %v875
        %v1020 = vunpack.c.l.b16 %v876
        %v1021 = vunpack.c.l.b16 %v877
        %v1022 = vunpack.c.l.b16 %v878
        %v1023 = vunpack.c.l.b16 %v879
        %v1024 = vunpack.c.l.b16 %v880
        %v1025 = vunpack.c.l.b16 %v881
        %v1026 = vunpack.c.l.b16 %v882
        %v1027 = vunpack.c.l.b16 %v883
        %v1028 = vunpack.c.l.b16 %v884
        %v1029 = vunpack.c.l.b16 %v885
        %v1030 = vunpack.c.l.b16 %v886
        %v1031 = vunpack.c.l.b16 %v887
        %v1032 = vunpack.c.l.b16 %v888
        %v1033 = vunpack.c.l.b16 %v889
        %v1034 = vunpack.c.l.b16 %v890
        %v1035 = vunpack.c.l.b16 %v891
        %v1036 = vunpack.c.l.b16 %v892
        %v1037 = vunpack.c.l.b16 %v893
        %v1038 = vunpack.c.l.b16 %v894
        %v1039 = vunpack.c.l.b16 %v895
        %v1040 = vunpack.c.l.b16 %v896
        %v1041 = vpack.c.b16 %v978, %v977
        %v1042 = vpack.c.b16 %v980, %v979
        %v1043 = vpack.c.b16 %v982, %v981
        %v1044 = vpack.c.b16 %v984, %v983
        %v1045 = vpack.c.b16 %v986, %v985
        %v1046 = vpack.c.b16 %v988, %v987
        %v1047 = vpack.c.b16 %v990, %v989
        %v1048 = vpack.c.b16 %v992, %v991
        %v1049 = vpack.c.b16 %v994, %v993
        %v1050 = vpack.c.b16 %v996, %v995
        %v1051 = vpack.c.b16 %v998, %v997
        %v1052 = vpack.c.b16 %v1000, %v999
        %v1053 = vpack.c.b16 %v1002, %v1001
        %v1054 = vpack.c.b16 %v1004, %v1003
        %v1055 = vpack.c.b16 %v1006, %v1005
        %v1056 = vpack.c.b16 %v1008, %v1007
        %v1057 = vpack.c.b16 %v1010, %v1009
        %v1058 = vpack.c.b16 %v1012, %v1011
        %v1059 = vpack.c.b16 %v1014, %v1013
        %v1060 = vpack.c.b16 %v1016, %v1015
        %v1061 = vpack.c.b16 %v1018, %v1017
        %v1062 = vpack.c.b16 %v1020, %v1019
        %v1063 = vpack.c.b16 %v1022, %v1021
        %v1064 = vpack.c.b16 %v1024, %v1023
        %v1065 = vpack.c.b16 %v1026, %v1025
        %v1066 = vpack.c.b16 %v1028, %v1027
        %v1067 = vpack.c.b16 %v1030, %v1029
        %v1068 = vpack.c.b16 %v1032, %v1031
        %v1069 = vpack.c.b16 %v1034, %v1033
        %v1070 = vpack.c.b16 %v1036, %v1035
        %v1071 = vpack.c.b16 %v1038, %v1037
        %v1072 = vpack.c.b16 %v1040, %v1039
        %1105 = vmatprep.subr.bf16.mxu0 0
        %1106 = vmatpush1.bf16.msra.mxu0 %v1048
        %1107 = vmatprep.subr.bf16.mxu0 0
        %1108 = vmatpush1.bf16.msra.mxu0 %v1047
        %1109 = vmatprep.subr.bf16.mxu0 0
        %1110 = vmatpush1.bf16.msra.mxu0 %v1046
        %1111 = vmatprep.subr.bf16.mxu0 0
        %1112 = vmatpush1.bf16.msra.mxu0 %v1045
        %1113 = vmatprep.subr.bf16.mxu0 0
        %1114 = vmatpush1.bf16.msra.mxu0 %v1044
        %1115 = vmatprep.subr.bf16.mxu0 0
        %1116 = vmatpush1.bf16.msra.mxu0 %v1043
        %1117 = vmatprep.subr.bf16.mxu0 0
        %1118 = vmatpush1.bf16.msra.mxu0 %v1042
        %1119 = vmatprep.subr.bf16.mxu0 0
        %1120 = vmatpush1.bf16.msra.mxu0 %v1041
        %1121 = vmatprep.subr.bf16.mxu0 0
        %1122 = vmatpush2.bf16.msra.mxu0 %v1056
        %1123 = vmatprep.subr.bf16.mxu0 0
        %1124 = vmatpush2.bf16.msra.mxu0 %v1055
        %1125 = vmatprep.subr.bf16.mxu0 0
        %1126 = vmatpush2.bf16.msra.mxu0 %v1054
        %1127 = vmatprep.subr.bf16.mxu0 0
        %1128 = vmatpush2.bf16.msra.mxu0 %v1053
        %1129 = vmatprep.subr.bf16.mxu0 0
        %1130 = vmatpush2.bf16.msra.mxu0 %v1052
        %1131 = vmatprep.subr.bf16.mxu0 0
        %1132 = vmatpush2.bf16.msra.mxu0 %v1051
        %1133 = vmatprep.subr.bf16.mxu0 0
        %1134 = vmatpush2.bf16.msra.mxu0 %v1050
        %1135 = vmatprep.subr.bf16.mxu0 0
        %1136 = vmatpush2.bf16.msra.mxu0 %v1049
        %1137 = vmatprep.mubr.bf16.mxu0 %v898
        %1138 = vmatmul.mubr.bf16.gmra.mxu0 %v897
        %v1139 = vpop.f32.mrf.mxu0
        %v1140 = vadd.f32 0.0, %v1139
        %v1141 = vpop.f32.mrf.mxu0
        %v1142 = vpop.f32.mrf.mxu0
        %v1143 = vadd.f32 0.0, %v1142
        %v1144 = vpop.f32.mrf.mxu0
        %1145 = vdwg.mxu0
        %1146 = vmatprep.subr.bf16.mxu0 0
        %1147 = vmatpush1.bf16.msra.mxu0 %v1064
        %1148 = vmatprep.subr.bf16.mxu0 0
        %1149 = vmatpush1.bf16.msra.mxu0 %v1063
        %1150 = vmatprep.subr.bf16.mxu0 0
        %1151 = vmatpush1.bf16.msra.mxu0 %v1062
        %1152 = vmatprep.subr.bf16.mxu0 0
        %1153 = vmatpush1.bf16.msra.mxu0 %v1061
        %1154 = vmatprep.subr.bf16.mxu0 0
        %1155 = vmatpush1.bf16.msra.mxu0 %v1060
        %1156 = vmatprep.subr.bf16.mxu0 0
        %1157 = vmatpush1.bf16.msra.mxu0 %v1059
        %1158 = vmatprep.subr.bf16.mxu0 0
        %1159 = vmatpush1.bf16.msra.mxu0 %v1058
        %1160 = vmatprep.subr.bf16.mxu0 0
        %1161 = vmatpush1.bf16.msra.mxu0 %v1057
        %1162 = vmatprep.subr.bf16.mxu0 0
        %1163 = vmatpush2.bf16.msra.mxu0 %v1072
        %1164 = vmatprep.subr.bf16.mxu0 0
        %1165 = vmatpush2.bf16.msra.mxu0 %v1071
        %1166 = vmatprep.subr.bf16.mxu0 0
        %1167 = vmatpush2.bf16.msra.mxu0 %v1070
        %1168 = vmatprep.subr.bf16.mxu0 0
        %1169 = vmatpush2.bf16.msra.mxu0 %v1069
        %1170 = vmatprep.subr.bf16.mxu0 0
        %1171 = vmatpush2.bf16.msra.mxu0 %v1068
        %1172 = vmatprep.subr.bf16.mxu0 0
        %1173 = vmatpush2.bf16.msra.mxu0 %v1067
        %1174 = vmatprep.subr.bf16.mxu0 0
        %1175 = vmatpush2.bf16.msra.mxu0 %v1066
        %1176 = vmatprep.subr.bf16.mxu0 0
        %1177 = vmatpush2.bf16.msra.mxu0 %v1065
        %1178 = vmatprep.mubr.bf16.mxu0 %v900
        %1179 = vmatmul.mubr.bf16.gmra.mxu0 %v899
        %v1180 = vpop.f32.mrf.mxu0
        %v1181 = vadd.f32 %v1140, %v1180
        %v1182 = vpop.f32.mrf.mxu0
        %v1183 = vpop.f32.mrf.mxu0
        %v1184 = vadd.f32 %v1143, %v1183
        %v1185 = vpop.f32.mrf.mxu0
        %1186 = vdwg.mxu0
        %1187 = vmatprep.subr.bf16.mxu0 0
        %1188 = vmatpush1.bf16.msra.mxu0 %v1048
        %1189 = vmatprep.subr.bf16.mxu0 0
        %1190 = vmatpush1.bf16.msra.mxu0 %v1047
        %1191 = vmatprep.subr.bf16.mxu0 0
        %1192 = vmatpush1.bf16.msra.mxu0 %v1046
        %1193 = vmatprep.subr.bf16.mxu0 0
        %1194 = vmatpush1.bf16.msra.mxu0 %v1045
        %1195 = vmatprep.subr.bf16.mxu0 0
        %1196 = vmatpush1.bf16.msra.mxu0 %v1044
        %1197 = vmatprep.subr.bf16.mxu0 0
        %1198 = vmatpush1.bf16.msra.mxu0 %v1043
        %1199 = vmatprep.subr.bf16.mxu0 0
        %1200 = vmatpush1.bf16.msra.mxu0 %v1042
        %1201 = vmatprep.subr.bf16.mxu0 0
        %1202 = vmatpush1.bf16.msra.mxu0 %v1041
        %1203 = vmatprep.subr.bf16.mxu0 0
        %1204 = vmatpush2.bf16.msra.mxu0 %v1056
        %1205 = vmatprep.subr.bf16.mxu0 0
        %1206 = vmatpush2.bf16.msra.mxu0 %v1055
        %1207 = vmatprep.subr.bf16.mxu0 0
        %1208 = vmatpush2.bf16.msra.mxu0 %v1054
        %1209 = vmatprep.subr.bf16.mxu0 0
        %1210 = vmatpush2.bf16.msra.mxu0 %v1053
        %1211 = vmatprep.subr.bf16.mxu0 0
        %1212 = vmatpush2.bf16.msra.mxu0 %v1052
        %1213 = vmatprep.subr.bf16.mxu0 0
        %1214 = vmatpush2.bf16.msra.mxu0 %v1051
        %1215 = vmatprep.subr.bf16.mxu0 0
        %1216 = vmatpush2.bf16.msra.mxu0 %v1050
        %1217 = vmatprep.subr.bf16.mxu0 0
        %1218 = vmatpush2.bf16.msra.mxu0 %v1049
        %1219 = vmatprep.mubr.bf16.mxu0 %v910
        %1220 = vmatmul.mubr.bf16.gmra.mxu0 %v909
        %v1221 = vpop.f32.mrf.mxu0
        %v1222 = vadd.f32 0.0, %v1221
        %v1223 = vpop.f32.mrf.mxu0
        %v1224 = vpop.f32.mrf.mxu0
        %v1225 = vadd.f32 0.0, %v1224
        %v1226 = vpop.f32.mrf.mxu0
        %1227 = vdwg.mxu0
        %1228 = vmatprep.subr.bf16.mxu0 0
        %1229 = vmatpush1.bf16.msra.mxu0 %v1064
        %1230 = vmatprep.subr.bf16.mxu0 0
        %1231 = vmatpush1.bf16.msra.mxu0 %v1063
        %1232 = vmatprep.subr.bf16.mxu0 0
        %1233 = vmatpush1.bf16.msra.mxu0 %v1062
        %1234 = vmatprep.subr.bf16.mxu0 0
        %1235 = vmatpush1.bf16.msra.mxu0 %v1061
        %1236 = vmatprep.subr.bf16.mxu0 0
        %1237 = vmatpush1.bf16.msra.mxu0 %v1060
        %1238 = vmatprep.subr.bf16.mxu0 0
        %1239 = vmatpush1.bf16.msra.mxu0 %v1059
        %1240 = vmatprep.subr.bf16.mxu0 0
        %1241 = vmatpush1.bf16.msra.mxu0 %v1058
        %1242 = vmatprep.subr.bf16.mxu0 0
        %1243 = vmatpush1.bf16.msra.mxu0 %v1057
        %1244 = vmatprep.subr.bf16.mxu0 0
        %1245 = vmatpush2.bf16.msra.mxu0 %v1072
        %1246 = vmatprep.subr.bf16.mxu0 0
        %1247 = vmatpush2.bf16.msra.mxu0 %v1071
        %1248 = vmatprep.subr.bf16.mxu0 0
        %1249 = vmatpush2.bf16.msra.mxu0 %v1070
        %1250 = vmatprep.subr.bf16.mxu0 0
        %1251 = vmatpush2.bf16.msra.mxu0 %v1069
        %1252 = vmatprep.subr.bf16.mxu0 0
        %1253 = vmatpush2.bf16.msra.mxu0 %v1068
        %1254 = vmatprep.subr.bf16.mxu0 0
        %1255 = vmatpush2.bf16.msra.mxu0 %v1067
        %1256 = vmatprep.subr.bf16.mxu0 0
        %1257 = vmatpush2.bf16.msra.mxu0 %v1066
        %1258 = vmatprep.subr.bf16.mxu0 0
        %1259 = vmatpush2.bf16.msra.mxu0 %v1065
        %1260 = vmatprep.mubr.bf16.mxu0 %v912
        %1261 = vmatmul.mubr.bf16.gmra.mxu0 %v911
        %v1262 = vpop.f32.mrf.mxu0
        %v1263 = vadd.f32 %v1222, %v1262
        %v1264 = vpop.f32.mrf.mxu0
        %v1265 = vpop.f32.mrf.mxu0
        %v1266 = vadd.f32 %v1225, %v1265
        %v1267 = vpop.f32.mrf.mxu0
        %1268 = vdwg.mxu0
        %v1269 = vmul.f32 %v1181, 0.002
        %v1270 = vmul.f32 %v1184, 0.002
        %v1271 = vmul.f32 %v1263, 0.002
        %v1272 = vmul.f32 %v1266, 0.002
        %v1273 = vmul.f32 %v1269, %v1269
        %v1274 = vmul.f32 %v1270, %v1270
        %v1275 = vsub.f32 %v1271, %v1273
        %v1276 = vsub.f32 %v1272, %v1274
        %v1277 = vmax.f32 %v1275, 0.0
        %v1278 = vmax.f32 %v1276, 0.0
        %1280 = vset.pattern.permute.xlu0 0
        %1281 = vperm.xlu0 %1280, %v1269
        %v1282 = vpop.permute.xlu0 %1281
        %1285 = vset.pattern.permute.xlu0 0
        %1286 = vperm.xlu0 %1285, %v1270
        %v1287 = vpop.permute.xlu0 %1286
        %v1289 = vsub.f32 %v823, %v1282
        %v1290 = vsub.f32 %v824, %v1282
        %v1291 = vsub.f32 %v825, %v1282
        %v1292 = vsub.f32 %v826, %v1282
        %v1293 = vsub.f32 %v827, %v1287
        %v1294 = vsub.f32 %v828, %v1287
        %v1295 = vsub.f32 %v829, %v1287
        %v1296 = vsub.f32 %v830, %v1287
        %v1297 = vadd.f32 %v1277, 1e-05
        %v1298 = vadd.f32 %v1278, 1e-05
        %v1299 = vrsqrt.pop %v1297
        %v1300 = vrsqrt.pop %v1298
        %1302 = vset.pattern.permute.xlu0 0
        %1303 = vperm.xlu0 %1302, %v1299
        %v1304 = vpop.permute.xlu0 %1303
        %1307 = vset.pattern.permute.xlu0 0
        %1308 = vperm.xlu0 %1307, %v1300
        %v1309 = vpop.permute.xlu0 %1308
        %v1311 = vmul.f32 %v1289, %v1304
        %v1312 = vmul.f32 %v1290, %v1304
        %v1313 = vmul.f32 %v1291, %v1304
        %v1314 = vmul.f32 %v1292, %v1304
        %v1315 = vmul.f32 %v1293, %v1309
        %v1316 = vmul.f32 %v1294, %v1309
        %v1317 = vmul.f32 %v1295, %v1309
        %v1318 = vmul.f32 %v1296, %v1309
        %v1320 = vlaneseq
        %v1321 = vshrl.u32 %v1320, 7
        %v1322 = vsub.s32 0, %v1321
        %v1323 = vrot.slane %v831, %v1322
        %v1324 = vlaneseq
        %v1325 = vshrl.u32 %v1324, 7
        %v1326 = vsub.s32 1, %v1325
        %v1327 = vrot.slane %v831, %v1326
        %v1328 = vlaneseq
        %v1329 = vshrl.u32 %v1328, 7
        %v1330 = vsub.s32 2, %v1329
        %v1331 = vrot.slane %v831, %v1330
        %v1332 = vlaneseq
        %v1333 = vshrl.u32 %v1332, 7
        %v1334 = vsub.s32 3, %v1333
        %v1335 = vrot.slane %v831, %v1334
        %v1340 = vmul.f32 %v1311, %v1323
        %v1341 = vmul.f32 %v1312, %v1327
        %v1342 = vmul.f32 %v1313, %v1331
        %v1343 = vmul.f32 %v1314, %v1335
        %v1344 = vmul.f32 %v1315, %v1323
        %v1345 = vmul.f32 %v1316, %v1327
        %v1346 = vmul.f32 %v1317, %v1331
        %v1347 = vmul.f32 %v1318, %v1335
        %v1349 = vlaneseq
        %v1350 = vshrl.u32 %v1349, 7
        %v1351 = vsub.s32 0, %v1350
        %v1352 = vrot.slane %v832, %v1351
        %v1353 = vlaneseq
        %v1354 = vshrl.u32 %v1353, 7
        %v1355 = vsub.s32 1, %v1354
        %v1356 = vrot.slane %v832, %v1355
        %v1357 = vlaneseq
        %v1358 = vshrl.u32 %v1357, 7
        %v1359 = vsub.s32 2, %v1358
        %v1360 = vrot.slane %v832, %v1359
        %v1361 = vlaneseq
        %v1362 = vshrl.u32 %v1361, 7
        %v1363 = vsub.s32 3, %v1362
        %v1364 = vrot.slane %v832, %v1363
        %v1369 = vadd.f32 %v1340, %v1352
        %v1370 = vadd.f32 %v1341, %v1356
        %v1371 = vadd.f32 %v1342, %v1360
        %v1372 = vadd.f32 %v1343, %v1364
        %v1373 = vadd.f32 %v1344, %v1352
        %v1374 = vadd.f32 %v1345, %v1356
        %v1375 = vadd.f32 %v1346, %v1360
        %v1376 = vadd.f32 %v1347, %v1364
        %v1377 = vpack.c.bf16 %v1373, %v1369
        %v1378 = vpack.c.bf16 %v1374, %v1370
        %v1379 = vpack.c.bf16 %v1375, %v1371
        %v1380 = vpack.c.bf16 %v1376, %v1372
        %v1381 = vld [vmem:[#allocation7] sm:$0xff]
        %v1382 = vld [vmem:[#allocation7 + $0x8] sm:$0xff]
        %v1383 = vld [vmem:[#allocation7 + $0x10] sm:$0xff]
        %v1384 = vld [vmem:[#allocation7 + $0x18] sm:$0xff]
        %v1385 = vld [vmem:[#allocation7 + $0x20] sm:$0xff]
        %v1386 = vld [vmem:[#allocation7 + $0x28] sm:$0xff]
        %v1387 = vld [vmem:[#allocation7 + $0x30] sm:$0xff]
        %v1388 = vld [vmem:[#allocation7 + $0x38] sm:$0xff]
        %v1389 = vld [vmem:[#allocation7 + $0x40] sm:$0xff]
        %v1390 = vld [vmem:[#allocation7 + $0x48] sm:$0xff]
        %v1391 = vld [vmem:[#allocation7 + $0x50] sm:$0xff]
        %v1392 = vld [vmem:[#allocation7 + $0x58] sm:$0xff]
        %v1393 = vld [vmem:[#allocation7 + $0x60] sm:$0xff]
        %v1394 = vld [vmem:[#allocation7 + $0x68] sm:$0xff]
        %v1395 = vld [vmem:[#allocation7 + $0x70] sm:$0xff]
        %v1396 = vld [vmem:[#allocation7 + $0x78] sm:$0xff]
        %v1397 = vld [vmem:[#allocation7 + $0x80] sm:$0xff]
        %v1398 = vld [vmem:[#allocation7 + $0x88] sm:$0xff]
        %v1399 = vld [vmem:[#allocation7 + $0x90] sm:$0xff]
        %v1400 = vld [vmem:[#allocation7 + $0x98] sm:$0xff]
        %v1401 = vld [vmem:[#allocation7 + $0xa0] sm:$0xff]
        %v1402 = vld [vmem:[#allocation7 + $0xa8] sm:$0xff]
        %v1403 = vld [vmem:[#allocation7 + $0xb0] sm:$0xff]
        %v1404 = vld [vmem:[#allocation7 + $0xb8] sm:$0xff]
        %v1405 = vld [vmem:[#allocation7 + $0xc0] sm:$0xff]
        %v1406 = vld [vmem:[#allocation7 + $0xc8] sm:$0xff]
        %v1407 = vld [vmem:[#allocation7 + $0xd0] sm:$0xff]
        %v1408 = vld [vmem:[#allocation7 + $0xd8] sm:$0xff]
        %v1409 = vld [vmem:[#allocation7 + $0xe0] sm:$0xff]
        %v1410 = vld [vmem:[#allocation7 + $0xe8] sm:$0xff]
        %v1411 = vld [vmem:[#allocation7 + $0xf0] sm:$0xff]
        %v1412 = vld [vmem:[#allocation7 + $0xf8] sm:$0xff]
        %v1413 = vld [vmem:[#allocation7 + $0x100] sm:$0xff]
        %v1414 = vld [vmem:[#allocation7 + $0x108] sm:$0xff]
        %v1415 = vld [vmem:[#allocation7 + $0x110] sm:$0xff]
        %v1416 = vld [vmem:[#allocation7 + $0x118] sm:$0xff]
        %v1417 = vld [vmem:[#allocation7 + $0x120] sm:$0xff]
        %v1418 = vld [vmem:[#allocation7 + $0x128] sm:$0xff]
        %v1419 = vld [vmem:[#allocation7 + $0x130] sm:$0xff]
        %v1420 = vld [vmem:[#allocation7 + $0x138] sm:$0xff]
        %v1421 = vld [vmem:[#allocation7 + $0x140] sm:$0xff]
        %v1422 = vld [vmem:[#allocation7 + $0x148] sm:$0xff]
        %v1423 = vld [vmem:[#allocation7 + $0x150] sm:$0xff]
        %v1424 = vld [vmem:[#allocation7 + $0x158] sm:$0xff]
        %v1425 = vld [vmem:[#allocation7 + $0x160] sm:$0xff]
        %v1426 = vld [vmem:[#allocation7 + $0x168] sm:$0xff]
        %v1427 = vld [vmem:[#allocation7 + $0x170] sm:$0xff]
        %v1428 = vld [vmem:[#allocation7 + $0x178] sm:$0xff]
        %v1429 = vld [vmem:[#allocation7 + $0x180] sm:$0xff]
        %v1430 = vld [vmem:[#allocation7 + $0x188] sm:$0xff]
        %v1431 = vld [vmem:[#allocation7 + $0x190] sm:$0xff]
        %v1432 = vld [vmem:[#allocation7 + $0x198] sm:$0xff]
        %v1433 = vld [vmem:[#allocation7 + $0x1a0] sm:$0xff]
        %v1434 = vld [vmem:[#allocation7 + $0x1a8] sm:$0xff]
        %v1435 = vld [vmem:[#allocation7 + $0x1b0] sm:$0xff]
        %v1436 = vld [vmem:[#allocation7 + $0x1b8] sm:$0xff]
        %v1437 = vld [vmem:[#allocation7 + $0x1c0] sm:$0xff]
        %v1438 = vld [vmem:[#allocation7 + $0x1c8] sm:$0xff]
        %v1439 = vld [vmem:[#allocation7 + $0x1d0] sm:$0xff]
        %v1440 = vld [vmem:[#allocation7 + $0x1d8] sm:$0xff]
        %v1441 = vld [vmem:[#allocation7 + $0x1e0] sm:$0xff]
        %v1442 = vld [vmem:[#allocation7 + $0x1e8] sm:$0xff]
        %v1443 = vld [vmem:[#allocation7 + $0x1f0] sm:$0xff]
        %v1444 = vld [vmem:[#allocation7 + $0x1f8] sm:$0xff]
        %v1445 = vld [vmem:[#allocation7 + $0x200] sm:$0xff]
        %v1446 = vld [vmem:[#allocation7 + $0x208] sm:$0xff]
        %v1447 = vld [vmem:[#allocation7 + $0x210] sm:$0xff]
        %v1448 = vld [vmem:[#allocation7 + $0x218] sm:$0xff]
        %v1449 = vld [vmem:[#allocation7 + $0x220] sm:$0xff]
        %v1450 = vld [vmem:[#allocation7 + $0x228] sm:$0xff]
        %v1451 = vld [vmem:[#allocation7 + $0x230] sm:$0xff]
        %v1452 = vld [vmem:[#allocation7 + $0x238] sm:$0xff]
        %v1453 = vld [vmem:[#allocation7 + $0x240] sm:$0xff]
        %v1454 = vld [vmem:[#allocation7 + $0x248] sm:$0xff]
        %v1455 = vld [vmem:[#allocation7 + $0x250] sm:$0xff]
        %v1456 = vld [vmem:[#allocation7 + $0x258] sm:$0xff]
        %v1457 = vld [vmem:[#allocation7 + $0x260] sm:$0xff]
        %v1458 = vld [vmem:[#allocation7 + $0x268] sm:$0xff]
        %v1459 = vld [vmem:[#allocation7 + $0x270] sm:$0xff]
        %v1460 = vld [vmem:[#allocation7 + $0x278] sm:$0xff]
        %v1461 = vld [vmem:[#allocation7 + $0x280] sm:$0xff]
        %v1462 = vld [vmem:[#allocation7 + $0x288] sm:$0xff]
        %v1463 = vld [vmem:[#allocation7 + $0x290] sm:$0xff]
        %v1464 = vld [vmem:[#allocation7 + $0x298] sm:$0xff]
        %v1465 = vld [vmem:[#allocation7 + $0x2a0] sm:$0xff]
        %v1466 = vld [vmem:[#allocation7 + $0x2a8] sm:$0xff]
        %v1467 = vld [vmem:[#allocation7 + $0x2b0] sm:$0xff]
        %v1468 = vld [vmem:[#allocation7 + $0x2b8] sm:$0xff]
        %v1469 = vld [vmem:[#allocation7 + $0x2c0] sm:$0xff]
        %v1470 = vld [vmem:[#allocation7 + $0x2c8] sm:$0xff]
        %v1471 = vld [vmem:[#allocation7 + $0x2d0] sm:$0xff]
        %v1472 = vld [vmem:[#allocation7 + $0x2d8] sm:$0xff]
        %v1473 = vld [vmem:[#allocation7 + $0x2e0] sm:$0xff]
        %v1474 = vld [vmem:[#allocation7 + $0x2e8] sm:$0xff]
        %v1475 = vld [vmem:[#allocation7 + $0x2f0] sm:$0xff]
        %v1476 = vld [vmem:[#allocation7 + $0x2f8] sm:$0xff]
        %v1477 = vld [vmem:[#allocation7 + $0x300] sm:$0xff]
        %v1478 = vld [vmem:[#allocation7 + $0x308] sm:$0xff]
        %v1479 = vld [vmem:[#allocation7 + $0x310] sm:$0xff]
        %v1480 = vld [vmem:[#allocation7 + $0x318] sm:$0xff]
        %v1481 = vld [vmem:[#allocation7 + $0x320] sm:$0xff]
        %v1482 = vld [vmem:[#allocation7 + $0x328] sm:$0xff]
        %v1483 = vld [vmem:[#allocation7 + $0x330] sm:$0xff]
        %v1484 = vld [vmem:[#allocation7 + $0x338] sm:$0xff]
        %v1485 = vld [vmem:[#allocation7 + $0x340] sm:$0xff]
        %v1486 = vld [vmem:[#allocation7 + $0x348] sm:$0xff]
        %v1487 = vld [vmem:[#allocation7 + $0x350] sm:$0xff]
        %v1488 = vld [vmem:[#allocation7 + $0x358] sm:$0xff]
        %v1489 = vld [vmem:[#allocation7 + $0x360] sm:$0xff]
        %v1490 = vld [vmem:[#allocation7 + $0x368] sm:$0xff]
        %v1491 = vld [vmem:[#allocation7 + $0x370] sm:$0xff]
        %v1492 = vld [vmem:[#allocation7 + $0x378] sm:$0xff]
        %v1493 = vld [vmem:[#allocation7 + $0x380] sm:$0xff]
        %v1494 = vld [vmem:[#allocation7 + $0x388] sm:$0xff]
        %v1495 = vld [vmem:[#allocation7 + $0x390] sm:$0xff]
        %v1496 = vld [vmem:[#allocation7 + $0x398] sm:$0xff]
        %v1497 = vld [vmem:[#allocation7 + $0x3a0] sm:$0xff]
        %v1498 = vld [vmem:[#allocation7 + $0x3a8] sm:$0xff]
        %v1499 = vld [vmem:[#allocation7 + $0x3b0] sm:$0xff]
        %v1500 = vld [vmem:[#allocation7 + $0x3b8] sm:$0xff]
        %v1501 = vld [vmem:[#allocation7 + $0x3c0] sm:$0xff]
        %v1502 = vld [vmem:[#allocation7 + $0x3c8] sm:$0xff]
        %v1503 = vld [vmem:[#allocation7 + $0x3d0] sm:$0xff]
        %v1504 = vld [vmem:[#allocation7 + $0x3d8] sm:$0xff]
        %v1505 = vld [vmem:[#allocation7 + $0x3e0] sm:$0xff]
        %v1506 = vld [vmem:[#allocation7 + $0x3e8] sm:$0xff]
        %v1507 = vld [vmem:[#allocation7 + $0x3f0] sm:$0xff]
        %v1508 = vld [vmem:[#allocation7 + $0x3f8] sm:$0xff]
        %v1509 = vld [vmem:[%s7] sm:$0xf]
        %v1511 = vlaneseq
        %v1512 = vshrl.u32 %v1511, 7
        %v1513 = vsub.s32 0, %v1512
        %v1514 = vrot.slane %v1509, %v1513
        %v1515 = vlaneseq
        %v1516 = vshrl.u32 %v1515, 7
        %v1517 = vsub.s32 1, %v1516
        %v1518 = vrot.slane %v1509, %v1517
        %v1519 = vlaneseq
        %v1520 = vshrl.u32 %v1519, 7
        %v1521 = vsub.s32 2, %v1520
        %v1522 = vrot.slane %v1509, %v1521
        %v1523 = vlaneseq
        %v1524 = vshrl.u32 %v1523, 7
        %v1525 = vsub.s32 3, %v1524
        %v1526 = vrot.slane %v1509, %v1525
        %v1659 = vunpack.c.l.b16 %v1381
        %v1660 = vunpack.c.h.b16 %v1381
        %v1661 = vunpack.c.l.b16 %v1382
        %v1662 = vunpack.c.h.b16 %v1382
        %v1663 = vunpack.c.l.b16 %v1383
        %v1664 = vunpack.c.h.b16 %v1383
        %v1665 = vunpack.c.l.b16 %v1384
        %v1666 = vunpack.c.h.b16 %v1384
        %v1667 = vunpack.c.l.b16 %v1385
        %v1668 = vunpack.c.h.b16 %v1385
        %v1669 = vunpack.c.l.b16 %v1386
        %v1670 = vunpack.c.h.b16 %v1386
        %v1671 = vunpack.c.l.b16 %v1387
        %v1672 = vunpack.c.h.b16 %v1387
        %v1673 = vunpack.c.l.b16 %v1388
        %v1674 = vunpack.c.h.b16 %v1388
        %v1675 = vunpack.c.l.b16 %v1389
        %v1676 = vunpack.c.h.b16 %v1389
        %v1677 = vunpack.c.l.b16 %v1390
        %v1678 = vunpack.c.h.b16 %v1390
        %v1679 = vunpack.c.l.b16 %v1391
        %v1680 = vunpack.c.h.b16 %v1391
        %v1681 = vunpack.c.l.b16 %v1392
        %v1682 = vunpack.c.h.b16 %v1392
        %v1683 = vunpack.c.l.b16 %v1393
        %v1684 = vunpack.c.h.b16 %v1393
        %v1685 = vunpack.c.l.b16 %v1394
        %v1686 = vunpack.c.h.b16 %v1394
        %v1687 = vunpack.c.l.b16 %v1395
        %v1688 = vunpack.c.h.b16 %v1395
        %v1689 = vunpack.c.l.b16 %v1396
        %v1690 = vunpack.c.h.b16 %v1396
        %v1691 = vunpack.c.l.b16 %v1397
        %v1692 = vunpack.c.h.b16 %v1397
        %v1693 = vunpack.c.l.b16 %v1398
        %v1694 = vunpack.c.h.b16 %v1398
        %v1695 = vunpack.c.l.b16 %v1399
        %v1696 = vunpack.c.h.b16 %v1399
        %v1697 = vunpack.c.l.b16 %v1400
        %v1698 = vunpack.c.h.b16 %v1400
        %v1699 = vunpack.c.l.b16 %v1401
        %v1700 = vunpack.c.h.b16 %v1401
        %v1701 = vunpack.c.l.b16 %v1402
        %v1702 = vunpack.c.h.b16 %v1402
        %v1703 = vunpack.c.l.b16 %v1403
        %v1704 = vunpack.c.h.b16 %v1403
        %v1705 = vunpack.c.l.b16 %v1404
        %v1706 = vunpack.c.h.b16 %v1404
        %v1707 = vunpack.c.l.b16 %v1405
        %v1708 = vunpack.c.h.b16 %v1405
        %v1709 = vunpack.c.l.b16 %v1406
        %v1710 = vunpack.c.h.b16 %v1406
        %v1711 = vunpack.c.l.b16 %v1407
        %v1712 = vunpack.c.h.b16 %v1407
        %v1713 = vunpack.c.l.b16 %v1408
        %v1714 = vunpack.c.h.b16 %v1408
        %v1715 = vunpack.c.l.b16 %v1409
        %v1716 = vunpack.c.h.b16 %v1409
        %v1717 = vunpack.c.l.b16 %v1410
        %v1718 = vunpack.c.h.b16 %v1410
        %v1719 = vunpack.c.l.b16 %v1411
        %v1720 = vunpack.c.h.b16 %v1411
        %v1721 = vunpack.c.l.b16 %v1412
        %v1722 = vunpack.c.h.b16 %v1412
        %v1723 = vunpack.c.l.b16 %v1413
        %v1724 = vunpack.c.h.b16 %v1413
        %v1725 = vunpack.c.l.b16 %v1414
        %v1726 = vunpack.c.h.b16 %v1414
        %v1727 = vunpack.c.l.b16 %v1415
        %v1728 = vunpack.c.h.b16 %v1415
        %v1729 = vunpack.c.l.b16 %v1416
        %v1730 = vunpack.c.h.b16 %v1416
        %v1731 = vunpack.c.l.b16 %v1417
        %v1732 = vunpack.c.h.b16 %v1417
        %v1733 = vunpack.c.l.b16 %v1418
        %v1734 = vunpack.c.h.b16 %v1418
        %v1735 = vunpack.c.l.b16 %v1419
        %v1736 = vunpack.c.h.b16 %v1419
        %v1737 = vunpack.c.l.b16 %v1420
        %v1738 = vunpack.c.h.b16 %v1420
        %v1739 = vunpack.c.l.b16 %v1421
        %v1740 = vunpack.c.h.b16 %v1421
        %v1741 = vunpack.c.l.b16 %v1422
        %v1742 = vunpack.c.h.b16 %v1422
        %v1743 = vunpack.c.l.b16 %v1423
        %v1744 = vunpack.c.h.b16 %v1423
        %v1745 = vunpack.c.l.b16 %v1424
        %v1746 = vunpack.c.h.b16 %v1424
        %v1747 = vunpack.c.l.b16 %v1425
        %v1748 = vunpack.c.h.b16 %v1425
        %v1749 = vunpack.c.l.b16 %v1426
        %v1750 = vunpack.c.h.b16 %v1426
        %v1751 = vunpack.c.l.b16 %v1427
        %v1752 = vunpack.c.h.b16 %v1427
        %v1753 = vunpack.c.l.b16 %v1428
        %v1754 = vunpack.c.h.b16 %v1428
        %v1755 = vunpack.c.l.b16 %v1429
        %v1756 = vunpack.c.h.b16 %v1429
        %v1757 = vunpack.c.l.b16 %v1430
        %v1758 = vunpack.c.h.b16 %v1430
        %v1759 = vunpack.c.l.b16 %v1431
        %v1760 = vunpack.c.h.b16 %v1431
        %v1761 = vunpack.c.l.b16 %v1432
        %v1762 = vunpack.c.h.b16 %v1432
        %v1763 = vunpack.c.l.b16 %v1433
        %v1764 = vunpack.c.h.b16 %v1433
        %v1765 = vunpack.c.l.b16 %v1434
        %v1766 = vunpack.c.h.b16 %v1434
        %v1767 = vunpack.c.l.b16 %v1435
        %v1768 = vunpack.c.h.b16 %v1435
        %v1769 = vunpack.c.l.b16 %v1436
        %v1770 = vunpack.c.h.b16 %v1436
        %v1771 = vunpack.c.l.b16 %v1437
        %v1772 = vunpack.c.h.b16 %v1437
        %v1773 = vunpack.c.l.b16 %v1438
        %v1774 = vunpack.c.h.b16 %v1438
        %v1775 = vunpack.c.l.b16 %v1439
        %v1776 = vunpack.c.h.b16 %v1439
        %v1777 = vunpack.c.l.b16 %v1440
        %v1778 = vunpack.c.h.b16 %v1440
        %v1779 = vunpack.c.l.b16 %v1441
        %v1780 = vunpack.c.h.b16 %v1441
        %v1781 = vunpack.c.l.b16 %v1442
        %v1782 = vunpack.c.h.b16 %v1442
        %v1783 = vunpack.c.l.b16 %v1443
        %v1784 = vunpack.c.h.b16 %v1443
        %v1785 = vunpack.c.l.b16 %v1444
        %v1786 = vunpack.c.h.b16 %v1444
        %v1787 = vunpack.c.l.b16 %v1445
        %v1788 = vunpack.c.h.b16 %v1445
        %v1789 = vunpack.c.l.b16 %v1446
        %v1790 = vunpack.c.h.b16 %v1446
        %v1791 = vunpack.c.l.b16 %v1447
        %v1792 = vunpack.c.h.b16 %v1447
        %v1793 = vunpack.c.l.b16 %v1448
        %v1794 = vunpack.c.h.b16 %v1448
        %v1795 = vunpack.c.l.b16 %v1449
        %v1796 = vunpack.c.h.b16 %v1449
        %v1797 = vunpack.c.l.b16 %v1450
        %v1798 = vunpack.c.h.b16 %v1450
        %v1799 = vunpack.c.l.b16 %v1451
        %v1800 = vunpack.c.h.b16 %v1451
        %v1801 = vunpack.c.l.b16 %v1452
        %v1802 = vunpack.c.h.b16 %v1452
        %v1803 = vunpack.c.l.b16 %v1453
        %v1804 = vunpack.c.h.b16 %v1453
        %v1805 = vunpack.c.l.b16 %v1454
        %v1806 = vunpack.c.h.b16 %v1454
        %v1807 = vunpack.c.l.b16 %v1455
        %v1808 = vunpack.c.h.b16 %v1455
        %v1809 = vunpack.c.l.b16 %v1456
        %v1810 = vunpack.c.h.b16 %v1456
        %v1811 = vunpack.c.l.b16 %v1457
        %v1812 = vunpack.c.h.b16 %v1457
        %v1813 = vunpack.c.l.b16 %v1458
        %v1814 = vunpack.c.h.b16 %v1458
        %v1815 = vunpack.c.l.b16 %v1459
        %v1816 = vunpack.c.h.b16 %v1459
        %v1817 = vunpack.c.l.b16 %v1460
        %v1818 = vunpack.c.h.b16 %v1460
        %v1819 = vunpack.c.l.b16 %v1461
        %v1820 = vunpack.c.h.b16 %v1461
        %v1821 = vunpack.c.l.b16 %v1462
        %v1822 = vunpack.c.h.b16 %v1462
        %v1823 = vunpack.c.l.b16 %v1463
        %v1824 = vunpack.c.h.b16 %v1463
        %v1825 = vunpack.c.l.b16 %v1464
        %v1826 = vunpack.c.h.b16 %v1464
        %v1827 = vunpack.c.l.b16 %v1465
        %v1828 = vunpack.c.h.b16 %v1465
        %v1829 = vunpack.c.l.b16 %v1466
        %v1830 = vunpack.c.h.b16 %v1466
        %v1831 = vunpack.c.l.b16 %v1467
        %v1832 = vunpack.c.h.b16 %v1467
        %v1833 = vunpack.c.l.b16 %v1468
        %v1834 = vunpack.c.h.b16 %v1468
        %v1835 = vunpack.c.l.b16 %v1469
        %v1836 = vunpack.c.h.b16 %v1469
        %v1837 = vunpack.c.l.b16 %v1470
        %v1838 = vunpack.c.h.b16 %v1470
        %v1839 = vunpack.c.l.b16 %v1471
        %v1840 = vunpack.c.h.b16 %v1471
        %v1841 = vunpack.c.l.b16 %v1472
        %v1842 = vunpack.c.h.b16 %v1472
        %v1843 = vunpack.c.l.b16 %v1473
        %v1844 = vunpack.c.h.b16 %v1473
        %v1845 = vunpack.c.l.b16 %v1474
        %v1846 = vunpack.c.h.b16 %v1474
        %v1847 = vunpack.c.l.b16 %v1475
        %v1848 = vunpack.c.h.b16 %v1475
        %v1849 = vunpack.c.l.b16 %v1476
        %v1850 = vunpack.c.h.b16 %v1476
        %v1851 = vunpack.c.l.b16 %v1477
        %v1852 = vunpack.c.h.b16 %v1477
        %v1853 = vunpack.c.l.b16 %v1478
        %v1854 = vunpack.c.h.b16 %v1478
        %v1855 = vunpack.c.l.b16 %v1479
        %v1856 = vunpack.c.h.b16 %v1479
        %v1857 = vunpack.c.l.b16 %v1480
        %v1858 = vunpack.c.h.b16 %v1480
        %v1859 = vunpack.c.l.b16 %v1481
        %v1860 = vunpack.c.h.b16 %v1481
        %v1861 = vunpack.c.l.b16 %v1482
        %v1862 = vunpack.c.h.b16 %v1482
        %v1863 = vunpack.c.l.b16 %v1483
        %v1864 = vunpack.c.h.b16 %v1483
        %v1865 = vunpack.c.l.b16 %v1484
        %v1866 = vunpack.c.h.b16 %v1484
        %v1867 = vunpack.c.l.b16 %v1485
        %v1868 = vunpack.c.h.b16 %v1485
        %v1869 = vunpack.c.l.b16 %v1486
        %v1870 = vunpack.c.h.b16 %v1486
        %v1871 = vunpack.c.l.b16 %v1487
        %v1872 = vunpack.c.h.b16 %v1487
        %v1873 = vunpack.c.l.b16 %v1488
        %v1874 = vunpack.c.h.b16 %v1488
        %v1875 = vunpack.c.l.b16 %v1489
        %v1876 = vunpack.c.h.b16 %v1489
        %v1877 = vunpack.c.l.b16 %v1490
        %v1878 = vunpack.c.h.b16 %v1490
        %v1879 = vunpack.c.l.b16 %v1491
        %v1880 = vunpack.c.h.b16 %v1491
        %v1881 = vunpack.c.l.b16 %v1492
        %v1882 = vunpack.c.h.b16 %v1492
        %v1883 = vunpack.c.l.b16 %v1493
        %v1884 = vunpack.c.h.b16 %v1493
        %v1885 = vunpack.c.l.b16 %v1494
        %v1886 = vunpack.c.h.b16 %v1494
        %v1887 = vunpack.c.l.b16 %v1495
        %v1888 = vunpack.c.h.b16 %v1495
        %v1889 = vunpack.c.l.b16 %v1496
        %v1890 = vunpack.c.h.b16 %v1496
        %v1891 = vunpack.c.l.b16 %v1497
        %v1892 = vunpack.c.h.b16 %v1497
        %v1893 = vunpack.c.l.b16 %v1498
        %v1894 = vunpack.c.h.b16 %v1498
        %v1895 = vunpack.c.l.b16 %v1499
        %v1896 = vunpack.c.h.b16 %v1499
        %v1897 = vunpack.c.l.b16 %v1500
        %v1898 = vunpack.c.h.b16 %v1500
        %v1899 = vunpack.c.l.b16 %v1501
        %v1900 = vunpack.c.h.b16 %v1501
        %v1901 = vunpack.c.l.b16 %v1502
        %v1902 = vunpack.c.h.b16 %v1502
        %v1903 = vunpack.c.l.b16 %v1503
        %v1904 = vunpack.c.h.b16 %v1503
        %v1905 = vunpack.c.l.b16 %v1504
        %v1906 = vunpack.c.h.b16 %v1504
        %v1907 = vunpack.c.l.b16 %v1505
        %v1908 = vunpack.c.h.b16 %v1505
        %v1909 = vunpack.c.l.b16 %v1506
        %v1910 = vunpack.c.h.b16 %v1506
        %v1911 = vunpack.c.l.b16 %v1507
        %v1912 = vunpack.c.h.b16 %v1507
        %v1913 = vunpack.c.l.b16 %v1508
        %v1914 = vunpack.c.h.b16 %v1508
        %v1915 = vpack.c.b16 %v1663, %v1659
        %v1916 = vpack.c.b16 %v1664, %v1660
        %v1917 = vpack.c.b16 %v1665, %v1661
        %v1918 = vpack.c.b16 %v1666, %v1662
        %v1919 = vpack.c.b16 %v1671, %v1667
        %v1920 = vpack.c.b16 %v1672, %v1668
        %v1921 = vpack.c.b16 %v1673, %v1669
        %v1922 = vpack.c.b16 %v1674, %v1670
        %v1923 = vpack.c.b16 %v1679, %v1675
        %v1924 = vpack.c.b16 %v1680, %v1676
        %v1925 = vpack.c.b16 %v1681, %v1677
        %v1926 = vpack.c.b16 %v1682, %v1678
        %v1927 = vpack.c.b16 %v1687, %v1683
        %v1928 = vpack.c.b16 %v1688, %v1684
        %v1929 = vpack.c.b16 %v1689, %v1685
        %v1930 = vpack.c.b16 %v1690, %v1686
        %v1931 = vpack.c.b16 %v1695, %v1691
        %v1932 = vpack.c.b16 %v1696, %v1692
        %v1933 = vpack.c.b16 %v1697, %v1693
        %v1934 = vpack.c.b16 %v1698, %v1694
        %v1935 = vpack.c.b16 %v1703, %v1699
        %v1936 = vpack.c.b16 %v1704, %v1700
        %v1937 = vpack.c.b16 %v1705, %v1701
        %v1938 = vpack.c.b16 %v1706, %v1702
        %v1939 = vpack.c.b16 %v1711, %v1707
        %v1940 = vpack.c.b16 %v1712, %v1708
        %v1941 = vpack.c.b16 %v1713, %v1709
        %v1942 = vpack.c.b16 %v1714, %v1710
        %v1943 = vpack.c.b16 %v1719, %v1715
        %v1944 = vpack.c.b16 %v1720, %v1716
        %v1945 = vpack.c.b16 %v1721, %v1717
        %v1946 = vpack.c.b16 %v1722, %v1718
        %v1947 = vpack.c.b16 %v1727, %v1723
        %v1948 = vpack.c.b16 %v1728, %v1724
        %v1949 = vpack.c.b16 %v1729, %v1725
        %v1950 = vpack.c.b16 %v1730, %v1726
        %v1951 = vpack.c.b16 %v1735, %v1731
        %v1952 = vpack.c.b16 %v1736, %v1732
        %v1953 = vpack.c.b16 %v1737, %v1733
        %v1954 = vpack.c.b16 %v1738, %v1734
        %v1955 = vpack.c.b16 %v1743, %v1739
        %v1956 = vpack.c.b16 %v1744, %v1740
        %v1957 = vpack.c.b16 %v1745, %v1741
        %v1958 = vpack.c.b16 %v1746, %v1742
        %v1959 = vpack.c.b16 %v1751, %v1747
        %v1960 = vpack.c.b16 %v1752, %v1748
        %v1961 = vpack.c.b16 %v1753, %v1749
        %v1962 = vpack.c.b16 %v1754, %v1750
        %v1963 = vpack.c.b16 %v1759, %v1755
        %v1964 = vpack.c.b16 %v1760, %v1756
        %v1965 = vpack.c.b16 %v1761, %v1757
        %v1966 = vpack.c.b16 %v1762, %v1758
        %v1967 = vpack.c.b16 %v1767, %v1763
        %v1968 = vpack.c.b16 %v1768, %v1764
        %v1969 = vpack.c.b16 %v1769, %v1765
        %v1970 = vpack.c.b16 %v1770, %v1766
        %v1971 = vpack.c.b16 %v1775, %v1771
        %v1972 = vpack.c.b16 %v1776, %v1772
        %v1973 = vpack.c.b16 %v1777, %v1773
        %v1974 = vpack.c.b16 %v1778, %v1774
        %v1975 = vpack.c.b16 %v1783, %v1779
        %v1976 = vpack.c.b16 %v1784, %v1780
        %v1977 = vpack.c.b16 %v1785, %v1781
        %v1978 = vpack.c.b16 %v1786, %v1782
        %v1979 = vpack.c.b16 %v1791, %v1787
        %v1980 = vpack.c.b16 %v1792, %v1788
        %v1981 = vpack.c.b16 %v1793, %v1789
        %v1982 = vpack.c.b16 %v1794, %v1790
        %v1983 = vpack.c.b16 %v1799, %v1795
        %v1984 = vpack.c.b16 %v1800, %v1796
        %v1985 = vpack.c.b16 %v1801, %v1797
        %v1986 = vpack.c.b16 %v1802, %v1798
        %v1987 = vpack.c.b16 %v1807, %v1803
        %v1988 = vpack.c.b16 %v1808, %v1804
        %v1989 = vpack.c.b16 %v1809, %v1805
        %v1990 = vpack.c.b16 %v1810, %v1806
        %v1991 = vpack.c.b16 %v1815, %v1811
        %v1992 = vpack.c.b16 %v1816, %v1812
        %v1993 = vpack.c.b16 %v1817, %v1813
        %v1994 = vpack.c.b16 %v1818, %v1814
        %v1995 = vpack.c.b16 %v1823, %v1819
        %v1996 = vpack.c.b16 %v1824, %v1820
        %v1997 = vpack.c.b16 %v1825, %v1821
        %v1998 = vpack.c.b16 %v1826, %v1822
        %v1999 = vpack.c.b16 %v1831, %v1827
        %v2000 = vpack.c.b16 %v1832, %v1828
        %v2001 = vpack.c.b16 %v1833, %v1829
        %v2002 = vpack.c.b16 %v1834, %v1830
        %v2003 = vpack.c.b16 %v1839, %v1835
        %v2004 = vpack.c.b16 %v1840, %v1836
        %v2005 = vpack.c.b16 %v1841, %v1837
        %v2006 = vpack.c.b16 %v1842, %v1838
        %v2007 = vpack.c.b16 %v1847, %v1843
        %v2008 = vpack.c.b16 %v1848, %v1844
        %v2009 = vpack.c.b16 %v1849, %v1845
        %v2010 = vpack.c.b16 %v1850, %v1846
        %v2011 = vpack.c.b16 %v1855, %v1851
        %v2012 = vpack.c.b16 %v1856, %v1852
        %v2013 = vpack.c.b16 %v1857, %v1853
        %v2014 = vpack.c.b16 %v1858, %v1854
        %v2015 = vpack.c.b16 %v1863, %v1859
        %v2016 = vpack.c.b16 %v1864, %v1860
        %v2017 = vpack.c.b16 %v1865, %v1861
        %v2018 = vpack.c.b16 %v1866, %v1862
        %v2019 = vpack.c.b16 %v1871, %v1867
        %v2020 = vpack.c.b16 %v1872, %v1868
        %v2021 = vpack.c.b16 %v1873, %v1869
        %v2022 = vpack.c.b16 %v1874, %v1870
        %v2023 = vpack.c.b16 %v1879, %v1875
        %v2024 = vpack.c.b16 %v1880, %v1876
        %v2025 = vpack.c.b16 %v1881, %v1877
        %v2026 = vpack.c.b16 %v1882, %v1878
        %v2027 = vpack.c.b16 %v1887, %v1883
        %v2028 = vpack.c.b16 %v1888, %v1884
        %v2029 = vpack.c.b16 %v1889, %v1885
        %v2030 = vpack.c.b16 %v1890, %v1886
        %v2031 = vpack.c.b16 %v1895, %v1891
        %v2032 = vpack.c.b16 %v1896, %v1892
        %v2033 = vpack.c.b16 %v1897, %v1893
        %v2034 = vpack.c.b16 %v1898, %v1894
        %v2035 = vpack.c.b16 %v1903, %v1899
        %v2036 = vpack.c.b16 %v1904, %v1900
        %v2037 = vpack.c.b16 %v1905, %v1901
        %v2038 = vpack.c.b16 %v1906, %v1902
        %v2039 = vpack.c.b16 %v1911, %v1907
        %v2040 = vpack.c.b16 %v1912, %v1908
        %v2041 = vpack.c.b16 %v1913, %v1909
        %v2042 = vpack.c.b16 %v1914, %v1910
        %2171 = vmatprep.subr.bf16.mxu0 %v1944
        %2172 = vmatpush1.bf16.msra.mxu0 %v1943
        %2173 = vmatprep.subr.bf16.mxu0 %v1940
        %2174 = vmatpush1.bf16.msra.mxu0 %v1939
        %2175 = vmatprep.subr.bf16.mxu0 %v1936
        %2176 = vmatpush1.bf16.msra.mxu0 %v1935
        %2177 = vmatprep.subr.bf16.mxu0 %v1932
        %2178 = vmatpush1.bf16.msra.mxu0 %v1931
        %2179 = vmatprep.subr.bf16.mxu0 %v1928
        %2180 = vmatpush1.bf16.msra.mxu0 %v1927
        %2181 = vmatprep.subr.bf16.mxu0 %v1924
        %2182 = vmatpush1.bf16.msra.mxu0 %v1923
        %2183 = vmatprep.subr.bf16.mxu0 %v1920
        %2184 = vmatpush1.bf16.msra.mxu0 %v1919
        %2185 = vmatprep.subr.bf16.mxu0 %v1916
        %2186 = vmatpush1.bf16.msra.mxu0 %v1915
        %2187 = vmatprep.subr.bf16.mxu0 %v1976
        %2188 = vmatpush2.bf16.msra.mxu0 %v1975
        %2189 = vmatprep.subr.bf16.mxu0 %v1972
        %2190 = vmatpush2.bf16.msra.mxu0 %v1971
        %2191 = vmatprep.subr.bf16.mxu0 %v1968
        %2192 = vmatpush2.bf16.msra.mxu0 %v1967
        %2193 = vmatprep.subr.bf16.mxu0 %v1964
        %2194 = vmatpush2.bf16.msra.mxu0 %v1963
        %2195 = vmatprep.subr.bf16.mxu0 %v1960
        %2196 = vmatpush2.bf16.msra.mxu0 %v1959
        %2197 = vmatprep.subr.bf16.mxu0 %v1956
        %2198 = vmatpush2.bf16.msra.mxu0 %v1955
        %2199 = vmatprep.subr.bf16.mxu0 %v1952
        %2200 = vmatpush2.bf16.msra.mxu0 %v1951
        %2201 = vmatprep.subr.bf16.mxu0 %v1948
        %2202 = vmatpush2.bf16.msra.mxu0 %v1947
        %2203 = vmatprep.mubr.bf16.mxu0 %v1378
        %2204 = vmatmul.mubr.bf16.gmra.mxu0 %v1377
        %v2205 = vpop.f32.mrf.mxu0
        %v2206 = vadd.f32 %v1514, %v2205
        %v2207 = vpop.f32.mrf.mxu0
        %v2208 = vadd.f32 %v1518, %v2207
        %v2209 = vpop.f32.mrf.mxu0
        %v2210 = vadd.f32 %v1514, %v2209
        %v2211 = vpop.f32.mrf.mxu0
        %v2212 = vadd.f32 %v1518, %v2211
        %2213 = vdwg.mxu0
        %2214 = vmatprep.subr.bf16.mxu0 %v2008
        %2215 = vmatpush1.bf16.msra.mxu0 %v2007
        %2216 = vmatprep.subr.bf16.mxu0 %v2004
        %2217 = vmatpush1.bf16.msra.mxu0 %v2003
        %2218 = vmatprep.subr.bf16.mxu0 %v2000
        %2219 = vmatpush1.bf16.msra.mxu0 %v1999
        %2220 = vmatprep.subr.bf16.mxu0 %v1996
        %2221 = vmatpush1.bf16.msra.mxu0 %v1995
        %2222 = vmatprep.subr.bf16.mxu0 %v1992
        %2223 = vmatpush1.bf16.msra.mxu0 %v1991
        %2224 = vmatprep.subr.bf16.mxu0 %v1988
        %2225 = vmatpush1.bf16.msra.mxu0 %v1987
        %2226 = vmatprep.subr.bf16.mxu0 %v1984
        %2227 = vmatpush1.bf16.msra.mxu0 %v1983
        %2228 = vmatprep.subr.bf16.mxu0 %v1980
        %2229 = vmatpush1.bf16.msra.mxu0 %v1979
        %2230 = vmatprep.subr.bf16.mxu0 %v2040
        %2231 = vmatpush2.bf16.msra.mxu0 %v2039
        %2232 = vmatprep.subr.bf16.mxu0 %v2036
        %2233 = vmatpush2.bf16.msra.mxu0 %v2035
        %2234 = vmatprep.subr.bf16.mxu0 %v2032
        %2235 = vmatpush2.bf16.msra.mxu0 %v2031
        %2236 = vmatprep.subr.bf16.mxu0 %v2028
        %2237 = vmatpush2.bf16.msra.mxu0 %v2027
        %2238 = vmatprep.subr.bf16.mxu0 %v2024
        %2239 = vmatpush2.bf16.msra.mxu0 %v2023
        %2240 = vmatprep.subr.bf16.mxu0 %v2020
        %2241 = vmatpush2.bf16.msra.mxu0 %v2019
        %2242 = vmatprep.subr.bf16.mxu0 %v2016
        %2243 = vmatpush2.bf16.msra.mxu0 %v2015
        %2244 = vmatprep.subr.bf16.mxu0 %v2012
        %2245 = vmatpush2.bf16.msra.mxu0 %v2011
        %2246 = vmatprep.mubr.bf16.mxu0 %v1380
        %2247 = vmatmul.mubr.bf16.gmra.mxu0 %v1379
        %v2248 = vpop.f32.mrf.mxu0
        %v2249 = vadd.f32 %v2206, %v2248
        %v2250 = vpop.f32.mrf.mxu0
        %v2251 = vadd.f32 %v2208, %v2250
        %v2252 = vpop.f32.mrf.mxu0
        %v2253 = vadd.f32 %v2210, %v2252
        %v2254 = vpop.f32.mrf.mxu0
        %v2255 = vadd.f32 %v2212, %v2254
        %2256 = vdwg.mxu0
        %2257 = vmatprep.subr.bf16.mxu0 %v1946
        %2258 = vmatpush1.bf16.msra.mxu0 %v1945
        %2259 = vmatprep.subr.bf16.mxu0 %v1942
        %2260 = vmatpush1.bf16.msra.mxu0 %v1941
        %2261 = vmatprep.subr.bf16.mxu0 %v1938
        %2262 = vmatpush1.bf16.msra.mxu0 %v1937
        %2263 = vmatprep.subr.bf16.mxu0 %v1934
        %2264 = vmatpush1.bf16.msra.mxu0 %v1933
        %2265 = vmatprep.subr.bf16.mxu0 %v1930
        %2266 = vmatpush1.bf16.msra.mxu0 %v1929
        %2267 = vmatprep.subr.bf16.mxu0 %v1926
        %2268 = vmatpush1.bf16.msra.mxu0 %v1925
        %2269 = vmatprep.subr.bf16.mxu0 %v1922
        %2270 = vmatpush1.bf16.msra.mxu0 %v1921
        %2271 = vmatprep.subr.bf16.mxu0 %v1918
        %2272 = vmatpush1.bf16.msra.mxu0 %v1917
        %2273 = vmatprep.subr.bf16.mxu0 %v1978
        %2274 = vmatpush2.bf16.msra.mxu0 %v1977
        %2275 = vmatprep.subr.bf16.mxu0 %v1974
        %2276 = vmatpush2.bf16.msra.mxu0 %v1973
        %2277 = vmatprep.subr.bf16.mxu0 %v1970
        %2278 = vmatpush2.bf16.msra.mxu0 %v1969
        %2279 = vmatprep.subr.bf16.mxu0 %v1966
        %2280 = vmatpush2.bf16.msra.mxu0 %v1965
        %2281 = vmatprep.subr.bf16.mxu0 %v1962
        %2282 = vmatpush2.bf16.msra.mxu0 %v1961
        %2283 = vmatprep.subr.bf16.mxu0 %v1958
        %2284 = vmatpush2.bf16.msra.mxu0 %v1957
        %2285 = vmatprep.subr.bf16.mxu0 %v1954
        %2286 = vmatpush2.bf16.msra.mxu0 %v1953
        %2287 = vmatprep.subr.bf16.mxu0 %v1950
        %2288 = vmatpush2.bf16.msra.mxu0 %v1949
        %2289 = vmatprep.mubr.bf16.mxu0 %v1378
        %2290 = vmatmul.mubr.bf16.gmra.mxu0 %v1377
        %v2291 = vpop.f32.mrf.mxu0
        %v2292 = vadd.f32 %v1522, %v2291
        %v2293 = vpop.f32.mrf.mxu0
        %v2294 = vadd.f32 %v1526, %v2293
        %v2295 = vpop.f32.mrf.mxu0
        %v2296 = vadd.f32 %v1522, %v2295
        %v2297 = vpop.f32.mrf.mxu0
        %v2298 = vadd.f32 %v1526, %v2297
        %2299 = vdwg.mxu0
        %2300 = vmatprep.subr.bf16.mxu0 %v2010
        %2301 = vmatpush1.bf16.msra.mxu0 %v2009
        %2302 = vmatprep.subr.bf16.mxu0 %v2006
        %2303 = vmatpush1.bf16.msra.mxu0 %v2005
        %2304 = vmatprep.subr.bf16.mxu0 %v2002
        %2305 = vmatpush1.bf16.msra.mxu0 %v2001
        %2306 = vmatprep.subr.bf16.mxu0 %v1998
        %2307 = vmatpush1.bf16.msra.mxu0 %v1997
        %2308 = vmatprep.subr.bf16.mxu0 %v1994
        %2309 = vmatpush1.bf16.msra.mxu0 %v1993
        %2310 = vmatprep.subr.bf16.mxu0 %v1990
        %2311 = vmatpush1.bf16.msra.mxu0 %v1989
        %2312 = vmatprep.subr.bf16.mxu0 %v1986
        %2313 = vmatpush1.bf16.msra.mxu0 %v1985
        %2314 = vmatprep.subr.bf16.mxu0 %v1982
        %2315 = vmatpush1.bf16.msra.mxu0 %v1981
        %2316 = vmatprep.subr.bf16.mxu0 %v2042
        %2317 = vmatpush2.bf16.msra.mxu0 %v2041
        %2318 = vmatprep.subr.bf16.mxu0 %v2038
        %2319 = vmatpush2.bf16.msra.mxu0 %v2037
        %2320 = vmatprep.subr.bf16.mxu0 %v2034
        %2321 = vmatpush2.bf16.msra.mxu0 %v2033
        %2322 = vmatprep.subr.bf16.mxu0 %v2030
        %2323 = vmatpush2.bf16.msra.mxu0 %v2029
        %2324 = vmatprep.subr.bf16.mxu0 %v2026
        %2325 = vmatpush2.bf16.msra.mxu0 %v2025
        %2326 = vmatprep.subr.bf16.mxu0 %v2022
        %2327 = vmatpush2.bf16.msra.mxu0 %v2021
        %2328 = vmatprep.subr.bf16.mxu0 %v2018
        %2329 = vmatpush2.bf16.msra.mxu0 %v2017
        %2330 = vmatprep.subr.bf16.mxu0 %v2014
        %2331 = vmatpush2.bf16.msra.mxu0 %v2013
        %2332 = vmatprep.mubr.bf16.mxu0 %v1380
        %2333 = vmatmul.mubr.bf16.gmra.mxu0 %v1379
        %v2334 = vpop.f32.mrf.mxu0
        %v2335 = vadd.f32 %v2292, %v2334
        %v2336 = vpop.f32.mrf.mxu0
        %v2337 = vadd.f32 %v2294, %v2336
        %v2338 = vpop.f32.mrf.mxu0
        %v2339 = vadd.f32 %v2296, %v2338
        %v2340 = vpop.f32.mrf.mxu0
        %v2341 = vadd.f32 %v2298, %v2340
        %2342 = vdwg.mxu0
        %v2343 = vmax.f32 %v2249, 0.0
        %v2344 = vmax.f32 %v2251, 0.0
        %v2345 = vmax.f32 %v2335, 0.0
        %v2346 = vmax.f32 %v2337, 0.0
        %v2347 = vmax.f32 %v2253, 0.0
        %v2348 = vmax.f32 %v2255, 0.0
        %v2349 = vmax.f32 %v2339, 0.0
        %v2350 = vmax.f32 %v2341, 0.0
        %v2351 = vld [vmem:[%s8] sm:$0xf]
        %v2352 = vld [vmem:[%s9] sm:$0xf]
        %v2353 = vld [vmem:[#allocation8] sm:$0xf]
        %v2354 = vld [vmem:[#allocation8 + $0x4] sm:$0xf]
        %v2355 = vld [vmem:[#allocation8 + $0x8] sm:$0xf]
        %v2356 = vld [vmem:[#allocation8 + $0xc] sm:$0xf]
        %v2357 = vld [vmem:[#allocation8 + $0x10] sm:$0xf]
        %v2358 = vld [vmem:[#allocation8 + $0x14] sm:$0xf]
        %v2359 = vld [vmem:[#allocation8 + $0x18] sm:$0xf]
        %v2360 = vld [vmem:[#allocation8 + $0x1c] sm:$0xf]
        %v2361 = vld [vmem:[#allocation8 + $0x20] sm:$0xf]
        %v2362 = vld [vmem:[#allocation8 + $0x24] sm:$0xf]
        %v2363 = vld [vmem:[#allocation8 + $0x28] sm:$0xf]
        %v2364 = vld [vmem:[#allocation8 + $0x2c] sm:$0xf]
        %v2365 = vld [vmem:[#allocation8 + $0x30] sm:$0xf]
        %v2366 = vld [vmem:[#allocation8 + $0x34] sm:$0xf]
        %v2367 = vld [vmem:[#allocation8 + $0x38] sm:$0xf]
        %v2368 = vld [vmem:[#allocation8 + $0x3c] sm:$0xf]
        %v2369 = vld [vmem:[#allocation8 + $0x40] sm:$0xf]
        %v2370 = vld [vmem:[#allocation8 + $0x44] sm:$0xf]
        %v2371 = vld [vmem:[#allocation8 + $0x48] sm:$0xf]
        %v2372 = vld [vmem:[#allocation8 + $0x4c] sm:$0xf]
        %v2373 = vld [vmem:[#allocation8 + $0x50] sm:$0xf]
        %v2374 = vld [vmem:[#allocation8 + $0x54] sm:$0xf]
        %v2375 = vld [vmem:[#allocation8 + $0x58] sm:$0xf]
        %v2376 = vld [vmem:[#allocation8 + $0x5c] sm:$0xf]
        %v2377 = vld [vmem:[#allocation8 + $0x60] sm:$0xf]
        %v2378 = vld [vmem:[#allocation8 + $0x64] sm:$0xf]
        %v2379 = vld [vmem:[#allocation8 + $0x68] sm:$0xf]
        %v2380 = vld [vmem:[#allocation8 + $0x6c] sm:$0xf]
        %v2381 = vld [vmem:[#allocation8 + $0x70] sm:$0xf]
        %v2382 = vld [vmem:[#allocation8 + $0x74] sm:$0xf]
        %v2383 = vld [vmem:[#allocation8 + $0x78] sm:$0xf]
        %v2384 = vld [vmem:[#allocation8 + $0x7c] sm:$0xf]
        %v2385 = vld [vmem:[#allocation8 + $0x80] sm:$0xf]
        %v2386 = vld [vmem:[#allocation8 + $0x84] sm:$0xf]
        %v2387 = vld [vmem:[#allocation8 + $0x88] sm:$0xf]
        %v2388 = vld [vmem:[#allocation8 + $0x8c] sm:$0xf]
        %v2389 = vld [vmem:[#allocation8 + $0x90] sm:$0xf]
        %v2390 = vld [vmem:[#allocation8 + $0x94] sm:$0xf]
        %v2391 = vld [vmem:[#allocation8 + $0x98] sm:$0xf]
        %v2392 = vld [vmem:[#allocation8 + $0x9c] sm:$0xf]
        %v2393 = vld [vmem:[#allocation8 + $0xa0] sm:$0xf]
        %v2394 = vld [vmem:[#allocation8 + $0xa4] sm:$0xf]
        %v2395 = vld [vmem:[#allocation8 + $0xa8] sm:$0xf]
        %v2396 = vld [vmem:[#allocation8 + $0xac] sm:$0xf]
        %v2397 = vld [vmem:[#allocation8 + $0xb0] sm:$0xf]
        %v2398 = vld [vmem:[#allocation8 + $0xb4] sm:$0xf]
        %v2399 = vld [vmem:[#allocation8 + $0xb8] sm:$0xf]
        %v2400 = vld [vmem:[#allocation8 + $0xbc] sm:$0xf]
        %v2401 = vld [vmem:[#allocation8 + $0xc0] sm:$0xf]
        %v2402 = vld [vmem:[#allocation8 + $0xc4] sm:$0xf]
        %v2403 = vld [vmem:[#allocation8 + $0xc8] sm:$0xf]
        %v2404 = vld [vmem:[#allocation8 + $0xcc] sm:$0xf]
        %v2405 = vld [vmem:[#allocation8 + $0xd0] sm:$0xf]
        %v2406 = vld [vmem:[#allocation8 + $0xd4] sm:$0xf]
        %v2407 = vld [vmem:[#allocation8 + $0xd8] sm:$0xf]
        %v2408 = vld [vmem:[#allocation8 + $0xdc] sm:$0xf]
        %v2409 = vld [vmem:[#allocation8 + $0xe0] sm:$0xf]
        %v2410 = vld [vmem:[#allocation8 + $0xe4] sm:$0xf]
        %v2411 = vld [vmem:[#allocation8 + $0xe8] sm:$0xf]
        %v2412 = vld [vmem:[#allocation8 + $0xec] sm:$0xf]
        %v2413 = vld [vmem:[#allocation8 + $0xf0] sm:$0xf]
        %v2414 = vld [vmem:[#allocation8 + $0xf4] sm:$0xf]
        %v2415 = vld [vmem:[#allocation8 + $0xf8] sm:$0xf]
        %v2416 = vld [vmem:[#allocation8 + $0xfc] sm:$0xf]
        %v2417 = vpack.c.bf16 %v2347, %v2343
        %v2418 = vpack.c.bf16 %v2348, %v2344
        %v2419 = vpack.c.bf16 %v2349, %v2345
        %v2420 = vpack.c.bf16 %v2350, %v2346
        %v2421 = vmul.f32 %v2343, %v2343
        %v2422 = vmul.f32 %v2344, %v2344
        %v2423 = vmul.f32 %v2345, %v2345
        %v2424 = vmul.f32 %v2346, %v2346
        %v2425 = vmul.f32 %v2347, %v2347
        %v2426 = vmul.f32 %v2348, %v2348
        %v2427 = vmul.f32 %v2349, %v2349
        %v2428 = vmul.f32 %v2350, %v2350
        %v2429 = vpack.c.bf16 %v2425, %v2421
        %v2430 = vpack.c.bf16 %v2426, %v2422
        %v2431 = vpack.c.bf16 %v2427, %v2423
        %v2432 = vpack.c.bf16 %v2428, %v2424
        %v2497 = vunpack.c.l.b16 %v2353
        %v2498 = vunpack.c.l.b16 %v2354
        %v2499 = vunpack.c.l.b16 %v2355
        %v2500 = vunpack.c.l.b16 %v2356
        %v2501 = vunpack.c.l.b16 %v2357
        %v2502 = vunpack.c.l.b16 %v2358
        %v2503 = vunpack.c.l.b16 %v2359
        %v2504 = vunpack.c.l.b16 %v2360
        %v2505 = vunpack.c.l.b16 %v2361
        %v2506 = vunpack.c.l.b16 %v2362
        %v2507 = vunpack.c.l.b16 %v2363
        %v2508 = vunpack.c.l.b16 %v2364
        %v2509 = vunpack.c.l.b16 %v2365
        %v2510 = vunpack.c.l.b16 %v2366
        %v2511 = vunpack.c.l.b16 %v2367
        %v2512 = vunpack.c.l.b16 %v2368
        %v2513 = vunpack.c.l.b16 %v2369
        %v2514 = vunpack.c.l.b16 %v2370
        %v2515 = vunpack.c.l.b16 %v2371
        %v2516 = vunpack.c.l.b16 %v2372
        %v2517 = vunpack.c.l.b16 %v2373
        %v2518 = vunpack.c.l.b16 %v2374
        %v2519 = vunpack.c.l.b16 %v2375
        %v2520 = vunpack.c.l.b16 %v2376
        %v2521 = vunpack.c.l.b16 %v2377
        %v2522 = vunpack.c.l.b16 %v2378
        %v2523 = vunpack.c.l.b16 %v2379
        %v2524 = vunpack.c.l.b16 %v2380
        %v2525 = vunpack.c.l.b16 %v2381
        %v2526 = vunpack.c.l.b16 %v2382
        %v2527 = vunpack.c.l.b16 %v2383
        %v2528 = vunpack.c.l.b16 %v2384
        %v2529 = vunpack.c.l.b16 %v2385
        %v2530 = vunpack.c.l.b16 %v2386
        %v2531 = vunpack.c.l.b16 %v2387
        %v2532 = vunpack.c.l.b16 %v2388
        %v2533 = vunpack.c.l.b16 %v2389
        %v2534 = vunpack.c.l.b16 %v2390
        %v2535 = vunpack.c.l.b16 %v2391
        %v2536 = vunpack.c.l.b16 %v2392
        %v2537 = vunpack.c.l.b16 %v2393
        %v2538 = vunpack.c.l.b16 %v2394
        %v2539 = vunpack.c.l.b16 %v2395
        %v2540 = vunpack.c.l.b16 %v2396
        %v2541 = vunpack.c.l.b16 %v2397
        %v2542 = vunpack.c.l.b16 %v2398
        %v2543 = vunpack.c.l.b16 %v2399
        %v2544 = vunpack.c.l.b16 %v2400
        %v2545 = vunpack.c.l.b16 %v2401
        %v2546 = vunpack.c.l.b16 %v2402
        %v2547 = vunpack.c.l.b16 %v2403
        %v2548 = vunpack.c.l.b16 %v2404
        %v2549 = vunpack.c.l.b16 %v2405
        %v2550 = vunpack.c.l.b16 %v2406
        %v2551 = vunpack.c.l.b16 %v2407
        %v2552 = vunpack.c.l.b16 %v2408
        %v2553 = vunpack.c.l.b16 %v2409
        %v2554 = vunpack.c.l.b16 %v2410
        %v2555 = vunpack.c.l.b16 %v2411
        %v2556 = vunpack.c.l.b16 %v2412
        %v2557 = vunpack.c.l.b16 %v2413
        %v2558 = vunpack.c.l.b16 %v2414
        %v2559 = vunpack.c.l.b16 %v2415
        %v2560 = vunpack.c.l.b16 %v2416
        %v2561 = vpack.c.b16 %v2498, %v2497
        %v2562 = vpack.c.b16 %v2500, %v2499
        %v2563 = vpack.c.b16 %v2502, %v2501
        %v2564 = vpack.c.b16 %v2504, %v2503
        %v2565 = vpack.c.b16 %v2506, %v2505
        %v2566 = vpack.c.b16 %v2508, %v2507
        %v2567 = vpack.c.b16 %v2510, %v2509
        %v2568 = vpack.c.b16 %v2512, %v2511
        %v2569 = vpack.c.b16 %v2514, %v2513
        %v2570 = vpack.c.b16 %v2516, %v2515
        %v2571 = vpack.c.b16 %v2518, %v2517
        %v2572 = vpack.c.b16 %v2520, %v2519
        %v2573 = vpack.c.b16 %v2522, %v2521
        %v2574 = vpack.c.b16 %v2524, %v2523
        %v2575 = vpack.c.b16 %v2526, %v2525
        %v2576 = vpack.c.b16 %v2528, %v2527
        %v2577 = vpack.c.b16 %v2530, %v2529
        %v2578 = vpack.c.b16 %v2532, %v2531
        %v2579 = vpack.c.b16 %v2534, %v2533
        %v2580 = vpack.c.b16 %v2536, %v2535
        %v2581 = vpack.c.b16 %v2538, %v2537
        %v2582 = vpack.c.b16 %v2540, %v2539
        %v2583 = vpack.c.b16 %v2542, %v2541
        %v2584 = vpack.c.b16 %v2544, %v2543
        %v2585 = vpack.c.b16 %v2546, %v2545
        %v2586 = vpack.c.b16 %v2548, %v2547
        %v2587 = vpack.c.b16 %v2550, %v2549
        %v2588 = vpack.c.b16 %v2552, %v2551
        %v2589 = vpack.c.b16 %v2554, %v2553
        %v2590 = vpack.c.b16 %v2556, %v2555
        %v2591 = vpack.c.b16 %v2558, %v2557
        %v2592 = vpack.c.b16 %v2560, %v2559
        %2625 = vmatprep.subr.bf16.mxu0 0
        %2626 = vmatpush1.bf16.msra.mxu0 %v2568
        %2627 = vmatprep.subr.bf16.mxu0 0
        %2628 = vmatpush1.bf16.msra.mxu0 %v2567
        %2629 = vmatprep.subr.bf16.mxu0 0
        %2630 = vmatpush1.bf16.msra.mxu0 %v2566
        %2631 = vmatprep.subr.bf16.mxu0 0
        %2632 = vmatpush1.bf16.msra.mxu0 %v2565
        %2633 = vmatprep.subr.bf16.mxu0 0
        %2634 = vmatpush1.bf16.msra.mxu0 %v2564
        %2635 = vmatprep.subr.bf16.mxu0 0
        %2636 = vmatpush1.bf16.msra.mxu0 %v2563
        %2637 = vmatprep.subr.bf16.mxu0 0
        %2638 = vmatpush1.bf16.msra.mxu0 %v2562
        %2639 = vmatprep.subr.bf16.mxu0 0
        %2640 = vmatpush1.bf16.msra.mxu0 %v2561
        %2641 = vmatprep.subr.bf16.mxu0 0
        %2642 = vmatpush2.bf16.msra.mxu0 %v2576
        %2643 = vmatprep.subr.bf16.mxu0 0
        %2644 = vmatpush2.bf16.msra.mxu0 %v2575
        %2645 = vmatprep.subr.bf16.mxu0 0
        %2646 = vmatpush2.bf16.msra.mxu0 %v2574
        %2647 = vmatprep.subr.bf16.mxu0 0
        %2648 = vmatpush2.bf16.msra.mxu0 %v2573
        %2649 = vmatprep.subr.bf16.mxu0 0
        %2650 = vmatpush2.bf16.msra.mxu0 %v2572
        %2651 = vmatprep.subr.bf16.mxu0 0
        %2652 = vmatpush2.bf16.msra.mxu0 %v2571
        %2653 = vmatprep.subr.bf16.mxu0 0
        %2654 = vmatpush2.bf16.msra.mxu0 %v2570
        %2655 = vmatprep.subr.bf16.mxu0 0
        %2656 = vmatpush2.bf16.msra.mxu0 %v2569
        %2657 = vmatprep.mubr.bf16.mxu0 %v2418
        %2658 = vmatmul.mubr.bf16.gmra.mxu0 %v2417
        %v2659 = vpop.f32.mrf.mxu0
        %v2660 = vadd.f32 0.0, %v2659
        %v2661 = vpop.f32.mrf.mxu0
        %v2662 = vpop.f32.mrf.mxu0
        %v2663 = vadd.f32 0.0, %v2662
        %v2664 = vpop.f32.mrf.mxu0
        %2665 = vdwg.mxu0
        %2666 = vmatprep.subr.bf16.mxu0 0
        %2667 = vmatpush1.bf16.msra.mxu0 %v2584
        %2668 = vmatprep.subr.bf16.mxu0 0
        %2669 = vmatpush1.bf16.msra.mxu0 %v2583
        %2670 = vmatprep.subr.bf16.mxu0 0
        %2671 = vmatpush1.bf16.msra.mxu0 %v2582
        %2672 = vmatprep.subr.bf16.mxu0 0
        %2673 = vmatpush1.bf16.msra.mxu0 %v2581
        %2674 = vmatprep.subr.bf16.mxu0 0
        %2675 = vmatpush1.bf16.msra.mxu0 %v2580
        %2676 = vmatprep.subr.bf16.mxu0 0
        %2677 = vmatpush1.bf16.msra.mxu0 %v2579
        %2678 = vmatprep.subr.bf16.mxu0 0
        %2679 = vmatpush1.bf16.msra.mxu0 %v2578
        %2680 = vmatprep.subr.bf16.mxu0 0
        %2681 = vmatpush1.bf16.msra.mxu0 %v2577
        %2682 = vmatprep.subr.bf16.mxu0 0
        %2683 = vmatpush2.bf16.msra.mxu0 %v2592
        %2684 = vmatprep.subr.bf16.mxu0 0
        %2685 = vmatpush2.bf16.msra.mxu0 %v2591
        %2686 = vmatprep.subr.bf16.mxu0 0
        %2687 = vmatpush2.bf16.msra.mxu0 %v2590
        %2688 = vmatprep.subr.bf16.mxu0 0
        %2689 = vmatpush2.bf16.msra.mxu0 %v2589
        %2690 = vmatprep.subr.bf16.mxu0 0
        %2691 = vmatpush2.bf16.msra.mxu0 %v2588
        %2692 = vmatprep.subr.bf16.mxu0 0
        %2693 = vmatpush2.bf16.msra.mxu0 %v2587
        %2694 = vmatprep.subr.bf16.mxu0 0
        %2695 = vmatpush2.bf16.msra.mxu0 %v2586
        %2696 = vmatprep.subr.bf16.mxu0 0
        %2697 = vmatpush2.bf16.msra.mxu0 %v2585
        %2698 = vmatprep.mubr.bf16.mxu0 %v2420
        %2699 = vmatmul.mubr.bf16.gmra.mxu0 %v2419
        %v2700 = vpop.f32.mrf.mxu0
        %v2701 = vadd.f32 %v2660, %v2700
        %v2702 = vpop.f32.mrf.mxu0
        %v2703 = vpop.f32.mrf.mxu0
        %v2704 = vadd.f32 %v2663, %v2703
        %v2705 = vpop.f32.mrf.mxu0
        %2706 = vdwg.mxu0
        %2707 = vmatprep.subr.bf16.mxu0 0
        %2708 = vmatpush1.bf16.msra.mxu0 %v2568
        %2709 = vmatprep.subr.bf16.mxu0 0
        %2710 = vmatpush1.bf16.msra.mxu0 %v2567
        %2711 = vmatprep.subr.bf16.mxu0 0
        %2712 = vmatpush1.bf16.msra.mxu0 %v2566
        %2713 = vmatprep.subr.bf16.mxu0 0
        %2714 = vmatpush1.bf16.msra.mxu0 %v2565
        %2715 = vmatprep.subr.bf16.mxu0 0
        %2716 = vmatpush1.bf16.msra.mxu0 %v2564
        %2717 = vmatprep.subr.bf16.mxu0 0
        %2718 = vmatpush1.bf16.msra.mxu0 %v2563
        %2719 = vmatprep.subr.bf16.mxu0 0
        %2720 = vmatpush1.bf16.msra.mxu0 %v2562
        %2721 = vmatprep.subr.bf16.mxu0 0
        %2722 = vmatpush1.bf16.msra.mxu0 %v2561
        %2723 = vmatprep.subr.bf16.mxu0 0
        %2724 = vmatpush2.bf16.msra.mxu0 %v2576
        %2725 = vmatprep.subr.bf16.mxu0 0
        %2726 = vmatpush2.bf16.msra.mxu0 %v2575
        %2727 = vmatprep.subr.bf16.mxu0 0
        %2728 = vmatpush2.bf16.msra.mxu0 %v2574
        %2729 = vmatprep.subr.bf16.mxu0 0
        %2730 = vmatpush2.bf16.msra.mxu0 %v2573
        %2731 = vmatprep.subr.bf16.mxu0 0
        %2732 = vmatpush2.bf16.msra.mxu0 %v2572
        %2733 = vmatprep.subr.bf16.mxu0 0
        %2734 = vmatpush2.bf16.msra.mxu0 %v2571
        %2735 = vmatprep.subr.bf16.mxu0 0
        %2736 = vmatpush2.bf16.msra.mxu0 %v2570
        %2737 = vmatprep.subr.bf16.mxu0 0
        %2738 = vmatpush2.bf16.msra.mxu0 %v2569
        %2739 = vmatprep.mubr.bf16.mxu0 %v2430
        %2740 = vmatmul.mubr.bf16.gmra.mxu0 %v2429
        %v2741 = vpop.f32.mrf.mxu0
        %v2742 = vadd.f32 0.0, %v2741
        %v2743 = vpop.f32.mrf.mxu0
        %v2744 = vpop.f32.mrf.mxu0
        %v2745 = vadd.f32 0.0, %v2744
        %v2746 = vpop.f32.mrf.mxu0
        %2747 = vdwg.mxu0
        %2748 = vmatprep.subr.bf16.mxu0 0
        %2749 = vmatpush1.bf16.msra.mxu0 %v2584
        %2750 = vmatprep.subr.bf16.mxu0 0
        %2751 = vmatpush1.bf16.msra.mxu0 %v2583
        %2752 = vmatprep.subr.bf16.mxu0 0
        %2753 = vmatpush1.bf16.msra.mxu0 %v2582
        %2754 = vmatprep.subr.bf16.mxu0 0
        %2755 = vmatpush1.bf16.msra.mxu0 %v2581
        %2756 = vmatprep.subr.bf16.mxu0 0
        %2757 = vmatpush1.bf16.msra.mxu0 %v2580
        %2758 = vmatprep.subr.bf16.mxu0 0
        %2759 = vmatpush1.bf16.msra.mxu0 %v2579
        %2760 = vmatprep.subr.bf16.mxu0 0
        %2761 = vmatpush1.bf16.msra.mxu0 %v2578
        %2762 = vmatprep.subr.bf16.mxu0 0
        %2763 = vmatpush1.bf16.msra.mxu0 %v2577
        %2764 = vmatprep.subr.bf16.mxu0 0
        %2765 = vmatpush2.bf16.msra.mxu0 %v2592
        %2766 = vmatprep.subr.bf16.mxu0 0
        %2767 = vmatpush2.bf16.msra.mxu0 %v2591
        %2768 = vmatprep.subr.bf16.mxu0 0
        %2769 = vmatpush2.bf16.msra.mxu0 %v2590
        %2770 = vmatprep.subr.bf16.mxu0 0
        %2771 = vmatpush2.bf16.msra.mxu0 %v2589
        %2772 = vmatprep.subr.bf16.mxu0 0
        %2773 = vmatpush2.bf16.msra.mxu0 %v2588
        %2774 = vmatprep.subr.bf16.mxu0 0
        %2775 = vmatpush2.bf16.msra.mxu0 %v2587
        %2776 = vmatprep.subr.bf16.mxu0 0
        %2777 = vmatpush2.bf16.msra.mxu0 %v2586
        %2778 = vmatprep.subr.bf16.mxu0 0
        %2779 = vmatpush2.bf16.msra.mxu0 %v2585
        %2780 = vmatprep.mubr.bf16.mxu0 %v2432
        %2781 = vmatmul.mubr.bf16.gmra.mxu0 %v2431
        %v2782 = vpop.f32.mrf.mxu0
        %v2783 = vadd.f32 %v2742, %v2782
        %v2784 = vpop.f32.mrf.mxu0
        %v2785 = vpop.f32.mrf.mxu0
        %v2786 = vadd.f32 %v2745, %v2785
        %v2787 = vpop.f32.mrf.mxu0
        %2788 = vdwg.mxu0
        %v2789 = vmul.f32 %v2701, 0.0025
        %v2790 = vmul.f32 %v2704, 0.0025
        %v2791 = vmul.f32 %v2783, 0.0025
        %v2792 = vmul.f32 %v2786, 0.0025
        %v2793 = vmul.f32 %v2789, %v2789
        %v2794 = vmul.f32 %v2790, %v2790
        %v2795 = vsub.f32 %v2791, %v2793
        %v2796 = vsub.f32 %v2792, %v2794
        %v2797 = vmax.f32 %v2795, 0.0
        %v2798 = vmax.f32 %v2796, 0.0
        %2800 = vset.pattern.permute.xlu0 0
        %2801 = vperm.xlu0 %2800, %v2789
        %v2802 = vpop.permute.xlu0 %2801
        %2805 = vset.pattern.permute.xlu0 0
        %2806 = vperm.xlu0 %2805, %v2790
        %v2807 = vpop.permute.xlu0 %2806
        %v2809 = vsub.f32 %v2343, %v2802
        %v2810 = vsub.f32 %v2344, %v2802
        %v2811 = vsub.f32 %v2345, %v2802
        %v2812 = vsub.f32 %v2346, %v2802
        %v2813 = vsub.f32 %v2347, %v2807
        %v2814 = vsub.f32 %v2348, %v2807
        %v2815 = vsub.f32 %v2349, %v2807
        %v2816 = vsub.f32 %v2350, %v2807
        %v2817 = vadd.f32 %v2797, 1e-05
        %v2818 = vadd.f32 %v2798, 1e-05
        %v2819 = vrsqrt.pop %v2817
        %v2820 = vrsqrt.pop %v2818
        %2822 = vset.pattern.permute.xlu0 0
        %2823 = vperm.xlu0 %2822, %v2819
        %v2824 = vpop.permute.xlu0 %2823
        %2827 = vset.pattern.permute.xlu0 0
        %2828 = vperm.xlu0 %2827, %v2820
        %v2829 = vpop.permute.xlu0 %2828
        %v2831 = vmul.f32 %v2809, %v2824
        %v2832 = vmul.f32 %v2810, %v2824
        %v2833 = vmul.f32 %v2811, %v2824
        %v2834 = vmul.f32 %v2812, %v2824
        %v2835 = vmul.f32 %v2813, %v2829
        %v2836 = vmul.f32 %v2814, %v2829
        %v2837 = vmul.f32 %v2815, %v2829
        %v2838 = vmul.f32 %v2816, %v2829
        %v2840 = vlaneseq
        %v2841 = vshrl.u32 %v2840, 7
        %v2842 = vsub.s32 0, %v2841
        %v2843 = vrot.slane %v2351, %v2842
        %v2844 = vlaneseq
        %v2845 = vshrl.u32 %v2844, 7
        %v2846 = vsub.s32 1, %v2845
        %v2847 = vrot.slane %v2351, %v2846
        %v2848 = vlaneseq
        %v2849 = vshrl.u32 %v2848, 7
        %v2850 = vsub.s32 2, %v2849
        %v2851 = vrot.slane %v2351, %v2850
        %v2852 = vlaneseq
        %v2853 = vshrl.u32 %v2852, 7
        %v2854 = vsub.s32 3, %v2853
        %v2855 = vrot.slane %v2351, %v2854
        %v2860 = vmul.f32 %v2831, %v2843
        %v2861 = vmul.f32 %v2832, %v2847
        %v2862 = vmul.f32 %v2833, %v2851
        %v2863 = vmul.f32 %v2834, %v2855
        %v2864 = vmul.f32 %v2835, %v2843
        %v2865 = vmul.f32 %v2836, %v2847
        %v2866 = vmul.f32 %v2837, %v2851
        %v2867 = vmul.f32 %v2838, %v2855
        %v2869 = vlaneseq
        %v2870 = vshrl.u32 %v2869, 7
        %v2871 = vsub.s32 0, %v2870
        %v2872 = vrot.slane %v2352, %v2871
        %v2873 = vlaneseq
        %v2874 = vshrl.u32 %v2873, 7
        %v2875 = vsub.s32 1, %v2874
        %v2876 = vrot.slane %v2352, %v2875
        %v2877 = vlaneseq
        %v2878 = vshrl.u32 %v2877, 7
        %v2879 = vsub.s32 2, %v2878
        %v2880 = vrot.slane %v2352, %v2879
        %v2881 = vlaneseq
        %v2882 = vshrl.u32 %v2881, 7
        %v2883 = vsub.s32 3, %v2882
        %v2884 = vrot.slane %v2352, %v2883
        %v2889 = vadd.f32 %v2860, %v2872
        %v2890 = vadd.f32 %v2861, %v2876
        %v2891 = vadd.f32 %v2862, %v2880
        %v2892 = vadd.f32 %v2863, %v2884
        %v2893 = vadd.f32 %v2864, %v2872
        %v2894 = vadd.f32 %v2865, %v2876
        %v2895 = vadd.f32 %v2866, %v2880
        %v2896 = vadd.f32 %v2867, %v2884
        %v2897 = vpack.c.bf16 %v2893, %v2889
        %v2898 = vpack.c.bf16 %v2894, %v2890
        %v2899 = vpack.c.bf16 %v2895, %v2891
        %v2900 = vpack.c.bf16 %v2896, %v2892
        %v2901 = vld [vmem:[#allocation10] sm:$0xff]
        %v2902 = vld [vmem:[#allocation10 + $0x8] sm:$0xf]
        %v2903 = vld [vmem:[#allocation10 + $0xc] sm:$0xff]
        %v2904 = vld [vmem:[#allocation10 + $0x14] sm:$0xf]
        %v2905 = vld [vmem:[#allocation10 + $0x18] sm:$0xff]
        %v2906 = vld [vmem:[#allocation10 + $0x20] sm:$0xf]
        %v2907 = vld [vmem:[#allocation10 + $0x24] sm:$0xff]
        %v2908 = vld [vmem:[#allocation10 + $0x2c] sm:$0xf]
        %v2909 = vld [vmem:[#allocation10 + $0x30] sm:$0xff]
        %v2910 = vld [vmem:[#allocation10 + $0x38] sm:$0xf]
        %v2911 = vld [vmem:[#allocation10 + $0x3c] sm:$0xff]
        %v2912 = vld [vmem:[#allocation10 + $0x44] sm:$0xf]
        %v2913 = vld [vmem:[#allocation10 + $0x48] sm:$0xff]
        %v2914 = vld [vmem:[#allocation10 + $0x50] sm:$0xf]
        %v2915 = vld [vmem:[#allocation10 + $0x54] sm:$0xff]
        %v2916 = vld [vmem:[#allocation10 + $0x5c] sm:$0xf]
        %v2917 = vld [vmem:[#allocation10 + $0x60] sm:$0xff]
        %v2918 = vld [vmem:[#allocation10 + $0x68] sm:$0xf]
        %v2919 = vld [vmem:[#allocation10 + $0x6c] sm:$0xff]
        %v2920 = vld [vmem:[#allocation10 + $0x74] sm:$0xf]
        %v2921 = vld [vmem:[#allocation10 + $0x78] sm:$0xff]
        %v2922 = vld [vmem:[#allocation10 + $0x80] sm:$0xf]
        %v2923 = vld [vmem:[#allocation10 + $0x84] sm:$0xff]
        %v2924 = vld [vmem:[#allocation10 + $0x8c] sm:$0xf]
        %v2925 = vld [vmem:[#allocation10 + $0x90] sm:$0xff]
        %v2926 = vld [vmem:[#allocation10 + $0x98] sm:$0xf]
        %v2927 = vld [vmem:[#allocation10 + $0x9c] sm:$0xff]
        %v2928 = vld [vmem:[#allocation10 + $0xa4] sm:$0xf]
        %v2929 = vld [vmem:[#allocation10 + $0xa8] sm:$0xff]
        %v2930 = vld [vmem:[#allocation10 + $0xb0] sm:$0xf]
        %v2931 = vld [vmem:[#allocation10 + $0xb4] sm:$0xff]
        %v2932 = vld [vmem:[#allocation10 + $0xbc] sm:$0xf]
        %v2933 = vld [vmem:[#allocation10 + $0xc0] sm:$0xff]
        %v2934 = vld [vmem:[#allocation10 + $0xc8] sm:$0xf]
        %v2935 = vld [vmem:[#allocation10 + $0xcc] sm:$0xff]
        %v2936 = vld [vmem:[#allocation10 + $0xd4] sm:$0xf]
        %v2937 = vld [vmem:[#allocation10 + $0xd8] sm:$0xff]
        %v2938 = vld [vmem:[#allocation10 + $0xe0] sm:$0xf]
        %v2939 = vld [vmem:[#allocation10 + $0xe4] sm:$0xff]
        %v2940 = vld [vmem:[#allocation10 + $0xec] sm:$0xf]
        %v2941 = vld [vmem:[#allocation10 + $0xf0] sm:$0xff]
        %v2942 = vld [vmem:[#allocation10 + $0xf8] sm:$0xf]
        %v2943 = vld [vmem:[#allocation10 + $0xfc] sm:$0xff]
        %v2944 = vld [vmem:[#allocation10 + $0x104] sm:$0xf]
        %v2945 = vld [vmem:[#allocation10 + $0x108] sm:$0xff]
        %v2946 = vld [vmem:[#allocation10 + $0x110] sm:$0xf]
        %v2947 = vld [vmem:[#allocation10 + $0x114] sm:$0xff]
        %v2948 = vld [vmem:[#allocation10 + $0x11c] sm:$0xf]
        %v2949 = vld [vmem:[#allocation10 + $0x120] sm:$0xff]
        %v2950 = vld [vmem:[#allocation10 + $0x128] sm:$0xf]
        %v2951 = vld [vmem:[#allocation10 + $0x12c] sm:$0xff]
        %v2952 = vld [vmem:[#allocation10 + $0x134] sm:$0xf]
        %v2953 = vld [vmem:[#allocation10 + $0x138] sm:$0xff]
        %v2954 = vld [vmem:[#allocation10 + $0x140] sm:$0xf]
        %v2955 = vld [vmem:[#allocation10 + $0x144] sm:$0xff]
        %v2956 = vld [vmem:[#allocation10 + $0x14c] sm:$0xf]
        %v2957 = vld [vmem:[#allocation10 + $0x150] sm:$0xff]
        %v2958 = vld [vmem:[#allocation10 + $0x158] sm:$0xf]
        %v2959 = vld [vmem:[#allocation10 + $0x15c] sm:$0xff]
        %v2960 = vld [vmem:[#allocation10 + $0x164] sm:$0xf]
        %v2961 = vld [vmem:[#allocation10 + $0x168] sm:$0xff]
        %v2962 = vld [vmem:[#allocation10 + $0x170] sm:$0xf]
        %v2963 = vld [vmem:[#allocation10 + $0x174] sm:$0xff]
        %v2964 = vld [vmem:[#allocation10 + $0x17c] sm:$0xf]
        %v2965 = vld [vmem:[#allocation10 + $0x180] sm:$0xff]
        %v2966 = vld [vmem:[#allocation10 + $0x188] sm:$0xf]
        %v2967 = vld [vmem:[#allocation10 + $0x18c] sm:$0xff]
        %v2968 = vld [vmem:[#allocation10 + $0x194] sm:$0xf]
        %v2969 = vld [vmem:[#allocation10 + $0x198] sm:$0xff]
        %v2970 = vld [vmem:[#allocation10 + $0x1a0] sm:$0xf]
        %v2971 = vld [vmem:[#allocation10 + $0x1a4] sm:$0xff]
        %v2972 = vld [vmem:[#allocation10 + $0x1ac] sm:$0xf]
        %v2973 = vld [vmem:[#allocation10 + $0x1b0] sm:$0xff]
        %v2974 = vld [vmem:[#allocation10 + $0x1b8] sm:$0xf]
        %v2975 = vld [vmem:[#allocation10 + $0x1bc] sm:$0xff]
        %v2976 = vld [vmem:[#allocation10 + $0x1c4] sm:$0xf]
        %v2977 = vld [vmem:[#allocation10 + $0x1c8] sm:$0xff]
        %v2978 = vld [vmem:[#allocation10 + $0x1d0] sm:$0xf]
        %v2979 = vld [vmem:[#allocation10 + $0x1d4] sm:$0xff]
        %v2980 = vld [vmem:[#allocation10 + $0x1dc] sm:$0xf]
        %v2981 = vld [vmem:[#allocation10 + $0x1e0] sm:$0xff]
        %v2982 = vld [vmem:[#allocation10 + $0x1e8] sm:$0xf]
        %v2983 = vld [vmem:[#allocation10 + $0x1ec] sm:$0xff]
        %v2984 = vld [vmem:[#allocation10 + $0x1f4] sm:$0xf]
        %v2985 = vld [vmem:[#allocation10 + $0x1f8] sm:$0xff]
        %v2986 = vld [vmem:[#allocation10 + $0x200] sm:$0xf]
        %v2987 = vld [vmem:[#allocation10 + $0x204] sm:$0xff]
        %v2988 = vld [vmem:[#allocation10 + $0x20c] sm:$0xf]
        %v2989 = vld [vmem:[#allocation10 + $0x210] sm:$0xff]
        %v2990 = vld [vmem:[#allocation10 + $0x218] sm:$0xf]
        %v2991 = vld [vmem:[#allocation10 + $0x21c] sm:$0xff]
        %v2992 = vld [vmem:[#allocation10 + $0x224] sm:$0xf]
        %v2993 = vld [vmem:[#allocation10 + $0x228] sm:$0xff]
        %v2994 = vld [vmem:[#allocation10 + $0x230] sm:$0xf]
        %v2995 = vld [vmem:[#allocation10 + $0x234] sm:$0xff]
        %v2996 = vld [vmem:[#allocation10 + $0x23c] sm:$0xf]
        %v2997 = vld [vmem:[#allocation10 + $0x240] sm:$0xff]
        %v2998 = vld [vmem:[#allocation10 + $0x248] sm:$0xf]
        %v2999 = vld [vmem:[#allocation10 + $0x24c] sm:$0xff]
        %v3000 = vld [vmem:[#allocation10 + $0x254] sm:$0xf]
        %v3001 = vld [vmem:[#allocation10 + $0x258] sm:$0xff]
        %v3002 = vld [vmem:[#allocation10 + $0x260] sm:$0xf]
        %v3003 = vld [vmem:[#allocation10 + $0x264] sm:$0xff]
        %v3004 = vld [vmem:[#allocation10 + $0x26c] sm:$0xf]
        %v3005 = vld [vmem:[#allocation10 + $0x270] sm:$0xff]
        %v3006 = vld [vmem:[#allocation10 + $0x278] sm:$0xf]
        %v3007 = vld [vmem:[#allocation10 + $0x27c] sm:$0xff]
        %v3008 = vld [vmem:[#allocation10 + $0x284] sm:$0xf]
        %v3009 = vld [vmem:[#allocation10 + $0x288] sm:$0xff]
        %v3010 = vld [vmem:[#allocation10 + $0x290] sm:$0xf]
        %v3011 = vld [vmem:[#allocation10 + $0x294] sm:$0xff]
        %v3012 = vld [vmem:[#allocation10 + $0x29c] sm:$0xf]
        %v3013 = vld [vmem:[#allocation10 + $0x2a0] sm:$0xff]
        %v3014 = vld [vmem:[#allocation10 + $0x2a8] sm:$0xf]
        %v3015 = vld [vmem:[#allocation10 + $0x2ac] sm:$0xff]
        %v3016 = vld [vmem:[#allocation10 + $0x2b4] sm:$0xf]
        %v3017 = vld [vmem:[#allocation10 + $0x2b8] sm:$0xff]
        %v3018 = vld [vmem:[#allocation10 + $0x2c0] sm:$0xf]
        %v3019 = vld [vmem:[#allocation10 + $0x2c4] sm:$0xff]
        %v3020 = vld [vmem:[#allocation10 + $0x2cc] sm:$0xf]
        %v3021 = vld [vmem:[#allocation10 + $0x2d0] sm:$0xff]
        %v3022 = vld [vmem:[#allocation10 + $0x2d8] sm:$0xf]
        %v3023 = vld [vmem:[#allocation10 + $0x2dc] sm:$0xff]
        %v3024 = vld [vmem:[#allocation10 + $0x2e4] sm:$0xf]
        %v3025 = vld [vmem:[#allocation10 + $0x2e8] sm:$0xff]
        %v3026 = vld [vmem:[#allocation10 + $0x2f0] sm:$0xf]
        %v3027 = vld [vmem:[#allocation10 + $0x2f4] sm:$0xff]
        %v3028 = vld [vmem:[#allocation10 + $0x2fc] sm:$0xf]
        %v3029 = vld [vmem:[%s12] sm:$0x7]
        %v3031 = vlaneseq
        %v3032 = vshrl.u32 %v3031, 7
        %v3033 = vsub.s32 0, %v3032
        %v3034 = vrot.slane %v3029, %v3033
        %v3035 = vlaneseq
        %v3036 = vshrl.u32 %v3035, 7
        %v3037 = vsub.s32 1, %v3036
        %v3038 = vrot.slane %v3029, %v3037
        %v3039 = vlaneseq
        %v3040 = vshrl.u32 %v3039, 7
        %v3041 = vsub.s32 2, %v3040
        %v3042 = vrot.slane %v3029, %v3041
        %v3174 = vunpack.c.l.b16 %v2901
        %v3175 = vunpack.c.h.b16 %v2901
        %v3176 = vunpack.c.l.b16 %v2902
        %v3177 = vunpack.c.l.b16 %v2903
        %v3178 = vunpack.c.h.b16 %v2903
        %v3179 = vunpack.c.l.b16 %v2904
        %v3180 = vunpack.c.l.b16 %v2905
        %v3181 = vunpack.c.h.b16 %v2905
        %v3182 = vunpack.c.l.b16 %v2906
        %v3183 = vunpack.c.l.b16 %v2907
        %v3184 = vunpack.c.h.b16 %v2907
        %v3185 = vunpack.c.l.b16 %v2908
        %v3186 = vunpack.c.l.b16 %v2909
        %v3187 = vunpack.c.h.b16 %v2909
        %v3188 = vunpack.c.l.b16 %v2910
        %v3189 = vunpack.c.l.b16 %v2911
        %v3190 = vunpack.c.h.b16 %v2911
        %v3191 = vunpack.c.l.b16 %v2912
        %v3192 = vunpack.c.l.b16 %v2913
        %v3193 = vunpack.c.h.b16 %v2913
        %v3194 = vunpack.c.l.b16 %v2914
        %v3195 = vunpack.c.l.b16 %v2915
        %v3196 = vunpack.c.h.b16 %v2915
        %v3197 = vunpack.c.l.b16 %v2916
        %v3198 = vunpack.c.l.b16 %v2917
        %v3199 = vunpack.c.h.b16 %v2917
        %v3200 = vunpack.c.l.b16 %v2918
        %v3201 = vunpack.c.l.b16 %v2919
        %v3202 = vunpack.c.h.b16 %v2919
        %v3203 = vunpack.c.l.b16 %v2920
        %v3204 = vunpack.c.l.b16 %v2921
        %v3205 = vunpack.c.h.b16 %v2921
        %v3206 = vunpack.c.l.b16 %v2922
        %v3207 = vunpack.c.l.b16 %v2923
        %v3208 = vunpack.c.h.b16 %v2923
        %v3209 = vunpack.c.l.b16 %v2924
        %v3210 = vunpack.c.l.b16 %v2925
        %v3211 = vunpack.c.h.b16 %v2925
        %v3212 = vunpack.c.l.b16 %v2926
        %v3213 = vunpack.c.l.b16 %v2927
        %v3214 = vunpack.c.h.b16 %v2927
        %v3215 = vunpack.c.l.b16 %v2928
        %v3216 = vunpack.c.l.b16 %v2929
        %v3217 = vunpack.c.h.b16 %v2929
        %v3218 = vunpack.c.l.b16 %v2930
        %v3219 = vunpack.c.l.b16 %v2931
        %v3220 = vunpack.c.h.b16 %v2931
        %v3221 = vunpack.c.l.b16 %v2932
        %v3222 = vunpack.c.l.b16 %v2933
        %v3223 = vunpack.c.h.b16 %v2933
        %v3224 = vunpack.c.l.b16 %v2934
        %v3225 = vunpack.c.l.b16 %v2935
        %v3226 = vunpack.c.h.b16 %v2935
        %v3227 = vunpack.c.l.b16 %v2936
        %v3228 = vunpack.c.l.b16 %v2937
        %v3229 = vunpack.c.h.b16 %v2937
        %v3230 = vunpack.c.l.b16 %v2938
        %v3231 = vunpack.c.l.b16 %v2939
        %v3232 = vunpack.c.h.b16 %v2939
        %v3233 = vunpack.c.l.b16 %v2940
        %v3234 = vunpack.c.l.b16 %v2941
        %v3235 = vunpack.c.h.b16 %v2941
        %v3236 = vunpack.c.l.b16 %v2942
        %v3237 = vunpack.c.l.b16 %v2943
        %v3238 = vunpack.c.h.b16 %v2943
        %v3239 = vunpack.c.l.b16 %v2944
        %v3240 = vunpack.c.l.b16 %v2945
        %v3241 = vunpack.c.h.b16 %v2945
        %v3242 = vunpack.c.l.b16 %v2946
        %v3243 = vunpack.c.l.b16 %v2947
        %v3244 = vunpack.c.h.b16 %v2947
        %v3245 = vunpack.c.l.b16 %v2948
        %v3246 = vunpack.c.l.b16 %v2949
        %v3247 = vunpack.c.h.b16 %v2949
        %v3248 = vunpack.c.l.b16 %v2950
        %v3249 = vunpack.c.l.b16 %v2951
        %v3250 = vunpack.c.h.b16 %v2951
        %v3251 = vunpack.c.l.b16 %v2952
        %v3252 = vunpack.c.l.b16 %v2953
        %v3253 = vunpack.c.h.b16 %v2953
        %v3254 = vunpack.c.l.b16 %v2954
        %v3255 = vunpack.c.l.b16 %v2955
        %v3256 = vunpack.c.h.b16 %v2955
        %v3257 = vunpack.c.l.b16 %v2956
        %v3258 = vunpack.c.l.b16 %v2957
        %v3259 = vunpack.c.h.b16 %v2957
        %v3260 = vunpack.c.l.b16 %v2958
        %v3261 = vunpack.c.l.b16 %v2959
        %v3262 = vunpack.c.h.b16 %v2959
        %v3263 = vunpack.c.l.b16 %v2960
        %v3264 = vunpack.c.l.b16 %v2961
        %v3265 = vunpack.c.h.b16 %v2961
        %v3266 = vunpack.c.l.b16 %v2962
        %v3267 = vunpack.c.l.b16 %v2963
        %v3268 = vunpack.c.h.b16 %v2963
        %v3269 = vunpack.c.l.b16 %v2964
        %v3270 = vunpack.c.l.b16 %v2965
        %v3271 = vunpack.c.h.b16 %v2965
        %v3272 = vunpack.c.l.b16 %v2966
        %v3273 = vunpack.c.l.b16 %v2967
        %v3274 = vunpack.c.h.b16 %v2967
        %v3275 = vunpack.c.l.b16 %v2968
        %v3276 = vunpack.c.l.b16 %v2969
        %v3277 = vunpack.c.h.b16 %v2969
        %v3278 = vunpack.c.l.b16 %v2970
        %v3279 = vunpack.c.l.b16 %v2971
        %v3280 = vunpack.c.h.b16 %v2971
        %v3281 = vunpack.c.l.b16 %v2972
        %v3282 = vunpack.c.l.b16 %v2973
        %v3283 = vunpack.c.h.b16 %v2973
        %v3284 = vunpack.c.l.b16 %v2974
        %v3285 = vunpack.c.l.b16 %v2975
        %v3286 = vunpack.c.h.b16 %v2975
        %v3287 = vunpack.c.l.b16 %v2976
        %v3288 = vunpack.c.l.b16 %v2977
        %v3289 = vunpack.c.h.b16 %v2977
        %v3290 = vunpack.c.l.b16 %v2978
        %v3291 = vunpack.c.l.b16 %v2979
        %v3292 = vunpack.c.h.b16 %v2979
        %v3293 = vunpack.c.l.b16 %v2980
        %v3294 = vunpack.c.l.b16 %v2981
        %v3295 = vunpack.c.h.b16 %v2981
        %v3296 = vunpack.c.l.b16 %v2982
        %v3297 = vunpack.c.l.b16 %v2983
        %v3298 = vunpack.c.h.b16 %v2983
        %v3299 = vunpack.c.l.b16 %v2984
        %v3300 = vunpack.c.l.b16 %v2985
        %v3301 = vunpack.c.h.b16 %v2985
        %v3302 = vunpack.c.l.b16 %v2986
        %v3303 = vunpack.c.l.b16 %v2987
        %v3304 = vunpack.c.h.b16 %v2987
        %v3305 = vunpack.c.l.b16 %v2988
        %v3306 = vunpack.c.l.b16 %v2989
        %v3307 = vunpack.c.h.b16 %v2989
        %v3308 = vunpack.c.l.b16 %v2990
        %v3309 = vunpack.c.l.b16 %v2991
        %v3310 = vunpack.c.h.b16 %v2991
        %v3311 = vunpack.c.l.b16 %v2992
        %v3312 = vunpack.c.l.b16 %v2993
        %v3313 = vunpack.c.h.b16 %v2993
        %v3314 = vunpack.c.l.b16 %v2994
        %v3315 = vunpack.c.l.b16 %v2995
        %v3316 = vunpack.c.h.b16 %v2995
        %v3317 = vunpack.c.l.b16 %v2996
        %v3318 = vunpack.c.l.b16 %v2997
        %v3319 = vunpack.c.h.b16 %v2997
        %v3320 = vunpack.c.l.b16 %v2998
        %v3321 = vunpack.c.l.b16 %v2999
        %v3322 = vunpack.c.h.b16 %v2999
        %v3323 = vunpack.c.l.b16 %v3000
        %v3324 = vunpack.c.l.b16 %v3001
        %v3325 = vunpack.c.h.b16 %v3001
        %v3326 = vunpack.c.l.b16 %v3002
        %v3327 = vunpack.c.l.b16 %v3003
        %v3328 = vunpack.c.h.b16 %v3003
        %v3329 = vunpack.c.l.b16 %v3004
        %v3330 = vunpack.c.l.b16 %v3005
        %v3331 = vunpack.c.h.b16 %v3005
        %v3332 = vunpack.c.l.b16 %v3006
        %v3333 = vunpack.c.l.b16 %v3007
        %v3334 = vunpack.c.h.b16 %v3007
        %v3335 = vunpack.c.l.b16 %v3008
        %v3336 = vunpack.c.l.b16 %v3009
        %v3337 = vunpack.c.h.b16 %v3009
        %v3338 = vunpack.c.l.b16 %v3010
        %v3339 = vunpack.c.l.b16 %v3011
        %v3340 = vunpack.c.h.b16 %v3011
        %v3341 = vunpack.c.l.b16 %v3012
        %v3342 = vunpack.c.l.b16 %v3013
        %v3343 = vunpack.c.h.b16 %v3013
        %v3344 = vunpack.c.l.b16 %v3014
        %v3345 = vunpack.c.l.b16 %v3015
        %v3346 = vunpack.c.h.b16 %v3015
        %v3347 = vunpack.c.l.b16 %v3016
        %v3348 = vunpack.c.l.b16 %v3017
        %v3349 = vunpack.c.h.b16 %v3017
        %v3350 = vunpack.c.l.b16 %v3018
        %v3351 = vunpack.c.l.b16 %v3019
        %v3352 = vunpack.c.h.b16 %v3019
        %v3353 = vunpack.c.l.b16 %v3020
        %v3354 = vunpack.c.l.b16 %v3021
        %v3355 = vunpack.c.h.b16 %v3021
        %v3356 = vunpack.c.l.b16 %v3022
        %v3357 = vunpack.c.l.b16 %v3023
        %v3358 = vunpack.c.h.b16 %v3023
        %v3359 = vunpack.c.l.b16 %v3024
        %v3360 = vunpack.c.l.b16 %v3025
        %v3361 = vunpack.c.h.b16 %v3025
        %v3362 = vunpack.c.l.b16 %v3026
        %v3363 = vunpack.c.l.b16 %v3027
        %v3364 = vunpack.c.h.b16 %v3027
        %v3365 = vunpack.c.l.b16 %v3028
        %v3366 = vpack.c.b16 %v3177, %v3174
        %v3367 = vpack.c.b16 %v3178, %v3175
        %v3368 = vpack.c.b16 %v3179, %v3176
        %v3369 = vpack.c.b16 %v3183, %v3180
        %v3370 = vpack.c.b16 %v3184, %v3181
        %v3371 = vpack.c.b16 %v3185, %v3182
        %v3372 = vpack.c.b16 %v3189, %v3186
        %v3373 = vpack.c.b16 %v3190, %v3187
        %v3374 = vpack.c.b16 %v3191, %v3188
        %v3375 = vpack.c.b16 %v3195, %v3192
        %v3376 = vpack.c.b16 %v3196, %v3193
        %v3377 = vpack.c.b16 %v3197, %v3194
        %v3378 = vpack.c.b16 %v3201, %v3198
        %v3379 = vpack.c.b16 %v3202, %v3199
        %v3380 = vpack.c.b16 %v3203, %v3200
        %v3381 = vpack.c.b16 %v3207, %v3204
        %v3382 = vpack.c.b16 %v3208, %v3205
        %v3383 = vpack.c.b16 %v3209, %v3206
        %v3384 = vpack.c.b16 %v3213, %v3210
        %v3385 = vpack.c.b16 %v3214, %v3211
        %v3386 = vpack.c.b16 %v3215, %v3212
        %v3387 = vpack.c.b16 %v3219, %v3216
        %v3388 = vpack.c.b16 %v3220, %v3217
        %v3389 = vpack.c.b16 %v3221, %v3218
        %v3390 = vpack.c.b16 %v3225, %v3222
        %v3391 = vpack.c.b16 %v3226, %v3223
        %v3392 = vpack.c.b16 %v3227, %v3224
        %v3393 = vpack.c.b16 %v3231, %v3228
        %v3394 = vpack.c.b16 %v3232, %v3229
        %v3395 = vpack.c.b16 %v3233, %v3230
        %v3396 = vpack.c.b16 %v3237, %v3234
        %v3397 = vpack.c.b16 %v3238, %v3235
        %v3398 = vpack.c.b16 %v3239, %v3236
        %v3399 = vpack.c.b16 %v3243, %v3240
        %v3400 = vpack.c.b16 %v3244, %v3241
        %v3401 = vpack.c.b16 %v3245, %v3242
        %v3402 = vpack.c.b16 %v3249, %v3246
        %v3403 = vpack.c.b16 %v3250, %v3247
        %v3404 = vpack.c.b16 %v3251, %v3248
        %v3405 = vpack.c.b16 %v3255, %v3252
        %v3406 = vpack.c.b16 %v3256, %v3253
        %v3407 = vpack.c.b16 %v3257, %v3254
        %v3408 = vpack.c.b16 %v3261, %v3258
        %v3409 = vpack.c.b16 %v3262, %v3259
        %v3410 = vpack.c.b16 %v3263, %v3260
        %v3411 = vpack.c.b16 %v3267, %v3264
        %v3412 = vpack.c.b16 %v3268, %v3265
        %v3413 = vpack.c.b16 %v3269, %v3266
        %v3414 = vpack.c.b16 %v3273, %v3270
        %v3415 = vpack.c.b16 %v3274, %v3271
        %v3416 = vpack.c.b16 %v3275, %v3272
        %v3417 = vpack.c.b16 %v3279, %v3276
        %v3418 = vpack.c.b16 %v3280, %v3277
        %v3419 = vpack.c.b16 %v3281, %v3278
        %v3420 = vpack.c.b16 %v3285, %v3282
        %v3421 = vpack.c.b16 %v3286, %v3283
        %v3422 = vpack.c.b16 %v3287, %v3284
        %v3423 = vpack.c.b16 %v3291, %v3288
        %v3424 = vpack.c.b16 %v3292, %v3289
        %v3425 = vpack.c.b16 %v3293, %v3290
        %v3426 = vpack.c.b16 %v3297, %v3294
        %v3427 = vpack.c.b16 %v3298, %v3295
        %v3428 = vpack.c.b16 %v3299, %v3296
        %v3429 = vpack.c.b16 %v3303, %v3300
        %v3430 = vpack.c.b16 %v3304, %v3301
        %v3431 = vpack.c.b16 %v3305, %v3302
        %v3432 = vpack.c.b16 %v3309, %v3306
        %v3433 = vpack.c.b16 %v3310, %v3307
        %v3434 = vpack.c.b16 %v3311, %v3308
        %v3435 = vpack.c.b16 %v3315, %v3312
        %v3436 = vpack.c.b16 %v3316, %v3313
        %v3437 = vpack.c.b16 %v3317, %v3314
        %v3438 = vpack.c.b16 %v3321, %v3318
        %v3439 = vpack.c.b16 %v3322, %v3319
        %v3440 = vpack.c.b16 %v3323, %v3320
        %v3441 = vpack.c.b16 %v3327, %v3324
        %v3442 = vpack.c.b16 %v3328, %v3325
        %v3443 = vpack.c.b16 %v3329, %v3326
        %v3444 = vpack.c.b16 %v3333, %v3330
        %v3445 = vpack.c.b16 %v3334, %v3331
        %v3446 = vpack.c.b16 %v3335, %v3332
        %v3447 = vpack.c.b16 %v3339, %v3336
        %v3448 = vpack.c.b16 %v3340, %v3337
        %v3449 = vpack.c.b16 %v3341, %v3338
        %v3450 = vpack.c.b16 %v3345, %v3342
        %v3451 = vpack.c.b16 %v3346, %v3343
        %v3452 = vpack.c.b16 %v3347, %v3344
        %v3453 = vpack.c.b16 %v3351, %v3348
        %v3454 = vpack.c.b16 %v3352, %v3349
        %v3455 = vpack.c.b16 %v3353, %v3350
        %v3456 = vpack.c.b16 %v3357, %v3354
        %v3457 = vpack.c.b16 %v3358, %v3355
        %v3458 = vpack.c.b16 %v3359, %v3356
        %v3459 = vpack.c.b16 %v3363, %v3360
        %v3460 = vpack.c.b16 %v3364, %v3361
        %v3461 = vpack.c.b16 %v3365, %v3362
        %3558 = vmatprep.subr.bf16.mxu0 %v3388
        %3559 = vmatpush1.bf16.msra.mxu0 %v3387
        %3560 = vmatprep.subr.bf16.mxu0 %v3385
        %3561 = vmatpush1.bf16.msra.mxu0 %v3384
        %3562 = vmatprep.subr.bf16.mxu0 %v3382
        %3563 = vmatpush1.bf16.msra.mxu0 %v3381
        %3564 = vmatprep.subr.bf16.mxu0 %v3379
        %3565 = vmatpush1.bf16.msra.mxu0 %v3378
        %3566 = vmatprep.subr.bf16.mxu0 %v3376
        %3567 = vmatpush1.bf16.msra.mxu0 %v3375
        %3568 = vmatprep.subr.bf16.mxu0 %v3373
        %3569 = vmatpush1.bf16.msra.mxu0 %v3372
        %3570 = vmatprep.subr.bf16.mxu0 %v3370
        %3571 = vmatpush1.bf16.msra.mxu0 %v3369
        %3572 = vmatprep.subr.bf16.mxu0 %v3367
        %3573 = vmatpush1.bf16.msra.mxu0 %v3366
        %3574 = vmatprep.subr.bf16.mxu0 %v3412
        %3575 = vmatpush2.bf16.msra.mxu0 %v3411
        %3576 = vmatprep.subr.bf16.mxu0 %v3409
        %3577 = vmatpush2.bf16.msra.mxu0 %v3408
        %3578 = vmatprep.subr.bf16.mxu0 %v3406
        %3579 = vmatpush2.bf16.msra.mxu0 %v3405
        %3580 = vmatprep.subr.bf16.mxu0 %v3403
        %3581 = vmatpush2.bf16.msra.mxu0 %v3402
        %3582 = vmatprep.subr.bf16.mxu0 %v3400
        %3583 = vmatpush2.bf16.msra.mxu0 %v3399
        %3584 = vmatprep.subr.bf16.mxu0 %v3397
        %3585 = vmatpush2.bf16.msra.mxu0 %v3396
        %3586 = vmatprep.subr.bf16.mxu0 %v3394
        %3587 = vmatpush2.bf16.msra.mxu0 %v3393
        %3588 = vmatprep.subr.bf16.mxu0 %v3391
        %3589 = vmatpush2.bf16.msra.mxu0 %v3390
        %3590 = vmatprep.mubr.bf16.mxu0 %v2898
        %3591 = vmatmul.mubr.bf16.gmra.mxu0 %v2897
        %v3592 = vpop.f32.mrf.mxu0
        %v3593 = vadd.f32 %v3034, %v3592
        %v3594 = vpop.f32.mrf.mxu0
        %v3595 = vadd.f32 %v3038, %v3594
        %v3596 = vpop.f32.mrf.mxu0
        %v3597 = vadd.f32 %v3034, %v3596
        %v3598 = vpop.f32.mrf.mxu0
        %v3599 = vadd.f32 %v3038, %v3598
        %3600 = vdwg.mxu0
        %3601 = vmatprep.subr.bf16.mxu0 %v3436
        %3602 = vmatpush1.bf16.msra.mxu0 %v3435
        %3603 = vmatprep.subr.bf16.mxu0 %v3433
        %3604 = vmatpush1.bf16.msra.mxu0 %v3432
        %3605 = vmatprep.subr.bf16.mxu0 %v3430
        %3606 = vmatpush1.bf16.msra.mxu0 %v3429
        %3607 = vmatprep.subr.bf16.mxu0 %v3427
        %3608 = vmatpush1.bf16.msra.mxu0 %v3426
        %3609 = vmatprep.subr.bf16.mxu0 %v3424
        %3610 = vmatpush1.bf16.msra.mxu0 %v3423
        %3611 = vmatprep.subr.bf16.mxu0 %v3421
        %3612 = vmatpush1.bf16.msra.mxu0 %v3420
        %3613 = vmatprep.subr.bf16.mxu0 %v3418
        %3614 = vmatpush1.bf16.msra.mxu0 %v3417
        %3615 = vmatprep.subr.bf16.mxu0 %v3415
        %3616 = vmatpush1.bf16.msra.mxu0 %v3414
        %3617 = vmatprep.subr.bf16.mxu0 %v3460
        %3618 = vmatpush2.bf16.msra.mxu0 %v3459
        %3619 = vmatprep.subr.bf16.mxu0 %v3457
        %3620 = vmatpush2.bf16.msra.mxu0 %v3456
        %3621 = vmatprep.subr.bf16.mxu0 %v3454
        %3622 = vmatpush2.bf16.msra.mxu0 %v3453
        %3623 = vmatprep.subr.bf16.mxu0 %v3451
        %3624 = vmatpush2.bf16.msra.mxu0 %v3450
        %3625 = vmatprep.subr.bf16.mxu0 %v3448
        %3626 = vmatpush2.bf16.msra.mxu0 %v3447
        %3627 = vmatprep.subr.bf16.mxu0 %v3445
        %3628 = vmatpush2.bf16.msra.mxu0 %v3444
        %3629 = vmatprep.subr.bf16.mxu0 %v3442
        %3630 = vmatpush2.bf16.msra.mxu0 %v3441
        %3631 = vmatprep.subr.bf16.mxu0 %v3439
        %3632 = vmatpush2.bf16.msra.mxu0 %v3438
        %3633 = vmatprep.mubr.bf16.mxu0 %v2900
        %3634 = vmatmul.mubr.bf16.gmra.mxu0 %v2899
        %v3635 = vpop.f32.mrf.mxu0
        %v3636 = vadd.f32 %v3593, %v3635
        %v3637 = vpop.f32.mrf.mxu0
        %v3638 = vadd.f32 %v3595, %v3637
        %v3639 = vpop.f32.mrf.mxu0
        %v3640 = vadd.f32 %v3597, %v3639
        %v3641 = vpop.f32.mrf.mxu0
        %v3642 = vadd.f32 %v3599, %v3641
        %3643 = vdwg.mxu0
        %3644 = vmatprep.subr.bf16.mxu0 0
        %3645 = vmatpush1.bf16.msra.mxu0 %v3389
        %3646 = vmatprep.subr.bf16.mxu0 0
        %3647 = vmatpush1.bf16.msra.mxu0 %v3386
        %3648 = vmatprep.subr.bf16.mxu0 0
        %3649 = vmatpush1.bf16.msra.mxu0 %v3383
        %3650 = vmatprep.subr.bf16.mxu0 0
        %3651 = vmatpush1.bf16.msra.mxu0 %v3380
        %3652 = vmatprep.subr.bf16.mxu0 0
        %3653 = vmatpush1.bf16.msra.mxu0 %v3377
        %3654 = vmatprep.subr.bf16.mxu0 0
        %3655 = vmatpush1.bf16.msra.mxu0 %v3374
        %3656 = vmatprep.subr.bf16.mxu0 0
        %3657 = vmatpush1.bf16.msra.mxu0 %v3371
        %3658 = vmatprep.subr.bf16.mxu0 0
        %3659 = vmatpush1.bf16.msra.mxu0 %v3368
        %3660 = vmatprep.subr.bf16.mxu0 0
        %3661 = vmatpush2.bf16.msra.mxu0 %v3413
        %3662 = vmatprep.subr.bf16.mxu0 0
        %3663 = vmatpush2.bf16.msra.mxu0 %v3410
        %3664 = vmatprep.subr.bf16.mxu0 0
        %3665 = vmatpush2.bf16.msra.mxu0 %v3407
        %3666 = vmatprep.subr.bf16.mxu0 0
        %3667 = vmatpush2.bf16.msra.mxu0 %v3404
        %3668 = vmatprep.subr.bf16.mxu0 0
        %3669 = vmatpush2.bf16.msra.mxu0 %v3401
        %3670 = vmatprep.subr.bf16.mxu0 0
        %3671 = vmatpush2.bf16.msra.mxu0 %v3398
        %3672 = vmatprep.subr.bf16.mxu0 0
        %3673 = vmatpush2.bf16.msra.mxu0 %v3395
        %3674 = vmatprep.subr.bf16.mxu0 0
        %3675 = vmatpush2.bf16.msra.mxu0 %v3392
        %3676 = vmatprep.mubr.bf16.mxu0 %v2898
        %3677 = vmatmul.mubr.bf16.gmra.mxu0 %v2897
        %v3678 = vpop.f32.mrf.mxu0
        %v3679 = vadd.f32 %v3042, %v3678
        %v3680 = vpop.f32.mrf.mxu0
        %v3681 = vpop.f32.mrf.mxu0
        %v3682 = vadd.f32 %v3042, %v3681
        %v3683 = vpop.f32.mrf.mxu0
        %3684 = vdwg.mxu0
        %3685 = vmatprep.subr.bf16.mxu0 0
        %3686 = vmatpush1.bf16.msra.mxu0 %v3437
        %3687 = vmatprep.subr.bf16.mxu0 0
        %3688 = vmatpush1.bf16.msra.mxu0 %v3434
        %3689 = vmatprep.subr.bf16.mxu0 0
        %3690 = vmatpush1.bf16.msra.mxu0 %v3431
        %3691 = vmatprep.subr.bf16.mxu0 0
        %3692 = vmatpush1.bf16.msra.mxu0 %v3428
        %3693 = vmatprep.subr.bf16.mxu0 0
        %3694 = vmatpush1.bf16.msra.mxu0 %v3425
        %3695 = vmatprep.subr.bf16.mxu0 0
        %3696 = vmatpush1.bf16.msra.mxu0 %v3422
        %3697 = vmatprep.subr.bf16.mxu0 0
        %3698 = vmatpush1.bf16.msra.mxu0 %v3419
        %3699 = vmatprep.subr.bf16.mxu0 0
        %3700 = vmatpush1.bf16.msra.mxu0 %v3416
        %3701 = vmatprep.subr.bf16.mxu0 0
        %3702 = vmatpush2.bf16.msra.mxu0 %v3461
        %3703 = vmatprep.subr.bf16.mxu0 0
        %3704 = vmatpush2.bf16.msra.mxu0 %v3458
        %3705 = vmatprep.subr.bf16.mxu0 0
        %3706 = vmatpush2.bf16.msra.mxu0 %v3455
        %3707 = vmatprep.subr.bf16.mxu0 0
        %3708 = vmatpush2.bf16.msra.mxu0 %v3452
        %3709 = vmatprep.subr.bf16.mxu0 0
        %3710 = vmatpush2.bf16.msra.mxu0 %v3449
        %3711 = vmatprep.subr.bf16.mxu0 0
        %3712 = vmatpush2.bf16.msra.mxu0 %v3446
        %3713 = vmatprep.subr.bf16.mxu0 0
        %3714 = vmatpush2.bf16.msra.mxu0 %v3443
        %3715 = vmatprep.subr.bf16.mxu0 0
        %3716 = vmatpush2.bf16.msra.mxu0 %v3440
        %3717 = vmatprep.mubr.bf16.mxu0 %v2900
        %3718 = vmatmul.mubr.bf16.gmra.mxu0 %v2899
        %v3719 = vpop.f32.mrf.mxu0
        %v3720 = vadd.f32 %v3679, %v3719
        %v3721 = vpop.f32.mrf.mxu0
        %v3722 = vpop.f32.mrf.mxu0
        %v3723 = vadd.f32 %v3682, %v3722
        %v3724 = vpop.f32.mrf.mxu0
        %3725 = vdwg.mxu0
        %v3726 = vmax.f32 %v3636, 0.0
        %v3727 = vmax.f32 %v3638, 0.0
        %v3728 = vmax.f32 %v3720, 0.0
        %v3729 = vmax.f32 %v3640, 0.0
        %v3730 = vmax.f32 %v3642, 0.0
        %v3731 = vmax.f32 %v3723, 0.0
        %v3732 = vld [vmem:[%s13] sm:$0x7]
        %v3733 = vld [vmem:[%s14] sm:$0x7]
        %v3734 = vld [vmem:[#allocation11] sm:$0xf]
        %v3735 = vld [vmem:[#allocation11 + $0x4] sm:$0xf]
        %v3736 = vld [vmem:[#allocation11 + $0x8] sm:$0xf]
        %v3737 = vld [vmem:[#allocation11 + $0xc] sm:$0xf]
        %v3738 = vld [vmem:[#allocation11 + $0x10] sm:$0xf]
        %v3739 = vld [vmem:[#allocation11 + $0x14] sm:$0xf]
        %v3740 = vld [vmem:[#allocation11 + $0x18] sm:$0xf]
        %v3741 = vld [vmem:[#allocation11 + $0x1c] sm:$0xf]
        %v3742 = vld [vmem:[#allocation11 + $0x20] sm:$0xf]
        %v3743 = vld [vmem:[#allocation11 + $0x24] sm:$0xf]
        %v3744 = vld [vmem:[#allocation11 + $0x28] sm:$0xf]
        %v3745 = vld [vmem:[#allocation11 + $0x2c] sm:$0xf]
        %v3746 = vld [vmem:[#allocation11 + $0x30] sm:$0xf]
        %v3747 = vld [vmem:[#allocation11 + $0x34] sm:$0xf]
        %v3748 = vld [vmem:[#allocation11 + $0x38] sm:$0xf]
        %v3749 = vld [vmem:[#allocation11 + $0x3c] sm:$0xf]
        %v3750 = vld [vmem:[#allocation11 + $0x40] sm:$0xf]
        %v3751 = vld [vmem:[#allocation11 + $0x44] sm:$0xf]
        %v3752 = vld [vmem:[#allocation11 + $0x48] sm:$0xf]
        %v3753 = vld [vmem:[#allocation11 + $0x4c] sm:$0xf]
        %v3754 = vld [vmem:[#allocation11 + $0x50] sm:$0xf]
        %v3755 = vld [vmem:[#allocation11 + $0x54] sm:$0xf]
        %v3756 = vld [vmem:[#allocation11 + $0x58] sm:$0xf]
        %v3757 = vld [vmem:[#allocation11 + $0x5c] sm:$0xf]
        %v3758 = vld [vmem:[#allocation11 + $0x60] sm:$0xf]
        %v3759 = vld [vmem:[#allocation11 + $0x64] sm:$0xf]
        %v3760 = vld [vmem:[#allocation11 + $0x68] sm:$0xf]
        %v3761 = vld [vmem:[#allocation11 + $0x6c] sm:$0xf]
        %v3762 = vld [vmem:[#allocation11 + $0x70] sm:$0xf]
        %v3763 = vld [vmem:[#allocation11 + $0x74] sm:$0xf]
        %v3764 = vld [vmem:[#allocation11 + $0x78] sm:$0xf]
        %v3765 = vld [vmem:[#allocation11 + $0x7c] sm:$0xf]
        %v3766 = vld [vmem:[#allocation11 + $0x80] sm:$0xf]
        %v3767 = vld [vmem:[#allocation11 + $0x84] sm:$0xf]
        %v3768 = vld [vmem:[#allocation11 + $0x88] sm:$0xf]
        %v3769 = vld [vmem:[#allocation11 + $0x8c] sm:$0xf]
        %v3770 = vld [vmem:[#allocation11 + $0x90] sm:$0xf]
        %v3771 = vld [vmem:[#allocation11 + $0x94] sm:$0xf]
        %v3772 = vld [vmem:[#allocation11 + $0x98] sm:$0xf]
        %v3773 = vld [vmem:[#allocation11 + $0x9c] sm:$0xf]
        %v3774 = vld [vmem:[#allocation11 + $0xa0] sm:$0xf]
        %v3775 = vld [vmem:[#allocation11 + $0xa4] sm:$0xf]
        %v3776 = vld [vmem:[#allocation11 + $0xa8] sm:$0xf]
        %v3777 = vld [vmem:[#allocation11 + $0xac] sm:$0xf]
        %v3778 = vld [vmem:[#allocation11 + $0xb0] sm:$0xf]
        %v3779 = vld [vmem:[#allocation11 + $0xb4] sm:$0xf]
        %v3780 = vld [vmem:[#allocation11 + $0xb8] sm:$0xf]
        %v3781 = vld [vmem:[#allocation11 + $0xbc] sm:$0xf]
        %v3782 = vpack.c.bf16 %v3729, %v3726
        %v3783 = vpack.c.bf16 %v3730, %v3727
        %v3784 = vpack.c.bf16 %v3731, %v3728
        %v3785 = vmul.f32 %v3726, %v3726
        %v3786 = vmul.f32 %v3727, %v3727
        %v3787 = vmul.f32 %v3728, %v3728
        %v3788 = vmul.f32 %v3729, %v3729
        %v3789 = vmul.f32 %v3730, %v3730
        %v3790 = vmul.f32 %v3731, %v3731
        %v3791 = vpack.c.bf16 %v3788, %v3785
        %v3792 = vpack.c.bf16 %v3789, %v3786
        %v3793 = vpack.c.bf16 %v3790, %v3787
        %v3842 = vunpack.c.l.b16 %v3734
        %v3843 = vunpack.c.l.b16 %v3735
        %v3844 = vunpack.c.l.b16 %v3736
        %v3845 = vunpack.c.l.b16 %v3737
        %v3846 = vunpack.c.l.b16 %v3738
        %v3847 = vunpack.c.l.b16 %v3739
        %v3848 = vunpack.c.l.b16 %v3740
        %v3849 = vunpack.c.l.b16 %v3741
        %v3850 = vunpack.c.l.b16 %v3742
        %v3851 = vunpack.c.l.b16 %v3743
        %v3852 = vunpack.c.l.b16 %v3744
        %v3853 = vunpack.c.l.b16 %v3745
        %v3854 = vunpack.c.l.b16 %v3746
        %v3855 = vunpack.c.l.b16 %v3747
        %v3856 = vunpack.c.l.b16 %v3748
        %v3857 = vunpack.c.l.b16 %v3749
        %v3858 = vunpack.c.l.b16 %v3750
        %v3859 = vunpack.c.l.b16 %v3751
        %v3860 = vunpack.c.l.b16 %v3752
        %v3861 = vunpack.c.l.b16 %v3753
        %v3862 = vunpack.c.l.b16 %v3754
        %v3863 = vunpack.c.l.b16 %v3755
        %v3864 = vunpack.c.l.b16 %v3756
        %v3865 = vunpack.c.l.b16 %v3757
        %v3866 = vunpack.c.l.b16 %v3758
        %v3867 = vunpack.c.l.b16 %v3759
        %v3868 = vunpack.c.l.b16 %v3760
        %v3869 = vunpack.c.l.b16 %v3761
        %v3870 = vunpack.c.l.b16 %v3762
        %v3871 = vunpack.c.l.b16 %v3763
        %v3872 = vunpack.c.l.b16 %v3764
        %v3873 = vunpack.c.l.b16 %v3765
        %v3874 = vunpack.c.l.b16 %v3766
        %v3875 = vunpack.c.l.b16 %v3767
        %v3876 = vunpack.c.l.b16 %v3768
        %v3877 = vunpack.c.l.b16 %v3769
        %v3878 = vunpack.c.l.b16 %v3770
        %v3879 = vunpack.c.l.b16 %v3771
        %v3880 = vunpack.c.l.b16 %v3772
        %v3881 = vunpack.c.l.b16 %v3773
        %v3882 = vunpack.c.l.b16 %v3774
        %v3883 = vunpack.c.l.b16 %v3775
        %v3884 = vunpack.c.l.b16 %v3776
        %v3885 = vunpack.c.l.b16 %v3777
        %v3886 = vunpack.c.l.b16 %v3778
        %v3887 = vunpack.c.l.b16 %v3779
        %v3888 = vunpack.c.l.b16 %v3780
        %v3889 = vunpack.c.l.b16 %v3781
        %v3890 = vpack.c.b16 %v3843, %v3842
        %v3891 = vpack.c.b16 %v3845, %v3844
        %v3892 = vpack.c.b16 %v3847, %v3846
        %v3893 = vpack.c.b16 %v3849, %v3848
        %v3894 = vpack.c.b16 %v3851, %v3850
        %v3895 = vpack.c.b16 %v3853, %v3852
        %v3896 = vpack.c.b16 %v3855, %v3854
        %v3897 = vpack.c.b16 %v3857, %v3856
        %v3898 = vpack.c.b16 %v3859, %v3858
        %v3899 = vpack.c.b16 %v3861, %v3860
        %v3900 = vpack.c.b16 %v3863, %v3862
        %v3901 = vpack.c.b16 %v3865, %v3864
        %v3902 = vpack.c.b16 %v3867, %v3866
        %v3903 = vpack.c.b16 %v3869, %v3868
        %v3904 = vpack.c.b16 %v3871, %v3870
        %v3905 = vpack.c.b16 %v3873, %v3872
        %v3906 = vpack.c.b16 %v3875, %v3874
        %v3907 = vpack.c.b16 %v3877, %v3876
        %v3908 = vpack.c.b16 %v3879, %v3878
        %v3909 = vpack.c.b16 %v3881, %v3880
        %v3910 = vpack.c.b16 %v3883, %v3882
        %v3911 = vpack.c.b16 %v3885, %v3884
        %v3912 = vpack.c.b16 %v3887, %v3886
        %v3913 = vpack.c.b16 %v3889, %v3888
        %3938 = vmatprep.subr.bf16.mxu0 0
        %3939 = vmatpush1.bf16.msra.mxu0 %v3897
        %3940 = vmatprep.subr.bf16.mxu0 0
        %3941 = vmatpush1.bf16.msra.mxu0 %v3896
        %3942 = vmatprep.subr.bf16.mxu0 0
        %3943 = vmatpush1.bf16.msra.mxu0 %v3895
        %3944 = vmatprep.subr.bf16.mxu0 0
        %3945 = vmatpush1.bf16.msra.mxu0 %v3894
        %3946 = vmatprep.subr.bf16.mxu0 0
        %3947 = vmatpush1.bf16.msra.mxu0 %v3893
        %3948 = vmatprep.subr.bf16.mxu0 0
        %3949 = vmatpush1.bf16.msra.mxu0 %v3892
        %3950 = vmatprep.subr.bf16.mxu0 0
        %3951 = vmatpush1.bf16.msra.mxu0 %v3891
        %3952 = vmatprep.subr.bf16.mxu0 0
        %3953 = vmatpush1.bf16.msra.mxu0 %v3890
        %3954 = vmatprep.subr.bf16.mxu0 0
        %3955 = vmatpush2.bf16.msra.mxu0 %v3905
        %3956 = vmatprep.subr.bf16.mxu0 0
        %3957 = vmatpush2.bf16.msra.mxu0 %v3904
        %3958 = vmatprep.subr.bf16.mxu0 0
        %3959 = vmatpush2.bf16.msra.mxu0 %v3903
        %3960 = vmatprep.subr.bf16.mxu0 0
        %3961 = vmatpush2.bf16.msra.mxu0 %v3902
        %3962 = vmatprep.subr.bf16.mxu0 0
        %3963 = vmatpush2.bf16.msra.mxu0 %v3901
        %3964 = vmatprep.subr.bf16.mxu0 0
        %3965 = vmatpush2.bf16.msra.mxu0 %v3900
        %3966 = vmatprep.subr.bf16.mxu0 0
        %3967 = vmatpush2.bf16.msra.mxu0 %v3899
        %3968 = vmatprep.subr.bf16.mxu0 0
        %3969 = vmatpush2.bf16.msra.mxu0 %v3898
        %3970 = vmatprep.mubr.bf16.mxu0 %v3783
        %3971 = vmatmul.mubr.bf16.gmra.mxu0 %v3782
        %v3972 = vpop.f32.mrf.mxu0
        %v3973 = vadd.f32 0.0, %v3972
        %v3974 = vpop.f32.mrf.mxu0
        %v3975 = vpop.f32.mrf.mxu0
        %v3976 = vadd.f32 0.0, %v3975
        %v3977 = vpop.f32.mrf.mxu0
        %3978 = vdwg.mxu0
        %3979 = vmatprep.subr.bf16.mxu0 0
        %3980 = vmatpush1.bf16.msra.mxu0 %v3913
        %3981 = vmatprep.subr.bf16.mxu0 0
        %3982 = vmatpush1.bf16.msra.mxu0 %v3912
        %3983 = vmatprep.subr.bf16.mxu0 0
        %3984 = vmatpush1.bf16.msra.mxu0 %v3911
        %3985 = vmatprep.subr.bf16.mxu0 0
        %3986 = vmatpush1.bf16.msra.mxu0 %v3910
        %3987 = vmatprep.subr.bf16.mxu0 0
        %3988 = vmatpush1.bf16.msra.mxu0 %v3909
        %3989 = vmatprep.subr.bf16.mxu0 0
        %3990 = vmatpush1.bf16.msra.mxu0 %v3908
        %3991 = vmatprep.subr.bf16.mxu0 0
        %3992 = vmatpush1.bf16.msra.mxu0 %v3907
        %3993 = vmatprep.subr.bf16.mxu0 0
        %3994 = vmatpush1.bf16.msra.mxu0 %v3906
        %3995 = vmatprep.subr.bf16.mxu0 0
        %3996 = vmatpush2.bf16.msra.mxu0 0
        %3997 = vmatprep.subr.bf16.mxu0 0
        %3998 = vmatpush2.bf16.msra.mxu0 0
        %3999 = vmatprep.subr.bf16.mxu0 0
        %4000 = vmatpush2.bf16.msra.mxu0 0
        %4001 = vmatprep.subr.bf16.mxu0 0
        %4002 = vmatpush2.bf16.msra.mxu0 0
        %4003 = vmatprep.subr.bf16.mxu0 0
        %4004 = vmatpush2.bf16.msra.mxu0 0
        %4005 = vmatprep.subr.bf16.mxu0 0
        %4006 = vmatpush2.bf16.msra.mxu0 0
        %4007 = vmatprep.subr.bf16.mxu0 0
        %4008 = vmatpush2.bf16.msra.mxu0 0
        %4009 = vmatprep.subr.bf16.mxu0 0
        %4010 = vmatpush2.bf16.msra.mxu0 0
        %4011 = vmatprep.mubr.bf16.mxu0 0
        %4012 = vmatmul.mubr.bf16.gmra.mxu0 %v3784
        %v4013 = vpop.f32.mrf.mxu0
        %v4014 = vadd.f32 %v3973, %v4013
        %v4015 = vpop.f32.mrf.mxu0
        %v4016 = vpop.f32.mrf.mxu0
        %v4017 = vadd.f32 %v3976, %v4016
        %v4018 = vpop.f32.mrf.mxu0
        %4019 = vdwg.mxu0
        %4020 = vmatprep.subr.bf16.mxu0 0
        %4021 = vmatpush1.bf16.msra.mxu0 %v3897
        %4022 = vmatprep.subr.bf16.mxu0 0
        %4023 = vmatpush1.bf16.msra.mxu0 %v3896
        %4024 = vmatprep.subr.bf16.mxu0 0
        %4025 = vmatpush1.bf16.msra.mxu0 %v3895
        %4026 = vmatprep.subr.bf16.mxu0 0
        %4027 = vmatpush1.bf16.msra.mxu0 %v3894
        %4028 = vmatprep.subr.bf16.mxu0 0
        %4029 = vmatpush1.bf16.msra.mxu0 %v3893
        %4030 = vmatprep.subr.bf16.mxu0 0
        %4031 = vmatpush1.bf16.msra.mxu0 %v3892
        %4032 = vmatprep.subr.bf16.mxu0 0
        %4033 = vmatpush1.bf16.msra.mxu0 %v3891
        %4034 = vmatprep.subr.bf16.mxu0 0
        %4035 = vmatpush1.bf16.msra.mxu0 %v3890
        %4036 = vmatprep.subr.bf16.mxu0 0
        %4037 = vmatpush2.bf16.msra.mxu0 %v3905
        %4038 = vmatprep.subr.bf16.mxu0 0
        %4039 = vmatpush2.bf16.msra.mxu0 %v3904
        %4040 = vmatprep.subr.bf16.mxu0 0
        %4041 = vmatpush2.bf16.msra.mxu0 %v3903
        %4042 = vmatprep.subr.bf16.mxu0 0
        %4043 = vmatpush2.bf16.msra.mxu0 %v3902
        %4044 = vmatprep.subr.bf16.mxu0 0
        %4045 = vmatpush2.bf16.msra.mxu0 %v3901
        %4046 = vmatprep.subr.bf16.mxu0 0
        %4047 = vmatpush2.bf16.msra.mxu0 %v3900
        %4048 = vmatprep.subr.bf16.mxu0 0
        %4049 = vmatpush2.bf16.msra.mxu0 %v3899
        %4050 = vmatprep.subr.bf16.mxu0 0
        %4051 = vmatpush2.bf16.msra.mxu0 %v3898
        %4052 = vmatprep.mubr.bf16.mxu0 %v3792
        %4053 = vmatmul.mubr.bf16.gmra.mxu0 %v3791
        %v4054 = vpop.f32.mrf.mxu0
        %v4055 = vadd.f32 0.0, %v4054
        %v4056 = vpop.f32.mrf.mxu0
        %v4057 = vpop.f32.mrf.mxu0
        %v4058 = vadd.f32 0.0, %v4057
        %v4059 = vpop.f32.mrf.mxu0
        %4060 = vdwg.mxu0
        %4061 = vmatprep.subr.bf16.mxu0 0
        %4062 = vmatpush1.bf16.msra.mxu0 %v3913
        %4063 = vmatprep.subr.bf16.mxu0 0
        %4064 = vmatpush1.bf16.msra.mxu0 %v3912
        %4065 = vmatprep.subr.bf16.mxu0 0
        %4066 = vmatpush1.bf16.msra.mxu0 %v3911
        %4067 = vmatprep.subr.bf16.mxu0 0
        %4068 = vmatpush1.bf16.msra.mxu0 %v3910
        %4069 = vmatprep.subr.bf16.mxu0 0
        %4070 = vmatpush1.bf16.msra.mxu0 %v3909
        %4071 = vmatprep.subr.bf16.mxu0 0
        %4072 = vmatpush1.bf16.msra.mxu0 %v3908
        %4073 = vmatprep.subr.bf16.mxu0 0
        %4074 = vmatpush1.bf16.msra.mxu0 %v3907
        %4075 = vmatprep.subr.bf16.mxu0 0
        %4076 = vmatpush1.bf16.msra.mxu0 %v3906
        %4077 = vmatprep.subr.bf16.mxu0 0
        %4078 = vmatpush2.bf16.msra.mxu0 0
        %4079 = vmatprep.subr.bf16.mxu0 0
        %4080 = vmatpush2.bf16.msra.mxu0 0
        %4081 = vmatprep.subr.bf16.mxu0 0
        %4082 = vmatpush2.bf16.msra.mxu0 0
        %4083 = vmatprep.subr.bf16.mxu0 0
        %4084 = vmatpush2.bf16.msra.mxu0 0
        %4085 = vmatprep.subr.bf16.mxu0 0
        %4086 = vmatpush2.bf16.msra.mxu0 0
        %4087 = vmatprep.subr.bf16.mxu0 0
        %4088 = vmatpush2.bf16.msra.mxu0 0
        %4089 = vmatprep.subr.bf16.mxu0 0
        %4090 = vmatpush2.bf16.msra.mxu0 0
        %4091 = vmatprep.subr.bf16.mxu0 0
        %4092 = vmatpush2.bf16.msra.mxu0 0
        %4093 = vmatprep.mubr.bf16.mxu0 0
        %4094 = vmatmul.mubr.bf16.gmra.mxu0 %v3793
        %v4095 = vpop.f32.mrf.mxu0
        %v4096 = vadd.f32 %v4055, %v4095
        %v4097 = vpop.f32.mrf.mxu0
        %v4098 = vpop.f32.mrf.mxu0
        %v4099 = vadd.f32 %v4058, %v4098
        %v4100 = vpop.f32.mrf.mxu0
        %4101 = vdwg.mxu0
        %v4102 = vmul.f32 %v4014, 0.0033333334
        %v4103 = vmul.f32 %v4017, 0.0033333334
        %v4104 = vmul.f32 %v4096, 0.0033333334
        %v4105 = vmul.f32 %v4099, 0.0033333334
        %v4106 = vmul.f32 %v4102, %v4102
        %v4107 = vmul.f32 %v4103, %v4103
        %v4108 = vsub.f32 %v4104, %v4106
        %v4109 = vsub.f32 %v4105, %v4107
        %v4110 = vmax.f32 %v4108, 0.0
        %v4111 = vmax.f32 %v4109, 0.0
        %4113 = vset.pattern.permute.xlu0 0
        %4114 = vperm.xlu0 %4113, %v4102
        %v4115 = vpop.permute.xlu0 %4114
        %4118 = vset.pattern.permute.xlu0 0
        %4119 = vperm.xlu0 %4118, %v4103
        %v4120 = vpop.permute.xlu0 %4119
        %v4122 = vsub.f32 %v3726, %v4115
        %v4123 = vsub.f32 %v3727, %v4115
        %v4124 = vsub.f32 %v3728, %v4115
        %v4125 = vsub.f32 %v3729, %v4120
        %v4126 = vsub.f32 %v3730, %v4120
        %v4127 = vsub.f32 %v3731, %v4120
        %v4128 = vadd.f32 %v4110, 1e-05
        %v4129 = vadd.f32 %v4111, 1e-05
        %v4130 = vrsqrt.pop %v4128
        %v4131 = vrsqrt.pop %v4129
        %4133 = vset.pattern.permute.xlu0 0
        %4134 = vperm.xlu0 %4133, %v4130
        %v4135 = vpop.permute.xlu0 %4134
        %4138 = vset.pattern.permute.xlu0 0
        %4139 = vperm.xlu0 %4138, %v4131
        %v4140 = vpop.permute.xlu0 %4139
        %v4142 = vmul.f32 %v4122, %v4135
        %v4143 = vmul.f32 %v4123, %v4135
        %v4144 = vmul.f32 %v4124, %v4135
        %v4145 = vmul.f32 %v4125, %v4140
        %v4146 = vmul.f32 %v4126, %v4140
        %v4147 = vmul.f32 %v4127, %v4140
        %v4149 = vlaneseq
        %v4150 = vshrl.u32 %v4149, 7
        %v4151 = vsub.s32 0, %v4150
        %v4152 = vrot.slane %v3732, %v4151
        %v4153 = vlaneseq
        %v4154 = vshrl.u32 %v4153, 7
        %v4155 = vsub.s32 1, %v4154
        %v4156 = vrot.slane %v3732, %v4155
        %v4157 = vlaneseq
        %v4158 = vshrl.u32 %v4157, 7
        %v4159 = vsub.s32 2, %v4158
        %v4160 = vrot.slane %v3732, %v4159
        %v4164 = vmul.f32 %v4142, %v4152
        %v4165 = vmul.f32 %v4143, %v4156
        %v4166 = vmul.f32 %v4144, %v4160
        %v4167 = vmul.f32 %v4145, %v4152
        %v4168 = vmul.f32 %v4146, %v4156
        %v4169 = vmul.f32 %v4147, %v4160
        %v4171 = vlaneseq
        %v4172 = vshrl.u32 %v4171, 7
        %v4173 = vsub.s32 0, %v4172
        %v4174 = vrot.slane %v3733, %v4173
        %v4175 = vlaneseq
        %v4176 = vshrl.u32 %v4175, 7
        %v4177 = vsub.s32 1, %v4176
        %v4178 = vrot.slane %v3733, %v4177
        %v4179 = vlaneseq
        %v4180 = vshrl.u32 %v4179, 7
        %v4181 = vsub.s32 2, %v4180
        %v4182 = vrot.slane %v3733, %v4181
        %v4186 = vadd.f32 %v4164, %v4174
        %v4187 = vadd.f32 %v4165, %v4178
        %v4188 = vadd.f32 %v4166, %v4182
        %v4189 = vadd.f32 %v4167, %v4174
        %v4190 = vadd.f32 %v4168, %v4178
        %v4191 = vadd.f32 %v4169, %v4182
        %v4192 = vpack.c.bf16 %v4189, %v4186
        %v4193 = vpack.c.bf16 %v4190, %v4187
        %v4194 = vpack.c.bf16 %v4191, %v4188
        %v4195 = vld [vmem:[#allocation13] sm:$0xf]
        %v4196 = vld [vmem:[#allocation13 + $0x4] sm:$0xf]
        %v4197 = vld [vmem:[#allocation13 + $0x8] sm:$0xf]
        %v4198 = vld [vmem:[#allocation13 + $0xc] sm:$0xf]
        %v4199 = vld [vmem:[#allocation13 + $0x10] sm:$0xf]
        %v4200 = vld [vmem:[#allocation13 + $0x14] sm:$0xf]
        %v4201 = vld [vmem:[#allocation13 + $0x18] sm:$0xf]
        %v4202 = vld [vmem:[#allocation13 + $0x1c] sm:$0xf]
        %v4203 = vld [vmem:[#allocation13 + $0x20] sm:$0xf]
        %v4204 = vld [vmem:[#allocation13 + $0x24] sm:$0xf]
        %v4205 = vld [vmem:[#allocation13 + $0x28] sm:$0xf]
        %v4206 = vld [vmem:[#allocation13 + $0x2c] sm:$0xf]
        %v4207 = vld [vmem:[#allocation13 + $0x30] sm:$0xf]
        %v4208 = vld [vmem:[#allocation13 + $0x34] sm:$0xf]
        %v4209 = vld [vmem:[#allocation13 + $0x38] sm:$0xf]
        %v4210 = vld [vmem:[#allocation13 + $0x3c] sm:$0xf]
        %v4211 = vld [vmem:[#allocation13 + $0x40] sm:$0xf]
        %v4212 = vld [vmem:[#allocation13 + $0x44] sm:$0xf]
        %v4213 = vld [vmem:[#allocation13 + $0x48] sm:$0xf]
        %v4214 = vld [vmem:[#allocation13 + $0x4c] sm:$0xf]
        %v4215 = vld [vmem:[#allocation13 + $0x50] sm:$0xf]
        %v4216 = vld [vmem:[#allocation13 + $0x54] sm:$0xf]
        %v4217 = vld [vmem:[#allocation13 + $0x58] sm:$0xf]
        %v4218 = vld [vmem:[#allocation13 + $0x5c] sm:$0xf]
        %v4219 = vld [vmem:[#allocation13 + $0x60] sm:$0xf]
        %v4220 = vld [vmem:[#allocation13 + $0x64] sm:$0xf]
        %v4221 = vld [vmem:[#allocation13 + $0x68] sm:$0xf]
        %v4222 = vld [vmem:[#allocation13 + $0x6c] sm:$0xf]
        %v4223 = vld [vmem:[#allocation13 + $0x70] sm:$0xf]
        %v4224 = vld [vmem:[#allocation13 + $0x74] sm:$0xf]
        %v4225 = vld [vmem:[#allocation13 + $0x78] sm:$0xf]
        %v4226 = vld [vmem:[#allocation13 + $0x7c] sm:$0xf]
        %v4227 = vld [vmem:[#allocation13 + $0x80] sm:$0xf]
        %v4228 = vld [vmem:[#allocation13 + $0x84] sm:$0xf]
        %v4229 = vld [vmem:[#allocation13 + $0x88] sm:$0xf]
        %v4230 = vld [vmem:[#allocation13 + $0x8c] sm:$0xf]
        %v4231 = vld [vmem:[#allocation13 + $0x90] sm:$0xf]
        %v4232 = vld [vmem:[#allocation13 + $0x94] sm:$0xf]
        %v4233 = vld [vmem:[#allocation13 + $0x98] sm:$0xf]
        %v4234 = vld [vmem:[#allocation13 + $0x9c] sm:$0xf]
        %v4235 = vld [vmem:[#allocation13 + $0xa0] sm:$0xf]
        %v4236 = vld [vmem:[#allocation13 + $0xa4] sm:$0xf]
        %v4237 = vld [vmem:[#allocation13 + $0xa8] sm:$0xf]
        %v4238 = vld [vmem:[#allocation13 + $0xac] sm:$0xf]
        %v4239 = vld [vmem:[#allocation13 + $0xb0] sm:$0xf]
        %v4240 = vld [vmem:[#allocation13 + $0xb4] sm:$0xf]
        %v4241 = vld [vmem:[#allocation13 + $0xb8] sm:$0xf]
        %v4242 = vld [vmem:[#allocation13 + $0xbc] sm:$0xf]
        %v4243 = vld [vmem:[%s17] sm:$0x1]
        %v4245 = vlaneseq
        %v4246 = vshrl.u32 %v4245, 7
        %v4247 = vsub.s32 0, %v4246
        %v4248 = vrot.slane %v4243, %v4247
        %v4298 = vunpack.c.l.b16 %v4195
        %v4299 = vunpack.c.l.b16 %v4196
        %v4300 = vunpack.c.l.b16 %v4197
        %v4301 = vunpack.c.l.b16 %v4198
        %v4302 = vunpack.c.l.b16 %v4199
        %v4303 = vunpack.c.l.b16 %v4200
        %v4304 = vunpack.c.l.b16 %v4201
        %v4305 = vunpack.c.l.b16 %v4202
        %v4306 = vunpack.c.l.b16 %v4203
        %v4307 = vunpack.c.l.b16 %v4204
        %v4308 = vunpack.c.l.b16 %v4205
        %v4309 = vunpack.c.l.b16 %v4206
        %v4310 = vunpack.c.l.b16 %v4207
        %v4311 = vunpack.c.l.b16 %v4208
        %v4312 = vunpack.c.l.b16 %v4209
        %v4313 = vunpack.c.l.b16 %v4210
        %v4314 = vunpack.c.l.b16 %v4211
        %v4315 = vunpack.c.l.b16 %v4212
        %v4316 = vunpack.c.l.b16 %v4213
        %v4317 = vunpack.c.l.b16 %v4214
        %v4318 = vunpack.c.l.b16 %v4215
        %v4319 = vunpack.c.l.b16 %v4216
        %v4320 = vunpack.c.l.b16 %v4217
        %v4321 = vunpack.c.l.b16 %v4218
        %v4322 = vunpack.c.l.b16 %v4219
        %v4323 = vunpack.c.l.b16 %v4220
        %v4324 = vunpack.c.l.b16 %v4221
        %v4325 = vunpack.c.l.b16 %v4222
        %v4326 = vunpack.c.l.b16 %v4223
        %v4327 = vunpack.c.l.b16 %v4224
        %v4328 = vunpack.c.l.b16 %v4225
        %v4329 = vunpack.c.l.b16 %v4226
        %v4330 = vunpack.c.l.b16 %v4227
        %v4331 = vunpack.c.l.b16 %v4228
        %v4332 = vunpack.c.l.b16 %v4229
        %v4333 = vunpack.c.l.b16 %v4230
        %v4334 = vunpack.c.l.b16 %v4231
        %v4335 = vunpack.c.l.b16 %v4232
        %v4336 = vunpack.c.l.b16 %v4233
        %v4337 = vunpack.c.l.b16 %v4234
        %v4338 = vunpack.c.l.b16 %v4235
        %v4339 = vunpack.c.l.b16 %v4236
        %v4340 = vunpack.c.l.b16 %v4237
        %v4341 = vunpack.c.l.b16 %v4238
        %v4342 = vunpack.c.l.b16 %v4239
        %v4343 = vunpack.c.l.b16 %v4240
        %v4344 = vunpack.c.l.b16 %v4241
        %v4345 = vunpack.c.l.b16 %v4242
        %v4346 = vpack.c.b16 %v4299, %v4298
        %v4347 = vpack.c.b16 %v4301, %v4300
        %v4348 = vpack.c.b16 %v4303, %v4302
        %v4349 = vpack.c.b16 %v4305, %v4304
        %v4350 = vpack.c.b16 %v4307, %v4306
        %v4351 = vpack.c.b16 %v4309, %v4308
        %v4352 = vpack.c.b16 %v4311, %v4310
        %v4353 = vpack.c.b16 %v4313, %v4312
        %v4354 = vpack.c.b16 %v4315, %v4314
        %v4355 = vpack.c.b16 %v4317, %v4316
        %v4356 = vpack.c.b16 %v4319, %v4318
        %v4357 = vpack.c.b16 %v4321, %v4320
        %v4358 = vpack.c.b16 %v4323, %v4322
        %v4359 = vpack.c.b16 %v4325, %v4324
        %v4360 = vpack.c.b16 %v4327, %v4326
        %v4361 = vpack.c.b16 %v4329, %v4328
        %v4362 = vpack.c.b16 %v4331, %v4330
        %v4363 = vpack.c.b16 %v4333, %v4332
        %v4364 = vpack.c.b16 %v4335, %v4334
        %v4365 = vpack.c.b16 %v4337, %v4336
        %v4366 = vpack.c.b16 %v4339, %v4338
        %v4367 = vpack.c.b16 %v4341, %v4340
        %v4368 = vpack.c.b16 %v4343, %v4342
        %v4369 = vpack.c.b16 %v4345, %v4344
        %4394 = vmatprep.subr.bf16.mxu0 0
        %4395 = vmatpush1.bf16.msra.mxu0 %v4353
        %4396 = vmatprep.subr.bf16.mxu0 0
        %4397 = vmatpush1.bf16.msra.mxu0 %v4352
        %4398 = vmatprep.subr.bf16.mxu0 0
        %4399 = vmatpush1.bf16.msra.mxu0 %v4351
        %4400 = vmatprep.subr.bf16.mxu0 0
        %4401 = vmatpush1.bf16.msra.mxu0 %v4350
        %4402 = vmatprep.subr.bf16.mxu0 0
        %4403 = vmatpush1.bf16.msra.mxu0 %v4349
        %4404 = vmatprep.subr.bf16.mxu0 0
        %4405 = vmatpush1.bf16.msra.mxu0 %v4348
        %4406 = vmatprep.subr.bf16.mxu0 0
        %4407 = vmatpush1.bf16.msra.mxu0 %v4347
        %4408 = vmatprep.subr.bf16.mxu0 0
        %4409 = vmatpush1.bf16.msra.mxu0 %v4346
        %4410 = vmatprep.subr.bf16.mxu0 0
        %4411 = vmatpush2.bf16.msra.mxu0 %v4361
        %4412 = vmatprep.subr.bf16.mxu0 0
        %4413 = vmatpush2.bf16.msra.mxu0 %v4360
        %4414 = vmatprep.subr.bf16.mxu0 0
        %4415 = vmatpush2.bf16.msra.mxu0 %v4359
        %4416 = vmatprep.subr.bf16.mxu0 0
        %4417 = vmatpush2.bf16.msra.mxu0 %v4358
        %4418 = vmatprep.subr.bf16.mxu0 0
        %4419 = vmatpush2.bf16.msra.mxu0 %v4357
        %4420 = vmatprep.subr.bf16.mxu0 0
        %4421 = vmatpush2.bf16.msra.mxu0 %v4356
        %4422 = vmatprep.subr.bf16.mxu0 0
        %4423 = vmatpush2.bf16.msra.mxu0 %v4355
        %4424 = vmatprep.subr.bf16.mxu0 0
        %4425 = vmatpush2.bf16.msra.mxu0 %v4354
        %4426 = vmatprep.mubr.bf16.mxu0 %v4193
        %4427 = vmatmul.mubr.bf16.gmra.mxu0 %v4192
        %v4428 = vpop.f32.mrf.mxu0
        %v4429 = vadd.f32 %v4248, %v4428
        %v4430 = vpop.f32.mrf.mxu0
        %v4431 = vpop.f32.mrf.mxu0
        %v4432 = vadd.f32 %v4248, %v4431
        %v4433 = vpop.f32.mrf.mxu0
        %4434 = vdwg.mxu0
        %4435 = vmatprep.subr.bf16.mxu0 0
        %4436 = vmatpush1.bf16.msra.mxu0 %v4369
        %4437 = vmatprep.subr.bf16.mxu0 0
        %4438 = vmatpush1.bf16.msra.mxu0 %v4368
        %4439 = vmatprep.subr.bf16.mxu0 0
        %4440 = vmatpush1.bf16.msra.mxu0 %v4367
        %4441 = vmatprep.subr.bf16.mxu0 0
        %4442 = vmatpush1.bf16.msra.mxu0 %v4366
        %4443 = vmatprep.subr.bf16.mxu0 0
        %4444 = vmatpush1.bf16.msra.mxu0 %v4365
        %4445 = vmatprep.subr.bf16.mxu0 0
        %4446 = vmatpush1.bf16.msra.mxu0 %v4364
        %4447 = vmatprep.subr.bf16.mxu0 0
        %4448 = vmatpush1.bf16.msra.mxu0 %v4363
        %4449 = vmatprep.subr.bf16.mxu0 0
        %4450 = vmatpush1.bf16.msra.mxu0 %v4362
        %4451 = vmatprep.subr.bf16.mxu0 0
        %4452 = vmatpush2.bf16.msra.mxu0 0
        %4453 = vmatprep.subr.bf16.mxu0 0
        %4454 = vmatpush2.bf16.msra.mxu0 0
        %4455 = vmatprep.subr.bf16.mxu0 0
        %4456 = vmatpush2.bf16.msra.mxu0 0
        %4457 = vmatprep.subr.bf16.mxu0 0
        %4458 = vmatpush2.bf16.msra.mxu0 0
        %4459 = vmatprep.subr.bf16.mxu0 0
        %4460 = vmatpush2.bf16.msra.mxu0 0
        %4461 = vmatprep.subr.bf16.mxu0 0
        %4462 = vmatpush2.bf16.msra.mxu0 0
        %4463 = vmatprep.subr.bf16.mxu0 0
        %4464 = vmatpush2.bf16.msra.mxu0 0
        %4465 = vmatprep.subr.bf16.mxu0 0
        %4466 = vmatpush2.bf16.msra.mxu0 0
        %4467 = vmatprep.mubr.bf16.mxu0 0
        %4468 = vmatmul.mubr.bf16.gmra.mxu0 %v4194
        %v4469 = vpop.f32.mrf.mxu0
        %v4470 = vadd.f32 %v4429, %v4469
        %v4471 = vpop.f32.mrf.mxu0
        %v4472 = vpop.f32.mrf.mxu0
        %v4473 = vadd.f32 %v4432, %v4472
        %v4474 = vpop.f32.mrf.mxu0
        %4475 = vdwg.mxu0
        %v4476 = vtanh.pop %v4470
        %v4477 = vtanh.pop %v4473
        %v4478 = vmul.f32 %v4476, 2.0
        %v4479 = vmul.f32 %v4477, 2.0
        %4480 = vst [vmem:[%s671] sm:$0xff] %v4478
        %4481 = vst [vmem:[%s671 + $0x8] sm:$0xff] %v4479
        %s4482 = sand.u32 %s427, 1
        %s4483 = scalar_lea.sflag [#allocation4], %s4482
        %s4484 = sand.u32 %s427, 1
        %s4485 = smul.addr %s4484, 16
        %s4486 = scalar_lea.vmem [#allocation14], %s4485
        // Predicated region
        $region121: #{tpu_custom_call.1} parent=91 // pred_check
          %p4487 = pneg %p437
        $region122: #{tpu_custom_call.1} parent=91 // pred_check_branch
          %4489 = sbr.rel (%p4487) target = $region124
        $region123: #{tpu_custom_call.1} parent=91 // pred_region
          %s4490 = smul.u32 2, %s36
          %s4492 = ssub.s32 256, 256
          %4493 = vsyncadd %s4483, %s4492
          %s4494 = smul.addr %s4490, 128
          %s4495 = scalar_lea.hbm %s18, %s4494
          %s4496 = sshll.u32 %s4486, 4
          %s4497 = int_to_ptr.vmem [resolvable:$true] %s4496
          %4502 = dma.vmem_to_hbm [thread:$0]  %s4497, 256, %s4495, %s4483, 128, 128, 8
        $region124: #{tpu_custom_call.1} parent=91 // pred_fallthru
          _
      $region92: #{tpu_custom_call.1} parent=5 // pred_fallthru
        _
      %p4503 = scmp.le.s32.totalorder 2, %s31
      // Predicated region
      $region125: #{tpu_custom_call.1} parent=5 // pred_check
        %p4504 = pneg %p4503
      $region126: #{tpu_custom_call.1} parent=5 // pred_check_branch
        %4506 = sbr.rel (%p4504) target = $region128
      $region127: #{tpu_custom_call.1} parent=5 // pred_region
        %s4507 = ssub.s32 %s31, 2
        // Predicated region
        $region129: #{tpu_custom_call.1} parent=127 // pred_check
          %p4508 = pneg %p443
        $region130: #{tpu_custom_call.1} parent=127 // pred_check_branch
          %4510 = sbr.rel (%p4508) target = $region132
        $region131: #{tpu_custom_call.1} parent=127 // pred_region
          %s4511 = sand.u32 %s428, 1
          %s4512 = scalar_lea.sflag [#allocation4], %s4511
          %s4513 = sand.u32 %s428, 1
          %s4514 = smul.addr %s4513, 16
          %s4515 = scalar_lea.vmem [#allocation14], %s4514
          %4516 = dma.done %s4512, 256
        $region132: #{tpu_custom_call.1} parent=127 // pred_fallthru
          _
      $region128: #{tpu_custom_call.1} parent=5 // pred_fallthru
        _
    $region6: #{tpu_custom_call.1} parent=1 // loop_footer
      %s35 = sadd.s32 1, %s31
    $region7: #{tpu_custom_call.1} parent=1 // loop_footer_branch
      %30 = sbr.rel target = $region3
    $region8: #{tpu_custom_call.1} parent=1 // loop_exit
      _
    %4517 = vsyncpa [#allocation3], 1
    %s4518 = scalar_lea.sflag [#allocation3], 1
    %4519 = vsyncpa %s4518, 1
    %4520 = vsyncpa [#allocation6], 1
    %4521 = vsyncpa [#allocation9], 1
    %4522 = vsyncpa [#allocation12], 1
    %4523 = vsyncpa [#allocation4], 1
    %s4524 = scalar_lea.sflag [#allocation4], 1
    %4525 = vsyncpa %s4524, 1

</llo_original>
